<compile_context>
chip_gen: v7x
topology: tpu7x:2x2x1
jax: 0.10.0
libtpu: 0.0.40
codegen_flags: <defaults>
</compile_context>

<pallas_src>
import math

import jax
import jax.numpy as jnp
from jax.experimental import pallas as pl
from jax.experimental.pallas import tpu as pltpu

# -------- scaled-down ViT config (structure of vit_base_patch16_224) --------
IMG = 32            # 224 in the real model
PATCH = 16          # patch size 16 (same as ViT-B/16)
IN_CHANS = 3
EMBED = 128         # 768 in the real model (kept a multiple of 128 for lane density)
DEPTH = 2           # 12 in the real model
HEADS = 2           # 12 in the real model (head_dim = 64 matches real ViT-B)
HD = EMBED // HEADS
MLP_HIDDEN = EMBED * 4
N_CLASSES = 10
HEAD_PAD = 128      # logits computed as a full 128-lane slab, sliced to N_CLASSES outside
EPS = 1e-6          # timm ViT LayerNorm eps
N_PATCH = (IMG // PATCH) ** 2
N_TOK = N_PATCH + 1          # 5 real tokens (cls + 4 patches)
N_TOK_PAD = 8                # padded to a full sublane group
PATCH_DIM = IN_CHANS * PATCH * PATCH   # 768 (multiple of 128)
SCALE = 1.0 / math.sqrt(HD)


def _layernorm(v, g, b):
    mu = jnp.mean(v, axis=-1, keepdims=True)
    var = jnp.mean((v - mu) ** 2, axis=-1, keepdims=True)
    return (v - mu) * jax.lax.rsqrt(var + EPS) * g + b


# ---------------------------------------------------------------------------
# Fused ViT forward kernel.  grid = (B//B_TILE, DEPTH); layer axis innermost
# ("arbitrary"); the (B_TILE*8, EMBED) token slab is resident in VMEM scratch `x_acc`.
# ---------------------------------------------------------------------------
def _vit_kernel(patches_ref, pw_ref, pb_ref, cls_ref, pos_ref,
                g1_ref, b1_ref, wqkv_ref, bqkv_ref, wproj_ref, bproj_ref,
                g2_ref, b2_ref, w1_ref, bm1_ref, w2_ref, bm2_ref,
                ng_ref, nb_ref, hw_ref, hb_ref,
                o_ref, x_acc):
    l = pl.program_id(1)
    m = x_acc.shape[0]               # B_TILE * N_TOK_PAD (batch folded into matmul M)
    b_tile = m // N_TOK_PAD

    # ---- patch embedding (+ cls token + pos embedding) at the first layer step ----
    @pl.when(l == 0)
    def _():
        # patches_ref: (m, PATCH_DIM) bf16; row b*8 is a zero "cls slot" of element b.
        tok = jnp.dot(patches_ref[...], pw_ref[...],
                      preferred_element_type=jnp.float32) + pb_ref[...]
        row = jax.lax.broadcasted_iota(jnp.int32, (m, EMBED), 0)
        is_cls = (row & (N_TOK_PAD - 1)) == 0
        x_acc[...] = jnp.where(is_cls, cls_ref[...], tok) + pos_ref[...]

    x = x_acc[...]                                     # (m, EMBED) f32 residual stream

    # ---- LayerNorm 1 + fused QKV (single bf16 cast of the LN output, reused as LHS) ----
    h = _layernorm(x, g1_ref[0], b1_ref[0]).astype(jnp.bfloat16)
    qkv = (jnp.dot(h, wqkv_ref[0], preferred_element_type=jnp.float32)
           + bqkv_ref[0]).reshape(b_tile, N_TOK_PAD, 3 * EMBED)

    # key-padding mask: key columns >= N_TOK are pad tokens (hoisted out of the head loop)
    kcol = jax.lax.broadcasted_iota(jnp.int32, (b_tile, N_TOK_PAD, N_TOK_PAD), 2)
    kmask = kcol < N_TOK

    # ---- multi-head self-attention, batched over the folded batch tile ----
    # TODO(synk): at real head counts (12) switch to lax.fori_loop(unroll=True) and
    # reorder wqkv columns so head pairs land on 128-lane groups (bounds vreg liveness
    # and removes 64-lane relayouts); negligible at HEADS=2.
    outs = []
    for hh in range(HEADS):
        q = qkv[:, :, hh * HD:(hh + 1) * HD].astype(jnp.bfloat16)
        k = qkv[:, :, EMBED + hh * HD: EMBED + (hh + 1) * HD].astype(jnp.bfloat16)
        v = qkv[:, :, 2 * EMBED + hh * HD: 2 * EMBED + (hh + 1) * HD].astype(jnp.bfloat16)
        s = jnp.einsum('bqd,bkd->bqk', q, k,
                       preferred_element_type=jnp.float32) * SCALE
        s = jnp.where(kmask, s, -1e30)                 # mask pad keys
        s = s - jnp.max(s, axis=-1, keepdims=True)
        p = jnp.exp(s)
        p = p * pl.reciprocal(jnp.sum(p, axis=-1, keepdims=True), approx=True)
        outs.append(jnp.einsum('bqk,bkd->bqd', p.astype(jnp.bfloat16), v,
                               preferred_element_type=jnp.float32))
    attn = jnp.concatenate(outs, axis=-1).reshape(m, EMBED)   # lane-dense (m, D) slab
    proj = jnp.dot(attn.astype(jnp.bfloat16), wproj_ref[0],
                   preferred_element_type=jnp.float32) + bproj_ref[0]   # one (m,D)@(D,D)
    x = x + proj

    # ---- LayerNorm 2 + MLP ----
    h2 = _layernorm(x, g2_ref[0], b2_ref[0]).astype(jnp.bfloat16)
    z = jnp.dot(h2, w1_ref[0], preferred_element_type=jnp.float32) + bm1_ref[0]
    # TODO(synk): timm uses exact (erf) GELU; tanh approximation kept for robust lowering.
    z = 0.5 * z * (1.0 + jnp.tanh(0.7978845608028654 * (z + 0.044715 * z * z * z)))
    x = x + jnp.dot(z.astype(jnp.bfloat16), w2_ref[0],
                    preferred_element_type=jnp.float32) + bm2_ref[0]

    x_acc[...] = x

    # ---- final LayerNorm + classifier head at the last layer step ----
    @pl.when(l == pl.num_programs(1) - 1)
    def _():
        # Computed for all (padded) token rows: keeps the store a full, unmasked,
        # lane-dense (m, 128) slab; the per-element CLS rows are sliced in the wrapper.
        c = _layernorm(x, ng_ref[...], nb_ref[...])
        logits = jnp.dot(c.astype(jnp.bfloat16), hw_ref[...],
                         preferred_element_type=jnp.float32) + hb_ref[...]
        o_ref[...] = logits.astype(o_ref.dtype)


# ---------------------------------------------------------------------------
# Wrapper: patch extraction glue + single fused pallas_call
# ---------------------------------------------------------------------------
def vit_forward(x, params, *, b_tile=None):
    """x: (B, C, H, W) float32, NCHW."""
    B, C, H, W = x.shape
    p = PATCH
    nH, nW = H // p, W // p
    n_patch = nH * nW

    if b_tile is None:
        # Fold a batch tile into the matmul M dimension; keep >= 2 steps on the
        # "parallel" grid axis so v7x's two TensorCores both get work.
        b_tile = max(1, min(32, pl.cdiv(B, 2)))
    nb = pl.cdiv(B, b_tile)
    b_pad = nb * b_tile
    m = b_tile * N_TOK_PAD

    # Patch extraction (glue): (B,C,H,W) -> (B, n_patch, C*p*p) in (C, ph, pw) order,
    # matching a flattened PyTorch Conv2d(EMBED, C, p, p) kernel.  A zero "cls slot" row
    # is prepended and the token axis is padded 5 -> 8; the batch is padded to a multiple
    # of b_tile and folded into the M dimension of every token-wise matmul.
    patches = (x.reshape(B, C, nH, p, nW, p)
               .transpose(0, 2, 4, 1, 3, 5)
               .reshape(B, n_patch, C * p * p))
    patches = jnp.pad(patches, ((0, b_pad - B), (1, N_TOK_PAD - N_TOK), (0, 0)))
    patches2d = patches.reshape(b_pad * N_TOK_PAD, PATCH_DIM).astype(jnp.bfloat16)

    # positional embedding padded to 8 token rows and tiled across the batch tile (tiny)
    pos = jnp.pad(params["pos"], ((0, N_TOK_PAD - N_TOK), (0, 0)))
    pos_t = jnp.tile(pos, (b_tile, 1))                                  # (m, EMBED)

    const2 = lambda b, l: (0, 0)
    layer3 = lambda b, l: (l, 0, 0)

    in_specs = [
        pl.BlockSpec((m, PATCH_DIM), lambda b, l: (b, 0)),              # patches (batch-folded)
        pl.BlockSpec((PATCH_DIM, EMBED), const2),                       # patch_w
        pl.BlockSpec((1, EMBED), const2),                               # patch_b
        pl.BlockSpec((1, EMBED), const2),                               # cls
        pl.BlockSpec((m, EMBED), const2),                               # pos (tiled)
        pl.BlockSpec((1, 1, EMBED), layer3),                            # ln1 gamma
        pl.BlockSpec((1, 1, EMBED), layer3),                            # ln1 beta
        pl.BlockSpec((1, EMBED, 3 * EMBED), layer3),                    # qkv weight
        pl.BlockSpec((1, 1, 3 * EMBED), layer3),                        # qkv bias
        pl.BlockSpec((1, EMBED, EMBED), layer3),                        # attn proj weight
        pl.BlockSpec((1, 1, EMBED), layer3),                            # attn proj bias
        pl.BlockSpec((1, 1, EMBED), layer3),                            # ln2 gamma
        pl.BlockSpec((1, 1, EMBED), layer3),                            # ln2 beta
        pl.BlockSpec((1, EMBED, MLP_HIDDEN), layer3),                   # mlp fc1 weight
        pl.BlockSpec((1, 1, MLP_HIDDEN), layer3),                       # mlp fc1 bias
        pl.BlockSpec((1, MLP_HIDDEN, EMBED), layer3),                   # mlp fc2 weight
        pl.BlockSpec((1, 1, EMBED), layer3),                            # mlp fc2 bias
        pl.BlockSpec((1, EMBED), const2),                               # final norm gamma
        pl.BlockSpec((1, EMBED), const2),                               # final norm beta
        pl.BlockSpec((EMBED, HEAD_PAD), const2),                        # head weight (padded)
        pl.BlockSpec((1, HEAD_PAD), const2),                            # head bias (padded)
    ]

    # NOTE: at these scaled-down dims per-layer weights are ~0.4 MB so the default scoped
    # VMEM limit is plenty; when scaling to real ViT-B dims (EMBED=768, MLP=3072) set
    # pltpu.CompilerParams(vmem_limit_bytes=...) and keep Buffered(2) on the layer specs.
    logits_pad = pl.pallas_call(
        _vit_kernel,
        grid=(nb, DEPTH),
        out_shape=jax.ShapeDtypeStruct((b_pad * N_TOK_PAD, HEAD_PAD), jnp.float32),
        in_specs=in_specs,
        out_specs=pl.BlockSpec((m, HEAD_PAD), lambda b, l: (b, 0)),
        scratch_shapes=[pltpu.VMEM((m, EMBED), jnp.float32)],           # resident token slab
        compiler_params=pltpu.CompilerParams(
            dimension_semantics=("parallel", "arbitrary")),
    )(patches2d, params["patch_w"], params["patch_b"], params["cls"], pos_t,
      params["ln1_g"], params["ln1_b"], params["wqkv"], params["bqkv"],
      params["wproj"], params["bproj"], params["ln2_g"], params["ln2_b"],
      params["w1"], params["b1"], params["w2"], params["b2"],
      params["norm_g"], params["norm_b"], params["head_w"], params["head_b"])

    # pick the CLS row of each batch element and the real class lanes
    return logits_pad.reshape(b_pad, N_TOK_PAD, HEAD_PAD)[:B, 0, :N_CLASSES]


# ---------------------------------------------------------------------------
# Parameters (deterministic synthetic init; weights stacked per layer, bf16 matmul operands)
# ---------------------------------------------------------------------------
def init_params(key):
    ks = iter(jax.random.split(key, 8))
    nrm = lambda k, shape: (0.02 * jax.random.normal(k, shape)).astype(jnp.float32)
    bf = lambda a: a.astype(jnp.bfloat16)

    head_w = jnp.pad(nrm(next(ks), (EMBED, N_CLASSES)),
                     ((0, 0), (0, HEAD_PAD - N_CLASSES)))               # zero-padded lanes

    return {
        "patch_w": bf(nrm(next(ks), (PATCH_DIM, EMBED))),   # conv16x16/s16 as matmul
        "patch_b": jnp.zeros((1, EMBED), jnp.float32),
        "cls": nrm(next(ks), (1, EMBED)),
        "pos": nrm(next(ks), (N_TOK, EMBED)),
        "ln1_g": jnp.ones((DEPTH, 1, EMBED), jnp.float32),
        "ln1_b": jnp.zeros((DEPTH, 1, EMBED), jnp.float32),
        "wqkv": bf(nrm(next(ks), (DEPTH, EMBED, 3 * EMBED))),
        "bqkv": jnp.zeros((DEPTH, 1, 3 * EMBED), jnp.float32),
        "wproj": bf(nrm(next(ks), (DEPTH, EMBED, EMBED))),
        "bproj": jnp.zeros((DEPTH, 1, EMBED), jnp.float32),
        "ln2_g": jnp.ones((DEPTH, 1, EMBED), jnp.float32),
        "ln2_b": jnp.zeros((DEPTH, 1, EMBED), jnp.float32),
        "w1": bf(nrm(next(ks), (DEPTH, EMBED, MLP_HIDDEN))),
        "b1": jnp.zeros((DEPTH, 1, MLP_HIDDEN), jnp.float32),
        "w2": bf(nrm(next(ks), (DEPTH, MLP_HIDDEN, EMBED))),
        "b2": jnp.zeros((DEPTH, 1, EMBED), jnp.float32),
        "norm_g": jnp.ones((1, EMBED), jnp.float32),
        "norm_b": jnp.zeros((1, EMBED), jnp.float32),
        "head_w": bf(head_w),
        "head_b": jnp.zeros((1, HEAD_PAD), jnp.float32),
    }


if __name__ == "__main__":
    key = jax.random.PRNGKey(0)
    k_x, k_p = jax.random.split(key)
    B = 4
    x = jax.random.normal(k_x, (B, IN_CHANS, IMG, IMG), jnp.float32)
    params = init_params(k_p)

    fwd = jax.jit(vit_forward)
    logits = jax.block_until_ready(fwd(x, params))
    assert logits.shape == (B, N_CLASSES)
    assert bool(jnp.all(jnp.isfinite(logits)))
    print("KERNEL_OK")
</pallas_src>

<mosaic_0001>
module attributes {stable_mosaic.version = 11 : i64} {
  func.func @_vit_kernel(%arg0: i32, %arg1: i32, %arg2: memref<16x768xbf16, #tpu.memory_space<vmem>>, %arg3: memref<768x128xbf16, #tpu.memory_space<vmem>>, %arg4: memref<1x128xf32, #tpu.memory_space<vmem>>, %arg5: memref<1x128xf32, #tpu.memory_space<vmem>>, %arg6: memref<16x128xf32, #tpu.memory_space<vmem>>, %arg7: memref<1x1x128xf32, #tpu.memory_space<vmem>>, %arg8: memref<1x1x128xf32, #tpu.memory_space<vmem>>, %arg9: memref<1x128x384xbf16, #tpu.memory_space<vmem>>, %arg10: memref<1x1x384xf32, #tpu.memory_space<vmem>>, %arg11: memref<1x128x128xbf16, #tpu.memory_space<vmem>>, %arg12: memref<1x1x128xf32, #tpu.memory_space<vmem>>, %arg13: memref<1x1x128xf32, #tpu.memory_space<vmem>>, %arg14: memref<1x1x128xf32, #tpu.memory_space<vmem>>, %arg15: memref<1x128x512xbf16, #tpu.memory_space<vmem>>, %arg16: memref<1x1x512xf32, #tpu.memory_space<vmem>>, %arg17: memref<1x512x128xbf16, #tpu.memory_space<vmem>>, %arg18: memref<1x1x128xf32, #tpu.memory_space<vmem>>, %arg19: memref<1x128xf32, #tpu.memory_space<vmem>>, %arg20: memref<1x128xf32, #tpu.memory_space<vmem>>, %arg21: memref<128x128xbf16, #tpu.memory_space<vmem>>, %arg22: memref<1x128xf32, #tpu.memory_space<vmem>>, %arg23: memref<16x128xf32, #tpu.memory_space<vmem>>, %arg24: memref<16x128xf32, #tpu.memory_space<vmem>>) attributes {dimension_semantics = [#tpu.dimension_semantics<parallel>, #tpu.dimension_semantics<arbitrary>], iteration_bounds = array<i64: 2, 2>, scalar_prefetch = 0 : i64, scratch_operands = 1 : i64, tpu.core_type = #tpu.core_type<tc>, window_params = [{transform_indices = @transform_0, window_bounds = array<i64: 16, 768>}, {pipeline_mode = #tpu.pipeline_mode<synchronous>, transform_indices = @transform_1, window_bounds = array<i64: 768, 128>}, {pipeline_mode = #tpu.pipeline_mode<synchronous>, transform_indices = @transform_2, window_bounds = array<i64: 1, 128>}, {pipeline_mode = #tpu.pipeline_mode<synchronous>, transform_indices = @transform_3, window_bounds = array<i64: 1, 128>}, {pipeline_mode = #tpu.pipeline_mode<synchronous>, transform_indices = @transform_4, window_bounds = array<i64: 16, 128>}, {transform_indices = @transform_5, window_bounds = array<i64: 1, 1, 128>}, {transform_indices = @transform_6, window_bounds = array<i64: 1, 1, 128>}, {transform_indices = @transform_7, window_bounds = array<i64: 1, 128, 384>}, {transform_indices = @transform_8, window_bounds = array<i64: 1, 1, 384>}, {transform_indices = @transform_9, window_bounds = array<i64: 1, 128, 128>}, {transform_indices = @transform_10, window_bounds = array<i64: 1, 1, 128>}, {transform_indices = @transform_11, window_bounds = array<i64: 1, 1, 128>}, {transform_indices = @transform_12, window_bounds = array<i64: 1, 1, 128>}, {transform_indices = @transform_13, window_bounds = array<i64: 1, 128, 512>}, {transform_indices = @transform_14, window_bounds = array<i64: 1, 1, 512>}, {transform_indices = @transform_15, window_bounds = array<i64: 1, 512, 128>}, {transform_indices = @transform_16, window_bounds = array<i64: 1, 1, 128>}, {pipeline_mode = #tpu.pipeline_mode<synchronous>, transform_indices = @transform_17, window_bounds = array<i64: 1, 128>}, {pipeline_mode = #tpu.pipeline_mode<synchronous>, transform_indices = @transform_18, window_bounds = array<i64: 1, 128>}, {pipeline_mode = #tpu.pipeline_mode<synchronous>, transform_indices = @transform_19, window_bounds = array<i64: 128, 128>}, {pipeline_mode = #tpu.pipeline_mode<synchronous>, transform_indices = @transform_20, window_bounds = array<i64: 1, 128>}, {transform_indices = @transform_21, window_bounds = array<i64: 16, 128>}]} {
    %c0_i32 = arith.constant 0 : i32
    %0 = arith.cmpi eq, %arg1, %c0_i32 : i32
    %1 = arith.extui %0 : i1 to i32
    %c0_i32_0 = arith.constant 0 : i32
    %2 = arith.cmpi ne, %1, %c0_i32_0 : i32
    scf.if %2 {
      %c0_70 = arith.constant 0 : index
      %c0_71 = arith.constant 0 : index
      %159 = vector.load %arg2[%c0_70, %c0_71] : memref<16x768xbf16, #tpu.memory_space<vmem>>, vector<16x768xbf16>
      %c0_72 = arith.constant 0 : index
      %c0_73 = arith.constant 0 : index
      %160 = vector.load %arg3[%c0_72, %c0_73] : memref<768x128xbf16, #tpu.memory_space<vmem>>, vector<768x128xbf16>
      %cst_74 = arith.constant dense<0.000000e+00> : vector<16x128xf32>
      %161 = tpu.matmul %159, %160, %cst_74 {dimension_numbers = #tpu.dot_dimension_numbers<[1], [0], [0], [1], [0, 0, 1, 1], [], []>} : vector<16x768xbf16>, vector<768x128xbf16>, vector<16x128xf32> -> vector<16x128xf32>
      %c0_75 = arith.constant 0 : index
      %c0_76 = arith.constant 0 : index
      %162 = vector.load %arg4[%c0_75, %c0_76] : memref<1x128xf32, #tpu.memory_space<vmem>>, vector<1x128xf32>
      %163 = vector.broadcast %162 : vector<1x128xf32> to vector<16x128xf32>
      %164 = arith.addf %161, %163 : vector<16x128xf32>
      %165 = tpu.iota {dimensions = array<i32: 0>} : vector<16x128xi32>
      %c7_i32 = arith.constant 7 : i32
      %166 = vector.broadcast %c7_i32 : i32 to vector<16x128xi32>
      %167 = arith.andi %165, %166 : vector<16x128xi32>
      %c0_i32_77 = arith.constant 0 : i32
      %168 = vector.broadcast %c0_i32_77 : i32 to vector<16x128xi32>
      %169 = arith.cmpi eq, %167, %168 : vector<16x128xi32>
      %c0_78 = arith.constant 0 : index
      %c0_79 = arith.constant 0 : index
      %170 = vector.load %arg5[%c0_78, %c0_79] : memref<1x128xf32, #tpu.memory_space<vmem>>, vector<1x128xf32>
      %171 = vector.shape_cast %170 : vector<1x128xf32> to vector<1x128xf32>
      %172 = vector.broadcast %171 : vector<1x128xf32> to vector<16x128xf32>
      %173 = arith.select %169, %172, %164 : vector<16x128xi1>, vector<16x128xf32>
      %c0_80 = arith.constant 0 : index
      %c0_81 = arith.constant 0 : index
      %174 = vector.load %arg6[%c0_80, %c0_81] : memref<16x128xf32, #tpu.memory_space<vmem>>, vector<16x128xf32>
      %175 = arith.addf %173, %174 : vector<16x128xf32>
      %c0_82 = arith.constant 0 : index
      %c0_83 = arith.constant 0 : index
      %176 = vector.load %arg24[%c0_82, %c0_83] : memref<16x128xf32, #tpu.memory_space<vmem>>, vector<16x128xf32>
      tpu.vector_store %arg24[%c0_82, %c0_83], %175 {strides = array<i32>} : memref<16x128xf32, #tpu.memory_space<vmem>>, vector<16x128xf32>,
    } else {
    }
    %c0 = arith.constant 0 : index
    %c0_1 = arith.constant 0 : index
    %3 = vector.load %arg24[%c0, %c0_1] : memref<16x128xf32, #tpu.memory_space<vmem>>, vector<16x128xf32>
    %c0_2 = arith.constant 0 : index
    %c0_3 = arith.constant 0 : index
    %c0_4 = arith.constant 0 : index
    %4 = vector.load %arg7[%c0_2, %c0_3, %c0_4] : memref<1x1x128xf32, #tpu.memory_space<vmem>>, vector<1x1x128xf32>
    %5 = vector.shape_cast %4 : vector<1x1x128xf32> to vector<1x128xf32>
    %c0_5 = arith.constant 0 : index
    %c0_6 = arith.constant 0 : index
    %c0_7 = arith.constant 0 : index
    %6 = vector.load %arg8[%c0_5, %c0_6, %c0_7] : memref<1x1x128xf32, #tpu.memory_space<vmem>>, vector<1x1x128xf32>
    %7 = vector.shape_cast %6 : vector<1x1x128xf32> to vector<1x128xf32>
    %cst = arith.constant dense<0.000000e+00> : vector<16xf32>
    %8 = vector.multi_reduction <add>, %3, %cst [1] : vector<16x128xf32> to vector<16xf32>
    %9 = vector.shape_cast %8 : vector<16xf32> to vector<16x1xf32>
    %cst_8 = arith.constant 1.280000e+02 : f32
    %10 = vector.broadcast %cst_8 : f32 to vector<16x1xf32>
    %11 = arith.divf %9, %10 : vector<16x1xf32>
    %12 = vector.broadcast %11 : vector<16x1xf32> to vector<16x128xf32>
    %13 = arith.subf %3, %12 : vector<16x128xf32>
    %14 = arith.mulf %13, %13 : vector<16x128xf32>
    %cst_9 = arith.constant dense<0.000000e+00> : vector<16xf32>
    %15 = vector.multi_reduction <add>, %14, %cst_9 [1] : vector<16x128xf32> to vector<16xf32>
    %16 = vector.shape_cast %15 : vector<16xf32> to vector<16x1xf32>
    %cst_10 = arith.constant 1.280000e+02 : f32
    %17 = vector.broadcast %cst_10 : f32 to vector<16x1xf32>
    %18 = arith.divf %16, %17 : vector<16x1xf32>
    %19 = vector.broadcast %11 : vector<16x1xf32> to vector<16x128xf32>
    %20 = arith.subf %3, %19 : vector<16x128xf32>
    %cst_11 = arith.constant 9.99999997E-7 : f32
    %21 = vector.broadcast %cst_11 : f32 to vector<16x1xf32>
    %22 = arith.addf %18, %21 : vector<16x1xf32>
    %23 = math.rsqrt %22 : vector<16x1xf32>
    %24 = vector.broadcast %23 : vector<16x1xf32> to vector<16x128xf32>
    %25 = arith.mulf %20, %24 : vector<16x128xf32>
    %26 = vector.broadcast %5 : vector<1x128xf32> to vector<16x128xf32>
    %27 = arith.mulf %25, %26 : vector<16x128xf32>
    %28 = vector.broadcast %7 : vector<1x128xf32> to vector<16x128xf32>
    %29 = arith.addf %27, %28 : vector<16x128xf32>
    %30 = arith.truncf %29 : vector<16x128xf32> to vector<16x128xbf16>
    %c0_12 = arith.constant 0 : index
    %c0_13 = arith.constant 0 : index
    %c0_14 = arith.constant 0 : index
    %31 = vector.load %arg9[%c0_12, %c0_13, %c0_14] : memref<1x128x384xbf16, #tpu.memory_space<vmem>>, vector<1x128x384xbf16>
    %32 = vector.shape_cast %31 : vector<1x128x384xbf16> to vector<128x384xbf16>
    %cst_15 = arith.constant dense<0.000000e+00> : vector<16x384xf32>
    %33 = tpu.matmul %30, %32, %cst_15 {dimension_numbers = #tpu.dot_dimension_numbers<[1], [0], [0], [1], [0, 0, 1, 1], [], []>} : vector<16x128xbf16>, vector<128x384xbf16>, vector<16x384xf32> -> vector<16x384xf32>
    %c0_16 = arith.constant 0 : index
    %c0_17 = arith.constant 0 : index
    %c0_18 = arith.constant 0 : index
    %34 = vector.load %arg10[%c0_16, %c0_17, %c0_18] : memref<1x1x384xf32, #tpu.memory_space<vmem>>, vector<1x1x384xf32>
    %35 = vector.shape_cast %34 : vector<1x1x384xf32> to vector<1x384xf32>
    %36 = vector.broadcast %35 : vector<1x384xf32> to vector<16x384xf32>
    %37 = arith.addf %33, %36 : vector<16x384xf32>
    %38 = vector.shape_cast %37 : vector<16x384xf32> to vector<2x8x384xf32>
    %39 = tpu.iota {dimensions = array<i32: 2>} : vector<2x8x8xi32>
    %c5_i32 = arith.constant 5 : i32
    %40 = vector.broadcast %c5_i32 : i32 to vector<2x8x8xi32>
    %41 = arith.cmpi slt, %39, %40 : vector<2x8x8xi32>
    %42 = vector.extract_strided_slice %38 {offsets = [0, 0, 0], sizes = [2, 8, 64], strides = [1, 1, 1]} : vector<2x8x384xf32> to vector<2x8x64xf32>
    %43 = arith.truncf %42 : vector<2x8x64xf32> to vector<2x8x64xbf16>
    %44 = vector.extract_strided_slice %38 {offsets = [0, 0, 128], sizes = [2, 8, 64], strides = [1, 1, 1]} : vector<2x8x384xf32> to vector<2x8x64xf32>
    %45 = arith.truncf %44 : vector<2x8x64xf32> to vector<2x8x64xbf16>
    %46 = vector.extract_strided_slice %38 {offsets = [0, 0, 256], sizes = [2, 8, 64], strides = [1, 1, 1]} : vector<2x8x384xf32> to vector<2x8x64xf32>
    %47 = arith.truncf %46 : vector<2x8x64xf32> to vector<2x8x64xbf16>
    "tpu.trace_start"() <{level = 10 : i32, message = "bqd,bkd->bqk"}> : () -> ()
    %cst_19 = arith.constant dense<0.000000e+00> : vector<2x8x8xf32>
    %48 = tpu.matmul %43, %45, %cst_19 {dimension_numbers = #tpu.dot_dimension_numbers<[2], [2], [1], [1], [0, 0, 0, 1, 1, 1], [0], [0]>} : vector<2x8x64xbf16>, vector<2x8x64xbf16>, vector<2x8x8xf32> -> vector<2x8x8xf32>
    "tpu.trace_stop"() : () -> ()
    %cst_20 = arith.constant 1.250000e-01 : f32
    %49 = vector.broadcast %cst_20 : f32 to vector<2x8x8xf32>
    %50 = arith.mulf %48, %49 : vector<2x8x8xf32>
    %cst_21 = arith.constant -1.000000e+30 : f32
    %51 = vector.broadcast %cst_21 : f32 to vector<2x8x8xf32>
    %52 = arith.select %41, %50, %51 : vector<2x8x8xi1>, vector<2x8x8xf32>
    %cst_22 = arith.constant dense<0xFF800000> : vector<2x8xf32>
    %53 = vector.multi_reduction <maximumf>, %52, %cst_22 [2] : vector<2x8x8xf32> to vector<2x8xf32>
    %54 = vector.shape_cast %53 : vector<2x8xf32> to vector<2x8x1xf32>
    %55 = vector.broadcast %54 : vector<2x8x1xf32> to vector<2x8x8xf32>
    %56 = arith.subf %52, %55 : vector<2x8x8xf32>
    %57 = math.exp %56 : vector<2x8x8xf32>
    %cst_23 = arith.constant dense<0.000000e+00> : vector<2x8xf32>
    %58 = vector.multi_reduction <add>, %57, %cst_23 [2] : vector<2x8x8xf32> to vector<2x8xf32>
    %59 = vector.shape_cast %58 : vector<2x8xf32> to vector<2x8x1xf32>
    %60 = tpu.reciprocal %59 {approx = true} : vector<2x8x1xf32> -> vector<2x8x1xf32>
    %61 = vector.broadcast %60 : vector<2x8x1xf32> to vector<2x8x8xf32>
    %62 = arith.mulf %57, %61 : vector<2x8x8xf32>
    %63 = arith.truncf %62 : vector<2x8x8xf32> to vector<2x8x8xbf16>
    "tpu.trace_start"() <{level = 10 : i32, message = "bqk,bkd->bqd"}> : () -> ()
    %cst_24 = arith.constant dense<0.000000e+00> : vector<2x8x64xf32>
    %64 = tpu.matmul %63, %47, %cst_24 {dimension_numbers = #tpu.dot_dimension_numbers<[2], [1], [1], [2], [0, 0, 0, 1, 1, 2], [0], [0]>} : vector<2x8x8xbf16>, vector<2x8x64xbf16>, vector<2x8x64xf32> -> vector<2x8x64xf32>
    "tpu.trace_stop"() : () -> ()
    %65 = vector.extract_strided_slice %38 {offsets = [0, 0, 64], sizes = [2, 8, 64], strides = [1, 1, 1]} : vector<2x8x384xf32> to vector<2x8x64xf32>
    %66 = arith.truncf %65 : vector<2x8x64xf32> to vector<2x8x64xbf16>
    %67 = vector.extract_strided_slice %38 {offsets = [0, 0, 192], sizes = [2, 8, 64], strides = [1, 1, 1]} : vector<2x8x384xf32> to vector<2x8x64xf32>
    %68 = arith.truncf %67 : vector<2x8x64xf32> to vector<2x8x64xbf16>
    %69 = vector.extract_strided_slice %38 {offsets = [0, 0, 320], sizes = [2, 8, 64], strides = [1, 1, 1]} : vector<2x8x384xf32> to vector<2x8x64xf32>
    %70 = arith.truncf %69 : vector<2x8x64xf32> to vector<2x8x64xbf16>
    "tpu.trace_start"() <{level = 10 : i32, message = "bqd,bkd->bqk"}> : () -> ()
    %cst_25 = arith.constant dense<0.000000e+00> : vector<2x8x8xf32>
    %71 = tpu.matmul %66, %68, %cst_25 {dimension_numbers = #tpu.dot_dimension_numbers<[2], [2], [1], [1], [0, 0, 0, 1, 1, 1], [0], [0]>} : vector<2x8x64xbf16>, vector<2x8x64xbf16>, vector<2x8x8xf32> -> vector<2x8x8xf32>
    "tpu.trace_stop"() : () -> ()
    %cst_26 = arith.constant 1.250000e-01 : f32
    %72 = vector.broadcast %cst_26 : f32 to vector<2x8x8xf32>
    %73 = arith.mulf %71, %72 : vector<2x8x8xf32>
    %cst_27 = arith.constant -1.000000e+30 : f32
    %74 = vector.broadcast %cst_27 : f32 to vector<2x8x8xf32>
    %75 = arith.select %41, %73, %74 : vector<2x8x8xi1>, vector<2x8x8xf32>
    %cst_28 = arith.constant dense<0xFF800000> : vector<2x8xf32>
    %76 = vector.multi_reduction <maximumf>, %75, %cst_28 [2] : vector<2x8x8xf32> to vector<2x8xf32>
    %77 = vector.shape_cast %76 : vector<2x8xf32> to vector<2x8x1xf32>
    %78 = vector.broadcast %77 : vector<2x8x1xf32> to vector<2x8x8xf32>
    %79 = arith.subf %75, %78 : vector<2x8x8xf32>
    %80 = math.exp %79 : vector<2x8x8xf32>
    %cst_29 = arith.constant dense<0.000000e+00> : vector<2x8xf32>
    %81 = vector.multi_reduction <add>, %80, %cst_29 [2] : vector<2x8x8xf32> to vector<2x8xf32>
    %82 = vector.shape_cast %81 : vector<2x8xf32> to vector<2x8x1xf32>
    %83 = tpu.reciprocal %82 {approx = true} : vector<2x8x1xf32> -> vector<2x8x1xf32>
    %84 = vector.broadcast %83 : vector<2x8x1xf32> to vector<2x8x8xf32>
    %85 = arith.mulf %80, %84 : vector<2x8x8xf32>
    %86 = arith.truncf %85 : vector<2x8x8xf32> to vector<2x8x8xbf16>
    "tpu.trace_start"() <{level = 10 : i32, message = "bqk,bkd->bqd"}> : () -> ()
    %cst_30 = arith.constant dense<0.000000e+00> : vector<2x8x64xf32>
    %87 = tpu.matmul %86, %70, %cst_30 {dimension_numbers = #tpu.dot_dimension_numbers<[2], [1], [1], [2], [0, 0, 0, 1, 1, 2], [0], [0]>} : vector<2x8x8xbf16>, vector<2x8x64xbf16>, vector<2x8x64xf32> -> vector<2x8x64xf32>
    "tpu.trace_stop"() : () -> ()
    %88 = tpu.concatenate %64, %87 in 2 : vector<2x8x64xf32>, vector<2x8x64xf32> -> vector<2x8x128xf32>
    %89 = vector.shape_cast %88 : vector<2x8x128xf32> to vector<16x128xf32>
    %90 = arith.truncf %89 : vector<16x128xf32> to vector<16x128xbf16>
    %c0_31 = arith.constant 0 : index
    %c0_32 = arith.constant 0 : index
    %c0_33 = arith.constant 0 : index
    %91 = vector.load %arg11[%c0_31, %c0_32, %c0_33] : memref<1x128x128xbf16, #tpu.memory_space<vmem>>, vector<1x128x128xbf16>
    %92 = vector.shape_cast %91 : vector<1x128x128xbf16> to vector<128x128xbf16>
    %cst_34 = arith.constant dense<0.000000e+00> : vector<16x128xf32>
    %93 = tpu.matmul %90, %92, %cst_34 {dimension_numbers = #tpu.dot_dimension_numbers<[1], [0], [0], [1], [0, 0, 1, 1], [], []>} : vector<16x128xbf16>, vector<128x128xbf16>, vector<16x128xf32> -> vector<16x128xf32>
    %c0_35 = arith.constant 0 : index
    %c0_36 = arith.constant 0 : index
    %c0_37 = arith.constant 0 : index
    %94 = vector.load %arg12[%c0_35, %c0_36, %c0_37] : memref<1x1x128xf32, #tpu.memory_space<vmem>>, vector<1x1x128xf32>
    %95 = vector.shape_cast %94 : vector<1x1x128xf32> to vector<1x128xf32>
    %96 = vector.broadcast %95 : vector<1x128xf32> to vector<16x128xf32>
    %97 = arith.addf %93, %96 : vector<16x128xf32>
    %98 = arith.addf %3, %97 : vector<16x128xf32>
    %c0_38 = arith.constant 0 : index
    %c0_39 = arith.constant 0 : index
    %c0_40 = arith.constant 0 : index
    %99 = vector.load %arg13[%c0_38, %c0_39, %c0_40] : memref<1x1x128xf32, #tpu.memory_space<vmem>>, vector<1x1x128xf32>
    %100 = vector.shape_cast %99 : vector<1x1x128xf32> to vector<1x128xf32>
    %c0_41 = arith.constant 0 : index
    %c0_42 = arith.constant 0 : index
    %c0_43 = arith.constant 0 : index
    %101 = vector.load %arg14[%c0_41, %c0_42, %c0_43] : memref<1x1x128xf32, #tpu.memory_space<vmem>>, vector<1x1x128xf32>
    %102 = vector.shape_cast %101 : vector<1x1x128xf32> to vector<1x128xf32>
    %cst_44 = arith.constant dense<0.000000e+00> : vector<16xf32>
    %103 = vector.multi_reduction <add>, %98, %cst_44 [1] : vector<16x128xf32> to vector<16xf32>
    %104 = vector.shape_cast %103 : vector<16xf32> to vector<16x1xf32>
    %cst_45 = arith.constant 1.280000e+02 : f32
    %105 = vector.broadcast %cst_45 : f32 to vector<16x1xf32>
    %106 = arith.divf %104, %105 : vector<16x1xf32>
    %107 = vector.broadcast %106 : vector<16x1xf32> to vector<16x128xf32>
    %108 = arith.subf %98, %107 : vector<16x128xf32>
    %109 = arith.mulf %108, %108 : vector<16x128xf32>
    %cst_46 = arith.constant dense<0.000000e+00> : vector<16xf32>
    %110 = vector.multi_reduction <add>, %109, %cst_46 [1] : vector<16x128xf32> to vector<16xf32>
    %111 = vector.shape_cast %110 : vector<16xf32> to vector<16x1xf32>
    %cst_47 = arith.constant 1.280000e+02 : f32
    %112 = vector.broadcast %cst_47 : f32 to vector<16x1xf32>
    %113 = arith.divf %111, %112 : vector<16x1xf32>
    %114 = vector.broadcast %106 : vector<16x1xf32> to vector<16x128xf32>
    %115 = arith.subf %98, %114 : vector<16x128xf32>
    %cst_48 = arith.constant 9.99999997E-7 : f32
    %116 = vector.broadcast %cst_48 : f32 to vector<16x1xf32>
    %117 = arith.addf %113, %116 : vector<16x1xf32>
    %118 = math.rsqrt %117 : vector<16x1xf32>
    %119 = vector.broadcast %118 : vector<16x1xf32> to vector<16x128xf32>
    %120 = arith.mulf %115, %119 : vector<16x128xf32>
    %121 = vector.broadcast %100 : vector<1x128xf32> to vector<16x128xf32>
    %122 = arith.mulf %120, %121 : vector<16x128xf32>
    %123 = vector.broadcast %102 : vector<1x128xf32> to vector<16x128xf32>
    %124 = arith.addf %122, %123 : vector<16x128xf32>
    %125 = arith.truncf %124 : vector<16x128xf32> to vector<16x128xbf16>
    %c0_49 = arith.constant 0 : index
    %c0_50 = arith.constant 0 : index
    %c0_51 = arith.constant 0 : index
    %126 = vector.load %arg15[%c0_49, %c0_50, %c0_51] : memref<1x128x512xbf16, #tpu.memory_space<vmem>>, vector<1x128x512xbf16>
    %127 = vector.shape_cast %126 : vector<1x128x512xbf16> to vector<128x512xbf16>
    %cst_52 = arith.constant dense<0.000000e+00> : vector<16x512xf32>
    %128 = tpu.matmul %125, %127, %cst_52 {dimension_numbers = #tpu.dot_dimension_numbers<[1], [0], [0], [1], [0, 0, 1, 1], [], []>} : vector<16x128xbf16>, vector<128x512xbf16>, vector<16x512xf32> -> vector<16x512xf32>
    %c0_53 = arith.constant 0 : index
    %c0_54 = arith.constant 0 : index
    %c0_55 = arith.constant 0 : index
    %129 = vector.load %arg16[%c0_53, %c0_54, %c0_55] : memref<1x1x512xf32, #tpu.memory_space<vmem>>, vector<1x1x512xf32>
    %130 = vector.shape_cast %129 : vector<1x1x512xf32> to vector<1x512xf32>
    %131 = vector.broadcast %130 : vector<1x512xf32> to vector<16x512xf32>
    %132 = arith.addf %128, %131 : vector<16x512xf32>
    %cst_56 = arith.constant 5.000000e-01 : f32
    %133 = vector.broadcast %cst_56 : f32 to vector<16x512xf32>
    %134 = arith.mulf %133, %132 : vector<16x512xf32>
    %cst_57 = arith.constant 4.471500e-02 : f32
    %135 = vector.broadcast %cst_57 : f32 to vector<16x512xf32>
    %136 = arith.mulf %135, %132 : vector<16x512xf32>
    %137 = arith.mulf %136, %132 : vector<16x512xf32>
    %138 = arith.mulf %137, %132 : vector<16x512xf32>
    %139 = arith.addf %132, %138 : vector<16x512xf32>
    %cst_58 = arith.constant 0.797884583 : f32
    %140 = vector.broadcast %cst_58 : f32 to vector<16x512xf32>
    %141 = arith.mulf %140, %139 : vector<16x512xf32>
    %142 = math.tanh %141 : vector<16x512xf32>
    %cst_59 = arith.constant 1.000000e+00 : f32
    %143 = vector.broadcast %cst_59 : f32 to vector<16x512xf32>
    %144 = arith.addf %143, %142 : vector<16x512xf32>
    %145 = arith.mulf %134, %144 : vector<16x512xf32>
    %146 = arith.truncf %145 : vector<16x512xf32> to vector<16x512xbf16>
    %c0_60 = arith.constant 0 : index
    %c0_61 = arith.constant 0 : index
    %c0_62 = arith.constant 0 : index
    %147 = vector.load %arg17[%c0_60, %c0_61, %c0_62] : memref<1x512x128xbf16, #tpu.memory_space<vmem>>, vector<1x512x128xbf16>
    %148 = vector.shape_cast %147 : vector<1x512x128xbf16> to vector<512x128xbf16>
    %cst_63 = arith.constant dense<0.000000e+00> : vector<16x128xf32>
    %149 = tpu.matmul %146, %148, %cst_63 {dimension_numbers = #tpu.dot_dimension_numbers<[1], [0], [0], [1], [0, 0, 1, 1], [], []>} : vector<16x512xbf16>, vector<512x128xbf16>, vector<16x128xf32> -> vector<16x128xf32>
    %150 = arith.addf %98, %149 : vector<16x128xf32>
    %c0_64 = arith.constant 0 : index
    %c0_65 = arith.constant 0 : index
    %c0_66 = arith.constant 0 : index
    %151 = vector.load %arg18[%c0_64, %c0_65, %c0_66] : memref<1x1x128xf32, #tpu.memory_space<vmem>>, vector<1x1x128xf32>
    %152 = vector.shape_cast %151 : vector<1x1x128xf32> to vector<1x128xf32>
    %153 = vector.broadcast %152 : vector<1x128xf32> to vector<16x128xf32>
    %154 = arith.addf %150, %153 : vector<16x128xf32>
    %c0_67 = arith.constant 0 : index
    %c0_68 = arith.constant 0 : index
    %155 = vector.load %arg24[%c0_67, %c0_68] : memref<16x128xf32, #tpu.memory_space<vmem>>, vector<16x128xf32>
    tpu.vector_store %arg24[%c0_67, %c0_68], %154 {strides = array<i32>} : memref<16x128xf32, #tpu.memory_space<vmem>>, vector<16x128xf32>,
    %c1_i32 = arith.constant 1 : i32
    %156 = arith.cmpi eq, %arg1, %c1_i32 : i32
    %157 = arith.extui %156 : i1 to i32
    %c0_i32_69 = arith.constant 0 : i32
    %158 = arith.cmpi ne, %157, %c0_i32_69 : i32
    scf.if %158 {
      %c0_70 = arith.constant 0 : index
      %c0_71 = arith.constant 0 : index
      %159 = vector.load %arg19[%c0_70, %c0_71] : memref<1x128xf32, #tpu.memory_space<vmem>>, vector<1x128xf32>
      %c0_72 = arith.constant 0 : index
      %c0_73 = arith.constant 0 : index
      %160 = vector.load %arg20[%c0_72, %c0_73] : memref<1x128xf32, #tpu.memory_space<vmem>>, vector<1x128xf32>
      %cst_74 = arith.constant dense<0.000000e+00> : vector<16xf32>
      %161 = vector.multi_reduction <add>, %154, %cst_74 [1] : vector<16x128xf32> to vector<16xf32>
      %162 = vector.shape_cast %161 : vector<16xf32> to vector<16x1xf32>
      %cst_75 = arith.constant 1.280000e+02 : f32
      %163 = vector.broadcast %cst_75 : f32 to vector<16x1xf32>
      %164 = arith.divf %162, %163 : vector<16x1xf32>
      %165 = vector.broadcast %164 : vector<16x1xf32> to vector<16x128xf32>
      %166 = arith.subf %154, %165 : vector<16x128xf32>
      %167 = arith.mulf %166, %166 : vector<16x128xf32>
      %cst_76 = arith.constant dense<0.000000e+00> : vector<16xf32>
      %168 = vector.multi_reduction <add>, %167, %cst_76 [1] : vector<16x128xf32> to vector<16xf32>
      %169 = vector.shape_cast %168 : vector<16xf32> to vector<16x1xf32>
      %cst_77 = arith.constant 1.280000e+02 : f32
      %170 = vector.broadcast %cst_77 : f32 to vector<16x1xf32>
      %171 = arith.divf %169, %170 : vector<16x1xf32>
      %172 = vector.broadcast %164 : vector<16x1xf32> to vector<16x128xf32>
      %173 = arith.subf %154, %172 : vector<16x128xf32>
      %cst_78 = arith.constant 9.99999997E-7 : f32
      %174 = vector.broadcast %cst_78 : f32 to vector<16x1xf32>
      %175 = arith.addf %171, %174 : vector<16x1xf32>
      %176 = math.rsqrt %175 : vector<16x1xf32>
      %177 = vector.broadcast %176 : vector<16x1xf32> to vector<16x128xf32>
      %178 = arith.mulf %173, %177 : vector<16x128xf32>
      %179 = vector.broadcast %159 : vector<1x128xf32> to vector<16x128xf32>
      %180 = arith.mulf %178, %179 : vector<16x128xf32>
      %181 = vector.broadcast %160 : vector<1x128xf32> to vector<16x128xf32>
      %182 = arith.addf %180, %181 : vector<16x128xf32>
      %183 = arith.truncf %182 : vector<16x128xf32> to vector<16x128xbf16>
      %c0_79 = arith.constant 0 : index
      %c0_80 = arith.constant 0 : index
      %184 = vector.load %arg21[%c0_79, %c0_80] : memref<128x128xbf16, #tpu.memory_space<vmem>>, vector<128x128xbf16>
      %cst_81 = arith.constant dense<0.000000e+00> : vector<16x128xf32>
      %185 = tpu.matmul %183, %184, %cst_81 {dimension_numbers = #tpu.dot_dimension_numbers<[1], [0], [0], [1], [0, 0, 1, 1], [], []>} : vector<16x128xbf16>, vector<128x128xbf16>, vector<16x128xf32> -> vector<16x128xf32>
      %c0_82 = arith.constant 0 : index
      %c0_83 = arith.constant 0 : index
      %186 = vector.load %arg22[%c0_82, %c0_83] : memref<1x128xf32, #tpu.memory_space<vmem>>, vector<1x128xf32>
      %187 = vector.broadcast %186 : vector<1x128xf32> to vector<16x128xf32>
      %188 = arith.addf %185, %187 : vector<16x128xf32>
      %c0_84 = arith.constant 0 : index
      %c0_85 = arith.constant 0 : index
      %189 = vector.load %arg23[%c0_84, %c0_85] : memref<16x128xf32, #tpu.memory_space<vmem>>, vector<16x128xf32>
      tpu.vector_store %arg23[%c0_84, %c0_85], %188 {strides = array<i32>} : memref<16x128xf32, #tpu.memory_space<vmem>>, vector<16x128xf32>,
    } else {
    }
    return
  }
  func.func @transform_0(%arg0: i32, %arg1: i32) -> (i32, i32) {
    %c0_i32 = arith.constant 0 : i32
    %c0_i32_0 = arith.constant 0 : i32
    return %arg0, %c0_i32 : i32, i32
  }
  func.func @transform_1(%arg0: i32, %arg1: i32) -> (i32, i32) {
    %c0_i32 = arith.constant 0 : i32
    %c0_i32_0 = arith.constant 0 : i32
    %c0_i32_1 = arith.constant 0 : i32
    return %c0_i32, %c0_i32_0 : i32, i32
  }
  func.func @transform_2(%arg0: i32, %arg1: i32) -> (i32, i32) {
    %c0_i32 = arith.constant 0 : i32
    %c0_i32_0 = arith.constant 0 : i32
    %c0_i32_1 = arith.constant 0 : i32
    return %c0_i32, %c0_i32_0 : i32, i32
  }
  func.func @transform_3(%arg0: i32, %arg1: i32) -> (i32, i32) {
    %c0_i32 = arith.constant 0 : i32
    %c0_i32_0 = arith.constant 0 : i32
    %c0_i32_1 = arith.constant 0 : i32
    return %c0_i32, %c0_i32_0 : i32, i32
  }
  func.func @transform_4(%arg0: i32, %arg1: i32) -> (i32, i32) {
    %c0_i32 = arith.constant 0 : i32
    %c0_i32_0 = arith.constant 0 : i32
    %c0_i32_1 = arith.constant 0 : i32
    return %c0_i32, %c0_i32_0 : i32, i32
  }
  func.func @transform_5(%arg0: i32, %arg1: i32) -> (i32, i32, i32) {
    %c0_i32 = arith.constant 0 : i32
    %c0_i32_0 = arith.constant 0 : i32
    %c0_i32_1 = arith.constant 0 : i32
    return %arg1, %c0_i32, %c0_i32_0 : i32, i32, i32
  }
  func.func @transform_6(%arg0: i32, %arg1: i32) -> (i32, i32, i32) {
    %c0_i32 = arith.constant 0 : i32
    %c0_i32_0 = arith.constant 0 : i32
    %c0_i32_1 = arith.constant 0 : i32
    return %arg1, %c0_i32, %c0_i32_0 : i32, i32, i32
  }
  func.func @transform_7(%arg0: i32, %arg1: i32) -> (i32, i32, i32) {
    %c0_i32 = arith.constant 0 : i32
    %c0_i32_0 = arith.constant 0 : i32
    %c0_i32_1 = arith.constant 0 : i32
    return %arg1, %c0_i32, %c0_i32_0 : i32, i32, i32
  }
  func.func @transform_8(%arg0: i32, %arg1: i32) -> (i32, i32, i32) {
    %c0_i32 = arith.constant 0 : i32
    %c0_i32_0 = arith.constant 0 : i32
    %c0_i32_1 = arith.constant 0 : i32
    return %arg1, %c0_i32, %c0_i32_0 : i32, i32, i32
  }
  func.func @transform_9(%arg0: i32, %arg1: i32) -> (i32, i32, i32) {
    %c0_i32 = arith.constant 0 : i32
    %c0_i32_0 = arith.constant 0 : i32
    %c0_i32_1 = arith.constant 0 : i32
    return %arg1, %c0_i32, %c0_i32_0 : i32, i32, i32
  }
  func.func @transform_10(%arg0: i32, %arg1: i32) -> (i32, i32, i32) {
    %c0_i32 = arith.constant 0 : i32
    %c0_i32_0 = arith.constant 0 : i32
    %c0_i32_1 = arith.constant 0 : i32
    return %arg1, %c0_i32, %c0_i32_0 : i32, i32, i32
  }
  func.func @transform_11(%arg0: i32, %arg1: i32) -> (i32, i32, i32) {
    %c0_i32 = arith.constant 0 : i32
    %c0_i32_0 = arith.constant 0 : i32
    %c0_i32_1 = arith.constant 0 : i32
    return %arg1, %c0_i32, %c0_i32_0 : i32, i32, i32
  }
  func.func @transform_12(%arg0: i32, %arg1: i32) -> (i32, i32, i32) {
    %c0_i32 = arith.constant 0 : i32
    %c0_i32_0 = arith.constant 0 : i32
    %c0_i32_1 = arith.constant 0 : i32
    return %arg1, %c0_i32, %c0_i32_0 : i32, i32, i32
  }
  func.func @transform_13(%arg0: i32, %arg1: i32) -> (i32, i32, i32) {
    %c0_i32 = arith.constant 0 : i32
    %c0_i32_0 = arith.constant 0 : i32
    %c0_i32_1 = arith.constant 0 : i32
    return %arg1, %c0_i32, %c0_i32_0 : i32, i32, i32
  }
  func.func @transform_14(%arg0: i32, %arg1: i32) -> (i32, i32, i32) {
    %c0_i32 = arith.constant 0 : i32
    %c0_i32_0 = arith.constant 0 : i32
    %c0_i32_1 = arith.constant 0 : i32
    return %arg1, %c0_i32, %c0_i32_0 : i32, i32, i32
  }
  func.func @transform_15(%arg0: i32, %arg1: i32) -> (i32, i32, i32) {
    %c0_i32 = arith.constant 0 : i32
    %c0_i32_0 = arith.constant 0 : i32
    %c0_i32_1 = arith.constant 0 : i32
    return %arg1, %c0_i32, %c0_i32_0 : i32, i32, i32
  }
  func.func @transform_16(%arg0: i32, %arg1: i32) -> (i32, i32, i32) {
    %c0_i32 = arith.constant 0 : i32
    %c0_i32_0 = arith.constant 0 : i32
    %c0_i32_1 = arith.constant 0 : i32
    return %arg1, %c0_i32, %c0_i32_0 : i32, i32, i32
  }
  func.func @transform_17(%arg0: i32, %arg1: i32) -> (i32, i32) {
    %c0_i32 = arith.constant 0 : i32
    %c0_i32_0 = arith.constant 0 : i32
    %c0_i32_1 = arith.constant 0 : i32
    return %c0_i32, %c0_i32_0 : i32, i32
  }
  func.func @transform_18(%arg0: i32, %arg1: i32) -> (i32, i32) {
    %c0_i32 = arith.constant 0 : i32
    %c0_i32_0 = arith.constant 0 : i32
    %c0_i32_1 = arith.constant 0 : i32
    return %c0_i32, %c0_i32_0 : i32, i32
  }
  func.func @transform_19(%arg0: i32, %arg1: i32) -> (i32, i32) {
    %c0_i32 = arith.constant 0 : i32
    %c0_i32_0 = arith.constant 0 : i32
    %c0_i32_1 = arith.constant 0 : i32
    return %c0_i32, %c0_i32_0 : i32, i32
  }
  func.func @transform_20(%arg0: i32, %arg1: i32) -> (i32, i32) {
    %c0_i32 = arith.constant 0 : i32
    %c0_i32_0 = arith.constant 0 : i32
    %c0_i32_1 = arith.constant 0 : i32
    return %c0_i32, %c0_i32_0 : i32, i32
  }
  func.func @transform_21(%arg0: i32, %arg1: i32) -> (i32, i32) {
    %c0_i32 = arith.constant 0 : i32
    %c0_i32_0 = arith.constant 0 : i32
    return %arg0, %c0_i32 : i32, i32
  }
}

</mosaic_0001>

<llo_original>
// kernel: vit_forward.1
$region0: #{vit_forward.1}
  #allocation0 [shape = 'u32[]', space=smem, size = 0x4, offset = 0x4, fixed_abs, tag = 'smem constant byte address 0x4 - core index']
  #allocation1 [shape = 'u32[144,128]{1,0:T(1,128)}', space=vmem, size = 0x12000, scoped, tag = 'internal scratch']
  #allocation2 [shape = 'f32[16,128]{1,0:T(8,128)}', space=vmem, size = 0x2000, scoped, tag = 'scratch operand']
  %s0 = inlined_call_operand.vmem [shape: bf16[32,768], index: 0, kind: input, shape index: {}]
  %s1 = inlined_call_operand.vmem [shape: bf16[768,128], index: 1, kind: input, shape index: {}]
  %s2 = inlined_call_operand.vmem [shape: f32[1,128], index: 2, kind: input, shape index: {}]
  %s3 = inlined_call_operand.vmem [shape: f32[1,128], index: 3, kind: input, shape index: {}]
  %s4 = inlined_call_operand.vmem [shape: f32[16,128], index: 4, kind: input, shape index: {}]
  %s5 = inlined_call_operand.vmem [shape: f32[2,1,128], index: 5, kind: input, shape index: {}]
  %s6 = inlined_call_operand.vmem [shape: f32[2,1,128], index: 6, kind: input, shape index: {}]
  %s7 = inlined_call_operand.vmem [shape: bf16[2,128,384], index: 7, kind: input, shape index: {}]
  %s8 = inlined_call_operand.vmem [shape: f32[2,1,384], index: 8, kind: input, shape index: {}]
  %s9 = inlined_call_operand.vmem [shape: bf16[2,128,128], index: 9, kind: input, shape index: {}]
  %s10 = inlined_call_operand.vmem [shape: f32[2,1,128], index: 10, kind: input, shape index: {}]
  %s11 = inlined_call_operand.vmem [shape: f32[2,1,128], index: 11, kind: input, shape index: {}]
  %s12 = inlined_call_operand.vmem [shape: f32[2,1,128], index: 12, kind: input, shape index: {}]
  %s13 = inlined_call_operand.vmem [shape: bf16[2,128,512], index: 13, kind: input, shape index: {}]
  %s14 = inlined_call_operand.vmem [shape: f32[2,1,512], index: 14, kind: input, shape index: {}]
  %s15 = inlined_call_operand.vmem [shape: bf16[2,512,128], index: 15, kind: input, shape index: {}]
  %s16 = inlined_call_operand.vmem [shape: f32[2,1,128], index: 16, kind: input, shape index: {}]
  %s17 = inlined_call_operand.vmem [shape: f32[1,128], index: 17, kind: input, shape index: {}]
  %s18 = inlined_call_operand.vmem [shape: f32[1,128], index: 18, kind: input, shape index: {}]
  %s19 = inlined_call_operand.vmem [shape: bf16[128,128], index: 19, kind: input, shape index: {}]
  %s20 = inlined_call_operand.vmem [shape: f32[1,128], index: 20, kind: input, shape index: {}]
  %s21 = inlined_call_operand.vmem [shape: f32[32,128], index: 21, kind: output, shape index: {}]
  %s22 = sld [smem:[#allocation0]]
  $region125: #{vit_forward.1} parent=0
    _
  %s24 = ssub.s32 1, %s22
  %s25 = scalar_select 0, %s24, %s22
  loop: start=0, step=1, limit=6
  $region2: #{vit_forward.1} parent=0 // loop_pre_header
    _
  $region3: #{vit_forward.1} parent=0 // loop_header
    %s27 = sphi 0, %s31
    %p28 = scmp.ge.s32.totalorder %s27, 6
    %s34 = sphi 0, %s46
    %s35 = sphi 0, %s42
    %s36 = sphi 0, %s34
    %s37 = sphi 0, %s35
    %s38 = sphi 0, %s36
    %s39 = sphi 0, %s37
    %s49 = sphi 0, %s51
    %s52 = sphi 0, %s49
    %s53 = sphi 0, %s52
    %s69 = sphi 0, %s53
    %s73 = sphi 0, %s73
    %s75 = sphi 0, %s73
    %s76 = sphi 0, %s75
    %s90 = sphi 0, %s76
    %s94 = sphi 0, %s94
    %s96 = sphi 0, %s94
    %s97 = sphi 0, %s96
    %s111 = sphi 0, %s97
    %s115 = sphi 0, %s115
    %s117 = sphi 0, %s115
    %s118 = sphi 0, %s117
    %s132 = sphi 0, %s118
    %s136 = sphi 0, %s136
    %s138 = sphi 0, %s136
    %s139 = sphi 0, %s138
    %s153 = sphi 0, %s139
    %s159 = sphi 0, %s161
    %s162 = sphi 0, %s159
    %s163 = sphi 0, %s162
    %s179 = sphi 0, %s163
    %s185 = sphi 0, %s187
    %s188 = sphi 0, %s185
    %s189 = sphi 0, %s188
    %s205 = sphi 0, %s189
    %s211 = sphi 0, %s213
    %s214 = sphi 0, %s211
    %s215 = sphi 0, %s214
    %s231 = sphi 0, %s215
    %s237 = sphi 0, %s239
    %s240 = sphi 0, %s237
    %s241 = sphi 0, %s240
    %s257 = sphi 0, %s241
    %s263 = sphi 0, %s265
    %s266 = sphi 0, %s263
    %s267 = sphi 0, %s266
    %s283 = sphi 0, %s267
    %s289 = sphi 0, %s291
    %s292 = sphi 0, %s289
    %s293 = sphi 0, %s292
    %s309 = sphi 0, %s293
    %s315 = sphi 0, %s317
    %s318 = sphi 0, %s315
    %s319 = sphi 0, %s318
    %s335 = sphi 0, %s319
    %s341 = sphi 0, %s343
    %s344 = sphi 0, %s341
    %s345 = sphi 0, %s344
    %s361 = sphi 0, %s345
    %s367 = sphi 0, %s369
    %s370 = sphi 0, %s367
    %s371 = sphi 0, %s370
    %s387 = sphi 0, %s371
    %s393 = sphi 0, %s395
    %s396 = sphi 0, %s393
    %s397 = sphi 0, %s396
    %s413 = sphi 0, %s397
    %s419 = sphi 0, %s421
    %s422 = sphi 0, %s419
    %s423 = sphi 0, %s422
    %s439 = sphi 0, %s423
    %s445 = sphi 0, %s447
    %s448 = sphi 0, %s445
    %s449 = sphi 0, %s448
    %s465 = sphi 0, %s449
    %s469 = sphi 0, %s469
    %s471 = sphi 0, %s469
    %s472 = sphi 0, %s471
    %s486 = sphi 0, %s472
    %s490 = sphi 0, %s490
    %s492 = sphi 0, %s490
    %s493 = sphi 0, %s492
    %s507 = sphi 0, %s493
    %s511 = sphi 0, %s511
    %s513 = sphi 0, %s511
    %s514 = sphi 0, %s513
    %s528 = sphi 0, %s514
    %s532 = sphi 0, %s532
    %s534 = sphi 0, %s532
    %s535 = sphi 0, %s534
    %s549 = sphi 0, %s535
    %s555 = sphi 0, %s557
    %s558 = sphi 0, %s555
    %s559 = sphi 0, %s558
    %s575 = sphi 0, %s559
  $region4: #{vit_forward.1} parent=0 // loop_header_branch
    %30 = sbr.rel (%p28) target = $region8
  $region5: #{vit_forward.1} parent=0 // loop_body
    %s32 = ssub.s32 %s27, 1
    %s33 = ssub.s32 %s27, 2
    %s40 = sadd.s32 1, %s35
    %p41 = scmp.ge.s32.totalorder %s40, 2
    %s42 = scalar_select %p41, 0, %s40
    %s43 = sadd.s32 1, %s34
    %s44 = scalar_select %p41, %s43, %s34
    %p45 = scmp.ge.s32.totalorder %s44, 2
    %s46 = scalar_select %p45, 0, %s44
    %s47 = ssub.s32 %s34, %s46
    %p48 = scmp.eq.s32.totalorder %s47, 0
    %s50 = sadd.s32 %s49, 1
    %s51 = scalar_select %p48, %s49, %s50
    %p54 = pneg %p48
    %p55 = scmp.eq.s32.totalorder %s27, 3
    %p56 = por %p54, %p55
    %p57 = scmp.ne.s32.totalorder %s49, %s52
    %p58 = scmp.eq.s32.totalorder %s27, 0
    %p59 = por %p57, %p58
    %p60 = scmp.ne.s32.totalorder %s49, %s52
    %p61 = scmp.eq.s32.totalorder %s32, 3
    %p62 = por %p60, %p61
    %p63 = scmp.ne.s32.totalorder %s52, %s53
    %p64 = scmp.eq.s32.totalorder %s32, 0
    %p65 = por %p63, %p64
    %p66 = scmp.ne.s32.totalorder %s52, %s53
    %p67 = scmp.eq.s32.totalorder %s33, 3
    %p68 = por %p66, %p67
    %p70 = scmp.ne.s32.totalorder %s53, %s69
    %p71 = scmp.eq.s32.totalorder %s33, 0
    %p72 = por %p70, %p71
    %s74 = sadd.s32 %s73, 1
    %p77 = scmp.eq.s32.totalorder %s27, 3
    %p78 = scmp.ne.s32.totalorder %s73, %s75
    %p79 = scmp.eq.s32.totalorder %s27, 0
    %p80 = por %p78, %p79
    %p81 = scmp.ne.s32.totalorder %s73, %s75
    %p82 = scmp.eq.s32.totalorder %s32, 3
    %p83 = por %p81, %p82
    %p84 = scmp.ne.s32.totalorder %s75, %s76
    %p85 = scmp.eq.s32.totalorder %s32, 0
    %p86 = por %p84, %p85
    %p87 = scmp.ne.s32.totalorder %s75, %s76
    %p88 = scmp.eq.s32.totalorder %s33, 3
    %p89 = por %p87, %p88
    %p91 = scmp.ne.s32.totalorder %s76, %s90
    %p92 = scmp.eq.s32.totalorder %s33, 0
    %p93 = por %p91, %p92
    %s95 = sadd.s32 %s94, 1
    %p98 = scmp.eq.s32.totalorder %s27, 3
    %p99 = scmp.ne.s32.totalorder %s94, %s96
    %p100 = scmp.eq.s32.totalorder %s27, 0
    %p101 = por %p99, %p100
    %p102 = scmp.ne.s32.totalorder %s94, %s96
    %p103 = scmp.eq.s32.totalorder %s32, 3
    %p104 = por %p102, %p103
    %p105 = scmp.ne.s32.totalorder %s96, %s97
    %p106 = scmp.eq.s32.totalorder %s32, 0
    %p107 = por %p105, %p106
    %p108 = scmp.ne.s32.totalorder %s96, %s97
    %p109 = scmp.eq.s32.totalorder %s33, 3
    %p110 = por %p108, %p109
    %p112 = scmp.ne.s32.totalorder %s97, %s111
    %p113 = scmp.eq.s32.totalorder %s33, 0
    %p114 = por %p112, %p113
    %s116 = sadd.s32 %s115, 1
    %p119 = scmp.eq.s32.totalorder %s27, 3
    %p120 = scmp.ne.s32.totalorder %s115, %s117
    %p121 = scmp.eq.s32.totalorder %s27, 0
    %p122 = por %p120, %p121
    %p123 = scmp.ne.s32.totalorder %s115, %s117
    %p124 = scmp.eq.s32.totalorder %s32, 3
    %p125 = por %p123, %p124
    %p126 = scmp.ne.s32.totalorder %s117, %s118
    %p127 = scmp.eq.s32.totalorder %s32, 0
    %p128 = por %p126, %p127
    %p129 = scmp.ne.s32.totalorder %s117, %s118
    %p130 = scmp.eq.s32.totalorder %s33, 3
    %p131 = por %p129, %p130
    %p133 = scmp.ne.s32.totalorder %s118, %s132
    %p134 = scmp.eq.s32.totalorder %s33, 0
    %p135 = por %p133, %p134
    %s137 = sadd.s32 %s136, 1
    %p140 = scmp.eq.s32.totalorder %s27, 3
    %p141 = scmp.ne.s32.totalorder %s136, %s138
    %p142 = scmp.eq.s32.totalorder %s27, 0
    %p143 = por %p141, %p142
    %p144 = scmp.ne.s32.totalorder %s136, %s138
    %p145 = scmp.eq.s32.totalorder %s32, 3
    %p146 = por %p144, %p145
    %p147 = scmp.ne.s32.totalorder %s138, %s139
    %p148 = scmp.eq.s32.totalorder %s32, 0
    %p149 = por %p147, %p148
    %p150 = scmp.ne.s32.totalorder %s138, %s139
    %p151 = scmp.eq.s32.totalorder %s33, 3
    %p152 = por %p150, %p151
    %p154 = scmp.ne.s32.totalorder %s139, %s153
    %p155 = scmp.eq.s32.totalorder %s33, 0
    %p156 = por %p154, %p155
    %s157 = ssub.s32 %s35, %s42
    %p158 = scmp.eq.s32.totalorder %s157, 0
    %s160 = sadd.s32 %s159, 1
    %s161 = scalar_select %p158, %s159, %s160
    %p164 = pneg %p158
    %p165 = scmp.eq.s32.totalorder %s27, 3
    %p166 = por %p164, %p165
    %p167 = scmp.ne.s32.totalorder %s159, %s162
    %p168 = scmp.eq.s32.totalorder %s27, 0
    %p169 = por %p167, %p168
    %p170 = scmp.ne.s32.totalorder %s159, %s162
    %p171 = scmp.eq.s32.totalorder %s32, 3
    %p172 = por %p170, %p171
    %p173 = scmp.ne.s32.totalorder %s162, %s163
    %p174 = scmp.eq.s32.totalorder %s32, 0
    %p175 = por %p173, %p174
    %p176 = scmp.ne.s32.totalorder %s162, %s163
    %p177 = scmp.eq.s32.totalorder %s33, 3
    %p178 = por %p176, %p177
    %p180 = scmp.ne.s32.totalorder %s163, %s179
    %p181 = scmp.eq.s32.totalorder %s33, 0
    %p182 = por %p180, %p181
    %s183 = ssub.s32 %s35, %s42
    %p184 = scmp.eq.s32.totalorder %s183, 0
    %s186 = sadd.s32 %s185, 1
    %s187 = scalar_select %p184, %s185, %s186
    %p190 = pneg %p184
    %p191 = scmp.eq.s32.totalorder %s27, 3
    %p192 = por %p190, %p191
    %p193 = scmp.ne.s32.totalorder %s185, %s188
    %p194 = scmp.eq.s32.totalorder %s27, 0
    %p195 = por %p193, %p194
    %p196 = scmp.ne.s32.totalorder %s185, %s188
    %p197 = scmp.eq.s32.totalorder %s32, 3
    %p198 = por %p196, %p197
    %p199 = scmp.ne.s32.totalorder %s188, %s189
    %p200 = scmp.eq.s32.totalorder %s32, 0
    %p201 = por %p199, %p200
    %p202 = scmp.ne.s32.totalorder %s188, %s189
    %p203 = scmp.eq.s32.totalorder %s33, 3
    %p204 = por %p202, %p203
    %p206 = scmp.ne.s32.totalorder %s189, %s205
    %p207 = scmp.eq.s32.totalorder %s33, 0
    %p208 = por %p206, %p207
    %s209 = ssub.s32 %s35, %s42
    %p210 = scmp.eq.s32.totalorder %s209, 0
    %s212 = sadd.s32 %s211, 1
    %s213 = scalar_select %p210, %s211, %s212
    %p216 = pneg %p210
    %p217 = scmp.eq.s32.totalorder %s27, 3
    %p218 = por %p216, %p217
    %p219 = scmp.ne.s32.totalorder %s211, %s214
    %p220 = scmp.eq.s32.totalorder %s27, 0
    %p221 = por %p219, %p220
    %p222 = scmp.ne.s32.totalorder %s211, %s214
    %p223 = scmp.eq.s32.totalorder %s32, 3
    %p224 = por %p222, %p223
    %p225 = scmp.ne.s32.totalorder %s214, %s215
    %p226 = scmp.eq.s32.totalorder %s32, 0
    %p227 = por %p225, %p226
    %p228 = scmp.ne.s32.totalorder %s214, %s215
    %p229 = scmp.eq.s32.totalorder %s33, 3
    %p230 = por %p228, %p229
    %p232 = scmp.ne.s32.totalorder %s215, %s231
    %p233 = scmp.eq.s32.totalorder %s33, 0
    %p234 = por %p232, %p233
    %s235 = ssub.s32 %s35, %s42
    %p236 = scmp.eq.s32.totalorder %s235, 0
    %s238 = sadd.s32 %s237, 1
    %s239 = scalar_select %p236, %s237, %s238
    %p242 = pneg %p236
    %p243 = scmp.eq.s32.totalorder %s27, 3
    %p244 = por %p242, %p243
    %p245 = scmp.ne.s32.totalorder %s237, %s240
    %p246 = scmp.eq.s32.totalorder %s27, 0
    %p247 = por %p245, %p246
    %p248 = scmp.ne.s32.totalorder %s237, %s240
    %p249 = scmp.eq.s32.totalorder %s32, 3
    %p250 = por %p248, %p249
    %p251 = scmp.ne.s32.totalorder %s240, %s241
    %p252 = scmp.eq.s32.totalorder %s32, 0
    %p253 = por %p251, %p252
    %p254 = scmp.ne.s32.totalorder %s240, %s241
    %p255 = scmp.eq.s32.totalorder %s33, 3
    %p256 = por %p254, %p255
    %p258 = scmp.ne.s32.totalorder %s241, %s257
    %p259 = scmp.eq.s32.totalorder %s33, 0
    %p260 = por %p258, %p259
    %s261 = ssub.s32 %s35, %s42
    %p262 = scmp.eq.s32.totalorder %s261, 0
    %s264 = sadd.s32 %s263, 1
    %s265 = scalar_select %p262, %s263, %s264
    %p268 = pneg %p262
    %p269 = scmp.eq.s32.totalorder %s27, 3
    %p270 = por %p268, %p269
    %p271 = scmp.ne.s32.totalorder %s263, %s266
    %p272 = scmp.eq.s32.totalorder %s27, 0
    %p273 = por %p271, %p272
    %p274 = scmp.ne.s32.totalorder %s263, %s266
    %p275 = scmp.eq.s32.totalorder %s32, 3
    %p276 = por %p274, %p275
    %p277 = scmp.ne.s32.totalorder %s266, %s267
    %p278 = scmp.eq.s32.totalorder %s32, 0
    %p279 = por %p277, %p278
    %p280 = scmp.ne.s32.totalorder %s266, %s267
    %p281 = scmp.eq.s32.totalorder %s33, 3
    %p282 = por %p280, %p281
    %p284 = scmp.ne.s32.totalorder %s267, %s283
    %p285 = scmp.eq.s32.totalorder %s33, 0
    %p286 = por %p284, %p285
    %s287 = ssub.s32 %s35, %s42
    %p288 = scmp.eq.s32.totalorder %s287, 0
    %s290 = sadd.s32 %s289, 1
    %s291 = scalar_select %p288, %s289, %s290
    %p294 = pneg %p288
    %p295 = scmp.eq.s32.totalorder %s27, 3
    %p296 = por %p294, %p295
    %p297 = scmp.ne.s32.totalorder %s289, %s292
    %p298 = scmp.eq.s32.totalorder %s27, 0
    %p299 = por %p297, %p298
    %p300 = scmp.ne.s32.totalorder %s289, %s292
    %p301 = scmp.eq.s32.totalorder %s32, 3
    %p302 = por %p300, %p301
    %p303 = scmp.ne.s32.totalorder %s292, %s293
    %p304 = scmp.eq.s32.totalorder %s32, 0
    %p305 = por %p303, %p304
    %p306 = scmp.ne.s32.totalorder %s292, %s293
    %p307 = scmp.eq.s32.totalorder %s33, 3
    %p308 = por %p306, %p307
    %p310 = scmp.ne.s32.totalorder %s293, %s309
    %p311 = scmp.eq.s32.totalorder %s33, 0
    %p312 = por %p310, %p311
    %s313 = ssub.s32 %s35, %s42
    %p314 = scmp.eq.s32.totalorder %s313, 0
    %s316 = sadd.s32 %s315, 1
    %s317 = scalar_select %p314, %s315, %s316
    %p320 = pneg %p314
    %p321 = scmp.eq.s32.totalorder %s27, 3
    %p322 = por %p320, %p321
    %p323 = scmp.ne.s32.totalorder %s315, %s318
    %p324 = scmp.eq.s32.totalorder %s27, 0
    %p325 = por %p323, %p324
    %p326 = scmp.ne.s32.totalorder %s315, %s318
    %p327 = scmp.eq.s32.totalorder %s32, 3
    %p328 = por %p326, %p327
    %p329 = scmp.ne.s32.totalorder %s318, %s319
    %p330 = scmp.eq.s32.totalorder %s32, 0
    %p331 = por %p329, %p330
    %p332 = scmp.ne.s32.totalorder %s318, %s319
    %p333 = scmp.eq.s32.totalorder %s33, 3
    %p334 = por %p332, %p333
    %p336 = scmp.ne.s32.totalorder %s319, %s335
    %p337 = scmp.eq.s32.totalorder %s33, 0
    %p338 = por %p336, %p337
    %s339 = ssub.s32 %s35, %s42
    %p340 = scmp.eq.s32.totalorder %s339, 0
    %s342 = sadd.s32 %s341, 1
    %s343 = scalar_select %p340, %s341, %s342
    %p346 = pneg %p340
    %p347 = scmp.eq.s32.totalorder %s27, 3
    %p348 = por %p346, %p347
    %p349 = scmp.ne.s32.totalorder %s341, %s344
    %p350 = scmp.eq.s32.totalorder %s27, 0
    %p351 = por %p349, %p350
    %p352 = scmp.ne.s32.totalorder %s341, %s344
    %p353 = scmp.eq.s32.totalorder %s32, 3
    %p354 = por %p352, %p353
    %p355 = scmp.ne.s32.totalorder %s344, %s345
    %p356 = scmp.eq.s32.totalorder %s32, 0
    %p357 = por %p355, %p356
    %p358 = scmp.ne.s32.totalorder %s344, %s345
    %p359 = scmp.eq.s32.totalorder %s33, 3
    %p360 = por %p358, %p359
    %p362 = scmp.ne.s32.totalorder %s345, %s361
    %p363 = scmp.eq.s32.totalorder %s33, 0
    %p364 = por %p362, %p363
    %s365 = ssub.s32 %s35, %s42
    %p366 = scmp.eq.s32.totalorder %s365, 0
    %s368 = sadd.s32 %s367, 1
    %s369 = scalar_select %p366, %s367, %s368
    %p372 = pneg %p366
    %p373 = scmp.eq.s32.totalorder %s27, 3
    %p374 = por %p372, %p373
    %p375 = scmp.ne.s32.totalorder %s367, %s370
    %p376 = scmp.eq.s32.totalorder %s27, 0
    %p377 = por %p375, %p376
    %p378 = scmp.ne.s32.totalorder %s367, %s370
    %p379 = scmp.eq.s32.totalorder %s32, 3
    %p380 = por %p378, %p379
    %p381 = scmp.ne.s32.totalorder %s370, %s371
    %p382 = scmp.eq.s32.totalorder %s32, 0
    %p383 = por %p381, %p382
    %p384 = scmp.ne.s32.totalorder %s370, %s371
    %p385 = scmp.eq.s32.totalorder %s33, 3
    %p386 = por %p384, %p385
    %p388 = scmp.ne.s32.totalorder %s371, %s387
    %p389 = scmp.eq.s32.totalorder %s33, 0
    %p390 = por %p388, %p389
    %s391 = ssub.s32 %s35, %s42
    %p392 = scmp.eq.s32.totalorder %s391, 0
    %s394 = sadd.s32 %s393, 1
    %s395 = scalar_select %p392, %s393, %s394
    %p398 = pneg %p392
    %p399 = scmp.eq.s32.totalorder %s27, 3
    %p400 = por %p398, %p399
    %p401 = scmp.ne.s32.totalorder %s393, %s396
    %p402 = scmp.eq.s32.totalorder %s27, 0
    %p403 = por %p401, %p402
    %p404 = scmp.ne.s32.totalorder %s393, %s396
    %p405 = scmp.eq.s32.totalorder %s32, 3
    %p406 = por %p404, %p405
    %p407 = scmp.ne.s32.totalorder %s396, %s397
    %p408 = scmp.eq.s32.totalorder %s32, 0
    %p409 = por %p407, %p408
    %p410 = scmp.ne.s32.totalorder %s396, %s397
    %p411 = scmp.eq.s32.totalorder %s33, 3
    %p412 = por %p410, %p411
    %p414 = scmp.ne.s32.totalorder %s397, %s413
    %p415 = scmp.eq.s32.totalorder %s33, 0
    %p416 = por %p414, %p415
    %s417 = ssub.s32 %s35, %s42
    %p418 = scmp.eq.s32.totalorder %s417, 0
    %s420 = sadd.s32 %s419, 1
    %s421 = scalar_select %p418, %s419, %s420
    %p424 = pneg %p418
    %p425 = scmp.eq.s32.totalorder %s27, 3
    %p426 = por %p424, %p425
    %p427 = scmp.ne.s32.totalorder %s419, %s422
    %p428 = scmp.eq.s32.totalorder %s27, 0
    %p429 = por %p427, %p428
    %p430 = scmp.ne.s32.totalorder %s419, %s422
    %p431 = scmp.eq.s32.totalorder %s32, 3
    %p432 = por %p430, %p431
    %p433 = scmp.ne.s32.totalorder %s422, %s423
    %p434 = scmp.eq.s32.totalorder %s32, 0
    %p435 = por %p433, %p434
    %p436 = scmp.ne.s32.totalorder %s422, %s423
    %p437 = scmp.eq.s32.totalorder %s33, 3
    %p438 = por %p436, %p437
    %p440 = scmp.ne.s32.totalorder %s423, %s439
    %p441 = scmp.eq.s32.totalorder %s33, 0
    %p442 = por %p440, %p441
    %s443 = ssub.s32 %s35, %s42
    %p444 = scmp.eq.s32.totalorder %s443, 0
    %s446 = sadd.s32 %s445, 1
    %s447 = scalar_select %p444, %s445, %s446
    %p450 = pneg %p444
    %p451 = scmp.eq.s32.totalorder %s27, 3
    %p452 = por %p450, %p451
    %p453 = scmp.ne.s32.totalorder %s445, %s448
    %p454 = scmp.eq.s32.totalorder %s27, 0
    %p455 = por %p453, %p454
    %p456 = scmp.ne.s32.totalorder %s445, %s448
    %p457 = scmp.eq.s32.totalorder %s32, 3
    %p458 = por %p456, %p457
    %p459 = scmp.ne.s32.totalorder %s448, %s449
    %p460 = scmp.eq.s32.totalorder %s32, 0
    %p461 = por %p459, %p460
    %p462 = scmp.ne.s32.totalorder %s448, %s449
    %p463 = scmp.eq.s32.totalorder %s33, 3
    %p464 = por %p462, %p463
    %p466 = scmp.ne.s32.totalorder %s449, %s465
    %p467 = scmp.eq.s32.totalorder %s33, 0
    %p468 = por %p466, %p467
    %s470 = sadd.s32 %s469, 1
    %p473 = scmp.eq.s32.totalorder %s27, 3
    %p474 = scmp.ne.s32.totalorder %s469, %s471
    %p475 = scmp.eq.s32.totalorder %s27, 0
    %p476 = por %p474, %p475
    %p477 = scmp.ne.s32.totalorder %s469, %s471
    %p478 = scmp.eq.s32.totalorder %s32, 3
    %p479 = por %p477, %p478
    %p480 = scmp.ne.s32.totalorder %s471, %s472
    %p481 = scmp.eq.s32.totalorder %s32, 0
    %p482 = por %p480, %p481
    %p483 = scmp.ne.s32.totalorder %s471, %s472
    %p484 = scmp.eq.s32.totalorder %s33, 3
    %p485 = por %p483, %p484
    %p487 = scmp.ne.s32.totalorder %s472, %s486
    %p488 = scmp.eq.s32.totalorder %s33, 0
    %p489 = por %p487, %p488
    %s491 = sadd.s32 %s490, 1
    %p494 = scmp.eq.s32.totalorder %s27, 3
    %p495 = scmp.ne.s32.totalorder %s490, %s492
    %p496 = scmp.eq.s32.totalorder %s27, 0
    %p497 = por %p495, %p496
    %p498 = scmp.ne.s32.totalorder %s490, %s492
    %p499 = scmp.eq.s32.totalorder %s32, 3
    %p500 = por %p498, %p499
    %p501 = scmp.ne.s32.totalorder %s492, %s493
    %p502 = scmp.eq.s32.totalorder %s32, 0
    %p503 = por %p501, %p502
    %p504 = scmp.ne.s32.totalorder %s492, %s493
    %p505 = scmp.eq.s32.totalorder %s33, 3
    %p506 = por %p504, %p505
    %p508 = scmp.ne.s32.totalorder %s493, %s507
    %p509 = scmp.eq.s32.totalorder %s33, 0
    %p510 = por %p508, %p509
    %s512 = sadd.s32 %s511, 1
    %p515 = scmp.eq.s32.totalorder %s27, 3
    %p516 = scmp.ne.s32.totalorder %s511, %s513
    %p517 = scmp.eq.s32.totalorder %s27, 0
    %p518 = por %p516, %p517
    %p519 = scmp.ne.s32.totalorder %s511, %s513
    %p520 = scmp.eq.s32.totalorder %s32, 3
    %p521 = por %p519, %p520
    %p522 = scmp.ne.s32.totalorder %s513, %s514
    %p523 = scmp.eq.s32.totalorder %s32, 0
    %p524 = por %p522, %p523
    %p525 = scmp.ne.s32.totalorder %s513, %s514
    %p526 = scmp.eq.s32.totalorder %s33, 3
    %p527 = por %p525, %p526
    %p529 = scmp.ne.s32.totalorder %s514, %s528
    %p530 = scmp.eq.s32.totalorder %s33, 0
    %p531 = por %p529, %p530
    %s533 = sadd.s32 %s532, 1
    %p536 = scmp.eq.s32.totalorder %s27, 3
    %p537 = scmp.ne.s32.totalorder %s532, %s534
    %p538 = scmp.eq.s32.totalorder %s27, 0
    %p539 = por %p537, %p538
    %p540 = scmp.ne.s32.totalorder %s532, %s534
    %p541 = scmp.eq.s32.totalorder %s32, 3
    %p542 = por %p540, %p541
    %p543 = scmp.ne.s32.totalorder %s534, %s535
    %p544 = scmp.eq.s32.totalorder %s32, 0
    %p545 = por %p543, %p544
    %p546 = scmp.ne.s32.totalorder %s534, %s535
    %p547 = scmp.eq.s32.totalorder %s33, 3
    %p548 = por %p546, %p547
    %p550 = scmp.ne.s32.totalorder %s535, %s549
    %p551 = scmp.eq.s32.totalorder %s33, 0
    %p552 = por %p550, %p551
    %s553 = ssub.s32 %s34, %s46
    %p554 = scmp.eq.s32.totalorder %s553, 0
    %s556 = sadd.s32 %s555, 1
    %s557 = scalar_select %p554, %s555, %s556
    %p560 = pneg %p554
    %p561 = scmp.eq.s32.totalorder %s27, 3
    %p562 = por %p560, %p561
    %p563 = scmp.ne.s32.totalorder %s555, %s558
    %p564 = scmp.eq.s32.totalorder %s27, 0
    %p565 = por %p563, %p564
    %p566 = scmp.ne.s32.totalorder %s555, %s558
    %p567 = scmp.eq.s32.totalorder %s32, 3
    %p568 = por %p566, %p567
    %p569 = scmp.ne.s32.totalorder %s558, %s559
    %p570 = scmp.eq.s32.totalorder %s32, 0
    %p571 = por %p569, %p570
    %p572 = scmp.ne.s32.totalorder %s558, %s559
    %p573 = scmp.eq.s32.totalorder %s33, 3
    %p574 = por %p572, %p573
    %p576 = scmp.ne.s32.totalorder %s559, %s575
    %p577 = scmp.eq.s32.totalorder %s33, 0
    %p578 = por %p576, %p577
    %p579 = scmp.le.s32.totalorder 1, %s27
    %p580 = scmp.lt.s32.totalorder %s27, 5
    %p581 = pnand %p579, %p580
    %p582 = pneg %p581
    // Predicated region
    $region9: #{vit_forward.1} parent=5 // pred_check
      _
    $region10: #{vit_forward.1} parent=5 // pred_check_branch
      %584 = sbr.rel (%p581) target = $region12
    $region11: #{vit_forward.1} parent=5 // pred_region
      %s585 = ssub.s32 %s27, 1
      // Predicated region
      $region13: #{vit_forward.1} parent=11 // pred_check
        %p586 = pneg %p86
      $region14: #{vit_forward.1} parent=11 // pred_check_branch
        %588 = sbr.rel (%p586) target = $region16
      $region15: #{vit_forward.1} parent=11 // pred_region
        _
      $region16: #{vit_forward.1} parent=11 // pred_fallthru
        _
      // Predicated region
      $region17: #{vit_forward.1} parent=11 // pred_check
        %p589 = pneg %p107
      $region18: #{vit_forward.1} parent=11 // pred_check_branch
        %591 = sbr.rel (%p589) target = $region20
      $region19: #{vit_forward.1} parent=11 // pred_region
        _
      $region20: #{vit_forward.1} parent=11 // pred_fallthru
        _
      // Predicated region
      $region21: #{vit_forward.1} parent=11 // pred_check
        %p592 = pneg %p128
      $region22: #{vit_forward.1} parent=11 // pred_check_branch
        %594 = sbr.rel (%p592) target = $region24
      $region23: #{vit_forward.1} parent=11 // pred_region
        _
      $region24: #{vit_forward.1} parent=11 // pred_fallthru
        _
      // Predicated region
      $region25: #{vit_forward.1} parent=11 // pred_check
        %p595 = pneg %p149
      $region26: #{vit_forward.1} parent=11 // pred_check_branch
        %597 = sbr.rel (%p595) target = $region28
      $region27: #{vit_forward.1} parent=11 // pred_region
        _
      $region28: #{vit_forward.1} parent=11 // pred_fallthru
        _
      // Predicated region
      $region29: #{vit_forward.1} parent=11 // pred_check
        %p598 = pneg %p482
      $region30: #{vit_forward.1} parent=11 // pred_check_branch
        %600 = sbr.rel (%p598) target = $region32
      $region31: #{vit_forward.1} parent=11 // pred_region
        _
      $region32: #{vit_forward.1} parent=11 // pred_fallthru
        _
      // Predicated region
      $region33: #{vit_forward.1} parent=11 // pred_check
        %p601 = pneg %p503
      $region34: #{vit_forward.1} parent=11 // pred_check_branch
        %603 = sbr.rel (%p601) target = $region36
      $region35: #{vit_forward.1} parent=11 // pred_region
        _
      $region36: #{vit_forward.1} parent=11 // pred_fallthru
        _
      // Predicated region
      $region37: #{vit_forward.1} parent=11 // pred_check
        %p604 = pneg %p524
      $region38: #{vit_forward.1} parent=11 // pred_check_branch
        %606 = sbr.rel (%p604) target = $region40
      $region39: #{vit_forward.1} parent=11 // pred_region
        _
      $region40: #{vit_forward.1} parent=11 // pred_fallthru
        _
      // Predicated region
      $region41: #{vit_forward.1} parent=11 // pred_check
        %p607 = pneg %p545
      $region42: #{vit_forward.1} parent=11 // pred_check_branch
        %609 = sbr.rel (%p607) target = $region44
      $region43: #{vit_forward.1} parent=11 // pred_region
        _
      $region44: #{vit_forward.1} parent=11 // pred_fallthru
        _
    $region12: #{vit_forward.1} parent=5 // pred_fallthru
      _
    %p610 = scmp.lt.s32.totalorder %s27, 4
    // Predicated region
    $region45: #{vit_forward.1} parent=5 // pred_check
      %p611 = pneg %p610
    $region46: #{vit_forward.1} parent=5 // pred_check_branch
      %613 = sbr.rel (%p611) target = $region48
    $region47: #{vit_forward.1} parent=5 // pred_region
      // Predicated region
      $region49: #{vit_forward.1} parent=47 // pred_check
        %p614 = pneg %p59
      $region50: #{vit_forward.1} parent=47 // pred_check_branch
        %616 = sbr.rel (%p614) target = $region52
      $region51: #{vit_forward.1} parent=47 // pred_region
        %s617 = smul.u32 2, %s34
        %p618 = scmp.lt.s32.totalorder %s617, 3
        %s619 = scalar_select %p618, %s617, 3
        %s620 = smul.addr %s619, 6
        %s621 = smul.addr %s620, 4
        %s622 = scalar_lea.vmem %s0, %s621
        %s623 = smul.u32 2, %s34
      $region52: #{vit_forward.1} parent=47 // pred_fallthru
        _
      // Predicated region
      $region53: #{vit_forward.1} parent=47 // pred_check
        %p624 = pneg %p169
      $region54: #{vit_forward.1} parent=47 // pred_check_branch
        %626 = sbr.rel (%p624) target = $region56
      $region55: #{vit_forward.1} parent=47 // pred_region
        %p627 = scmp.lt.s32.totalorder %s35, 1
        %s628 = scalar_select %p627, %s35, 1
        %s629 = scalar_lea.vmem %s5, %s628
      $region56: #{vit_forward.1} parent=47 // pred_fallthru
        _
      // Predicated region
      $region57: #{vit_forward.1} parent=47 // pred_check
        %p630 = pneg %p195
      $region58: #{vit_forward.1} parent=47 // pred_check_branch
        %632 = sbr.rel (%p630) target = $region60
      $region59: #{vit_forward.1} parent=47 // pred_region
        %p633 = scmp.lt.s32.totalorder %s35, 1
        %s634 = scalar_select %p633, %s35, 1
        %s635 = scalar_lea.vmem %s6, %s634
      $region60: #{vit_forward.1} parent=47 // pred_fallthru
        _
      // Predicated region
      $region61: #{vit_forward.1} parent=47 // pred_check
        %p636 = pneg %p221
      $region62: #{vit_forward.1} parent=47 // pred_check_branch
        %638 = sbr.rel (%p636) target = $region64
      $region63: #{vit_forward.1} parent=47 // pred_region
        %p639 = scmp.lt.s32.totalorder %s35, 1
        %s640 = scalar_select %p639, %s35, 1
        %s641 = smul.addr %s640, 48
        %s642 = smul.addr %s641, 4
        %s643 = scalar_lea.vmem %s7, %s642
      $region64: #{vit_forward.1} parent=47 // pred_fallthru
        _
      // Predicated region
      $region65: #{vit_forward.1} parent=47 // pred_check
        %p644 = pneg %p247
      $region66: #{vit_forward.1} parent=47 // pred_check_branch
        %646 = sbr.rel (%p644) target = $region68
      $region67: #{vit_forward.1} parent=47 // pred_region
        %p647 = scmp.lt.s32.totalorder %s35, 1
        %s648 = scalar_select %p647, %s35, 1
        %s649 = smul.addr %s648, 3
        %s650 = scalar_lea.vmem %s8, %s649
      $region68: #{vit_forward.1} parent=47 // pred_fallthru
        _
      // Predicated region
      $region69: #{vit_forward.1} parent=47 // pred_check
        %p651 = pneg %p273
      $region70: #{vit_forward.1} parent=47 // pred_check_branch
        %653 = sbr.rel (%p651) target = $region72
      $region71: #{vit_forward.1} parent=47 // pred_region
        %p654 = scmp.lt.s32.totalorder %s35, 1
        %s655 = scalar_select %p654, %s35, 1
        %s656 = smul.addr %s655, 16
        %s657 = smul.addr %s656, 4
        %s658 = scalar_lea.vmem %s9, %s657
      $region72: #{vit_forward.1} parent=47 // pred_fallthru
        _
      // Predicated region
      $region73: #{vit_forward.1} parent=47 // pred_check
        %p659 = pneg %p299
      $region74: #{vit_forward.1} parent=47 // pred_check_branch
        %661 = sbr.rel (%p659) target = $region76
      $region75: #{vit_forward.1} parent=47 // pred_region
        %p662 = scmp.lt.s32.totalorder %s35, 1
        %s663 = scalar_select %p662, %s35, 1
        %s664 = scalar_lea.vmem %s10, %s663
      $region76: #{vit_forward.1} parent=47 // pred_fallthru
        _
      // Predicated region
      $region77: #{vit_forward.1} parent=47 // pred_check
        %p665 = pneg %p325
      $region78: #{vit_forward.1} parent=47 // pred_check_branch
        %667 = sbr.rel (%p665) target = $region80
      $region79: #{vit_forward.1} parent=47 // pred_region
        %p668 = scmp.lt.s32.totalorder %s35, 1
        %s669 = scalar_select %p668, %s35, 1
        %s670 = scalar_lea.vmem %s11, %s669
      $region80: #{vit_forward.1} parent=47 // pred_fallthru
        _
      // Predicated region
      $region81: #{vit_forward.1} parent=47 // pred_check
        %p671 = pneg %p351
      $region82: #{vit_forward.1} parent=47 // pred_check_branch
        %673 = sbr.rel (%p671) target = $region84
      $region83: #{vit_forward.1} parent=47 // pred_region
        %p674 = scmp.lt.s32.totalorder %s35, 1
        %s675 = scalar_select %p674, %s35, 1
        %s676 = scalar_lea.vmem %s12, %s675
      $region84: #{vit_forward.1} parent=47 // pred_fallthru
        _
      // Predicated region
      $region85: #{vit_forward.1} parent=47 // pred_check
        %p677 = pneg %p377
      $region86: #{vit_forward.1} parent=47 // pred_check_branch
        %679 = sbr.rel (%p677) target = $region88
      $region87: #{vit_forward.1} parent=47 // pred_region
        %p680 = scmp.lt.s32.totalorder %s35, 1
        %s681 = scalar_select %p680, %s35, 1
        %s682 = smul.addr %s681, 64
        %s683 = smul.addr %s682, 4
        %s684 = scalar_lea.vmem %s13, %s683
      $region88: #{vit_forward.1} parent=47 // pred_fallthru
        _
      // Predicated region
      $region89: #{vit_forward.1} parent=47 // pred_check
        %p685 = pneg %p403
      $region90: #{vit_forward.1} parent=47 // pred_check_branch
        %687 = sbr.rel (%p685) target = $region92
      $region91: #{vit_forward.1} parent=47 // pred_region
        %p688 = scmp.lt.s32.totalorder %s35, 1
        %s689 = scalar_select %p688, %s35, 1
        %s690 = smul.addr %s689, 4
        %s691 = scalar_lea.vmem %s14, %s690
      $region92: #{vit_forward.1} parent=47 // pred_fallthru
        _
      // Predicated region
      $region93: #{vit_forward.1} parent=47 // pred_check
        %p692 = pneg %p429
      $region94: #{vit_forward.1} parent=47 // pred_check_branch
        %694 = sbr.rel (%p692) target = $region96
      $region95: #{vit_forward.1} parent=47 // pred_region
        %p695 = scmp.lt.s32.totalorder %s35, 1
        %s696 = scalar_select %p695, %s35, 1
        %s697 = smul.addr %s696, 64
        %s698 = smul.addr %s697, 4
        %s699 = scalar_lea.vmem %s15, %s698
      $region96: #{vit_forward.1} parent=47 // pred_fallthru
        _
      // Predicated region
      $region97: #{vit_forward.1} parent=47 // pred_check
        %p700 = pneg %p455
      $region98: #{vit_forward.1} parent=47 // pred_check_branch
        %702 = sbr.rel (%p700) target = $region100
      $region99: #{vit_forward.1} parent=47 // pred_region
        %p703 = scmp.lt.s32.totalorder %s35, 1
        %s704 = scalar_select %p703, %s35, 1
        %s705 = scalar_lea.vmem %s16, %s704
      $region100: #{vit_forward.1} parent=47 // pred_fallthru
        _
    $region48: #{vit_forward.1} parent=5 // pred_fallthru
      _
    %p706 = scmp.le.s32.totalorder 1, %s27
    %p707 = scmp.lt.s32.totalorder %s27, 5
    %p708 = pnand %p706, %p707
    %p709 = pneg %p708
    // Predicated region
    $region101: #{vit_forward.1} parent=5 // pred_check
      _
    $region102: #{vit_forward.1} parent=5 // pred_check_branch
      %711 = sbr.rel (%p708) target = $region104
    $region103: #{vit_forward.1} parent=5 // pred_region
      %s712 = ssub.s32 %s27, 1
      %s713 = smul.u32 2, %s36
      %p714 = scmp.lt.s32.totalorder %s713, 3
      %s715 = scalar_select %p714, %s713, 3
      %s716 = smul.addr %s715, 6
      %s717 = smul.addr %s716, 4
      %s718 = scalar_lea.vmem %s0, %s717
      %p719 = pneg %p65
      %p720 = pneg %p62
      %p721 = pneg %p86
      %p722 = pneg %p83
      %p723 = pneg %p107
      %p724 = pneg %p104
      %p725 = pneg %p128
      %p726 = pneg %p125
      %p727 = pneg %p149
      %p728 = pneg %p146
      %p729 = scmp.lt.s32.totalorder %s37, 1
      %s730 = scalar_select %p729, %s37, 1
      %s731 = scalar_lea.vmem %s5, %s730
      %p732 = pneg %p175
      %p733 = pneg %p172
      %p734 = scmp.lt.s32.totalorder %s37, 1
      %s735 = scalar_select %p734, %s37, 1
      %s736 = scalar_lea.vmem %s6, %s735
      %p737 = pneg %p201
      %p738 = pneg %p198
      %p739 = scmp.lt.s32.totalorder %s37, 1
      %s740 = scalar_select %p739, %s37, 1
      %s741 = smul.addr %s740, 48
      %s742 = smul.addr %s741, 4
      %s743 = scalar_lea.vmem %s7, %s742
      %p744 = pneg %p227
      %p745 = pneg %p224
      %p746 = scmp.lt.s32.totalorder %s37, 1
      %s747 = scalar_select %p746, %s37, 1
      %s748 = smul.addr %s747, 3
      %s749 = scalar_lea.vmem %s8, %s748
      %p750 = pneg %p253
      %p751 = pneg %p250
      %p752 = scmp.lt.s32.totalorder %s37, 1
      %s753 = scalar_select %p752, %s37, 1
      %s754 = smul.addr %s753, 16
      %s755 = smul.addr %s754, 4
      %s756 = scalar_lea.vmem %s9, %s755
      %p757 = pneg %p279
      %p758 = pneg %p276
      %p759 = scmp.lt.s32.totalorder %s37, 1
      %s760 = scalar_select %p759, %s37, 1
      %s761 = scalar_lea.vmem %s10, %s760
      %p762 = pneg %p305
      %p763 = pneg %p302
      %p764 = scmp.lt.s32.totalorder %s37, 1
      %s765 = scalar_select %p764, %s37, 1
      %s766 = scalar_lea.vmem %s11, %s765
      %p767 = pneg %p331
      %p768 = pneg %p328
      %p769 = scmp.lt.s32.totalorder %s37, 1
      %s770 = scalar_select %p769, %s37, 1
      %s771 = scalar_lea.vmem %s12, %s770
      %p772 = pneg %p357
      %p773 = pneg %p354
      %p774 = scmp.lt.s32.totalorder %s37, 1
      %s775 = scalar_select %p774, %s37, 1
      %s776 = smul.addr %s775, 64
      %s777 = smul.addr %s776, 4
      %s778 = scalar_lea.vmem %s13, %s777
      %p779 = pneg %p383
      %p780 = pneg %p380
      %p781 = scmp.lt.s32.totalorder %s37, 1
      %s782 = scalar_select %p781, %s37, 1
      %s783 = smul.addr %s782, 4
      %s784 = scalar_lea.vmem %s14, %s783
      %p785 = pneg %p409
      %p786 = pneg %p406
      %p787 = scmp.lt.s32.totalorder %s37, 1
      %s788 = scalar_select %p787, %s37, 1
      %s789 = smul.addr %s788, 64
      %s790 = smul.addr %s789, 4
      %s791 = scalar_lea.vmem %s15, %s790
      %p792 = pneg %p435
      %p793 = pneg %p432
      %p794 = scmp.lt.s32.totalorder %s37, 1
      %s795 = scalar_select %p794, %s37, 1
      %s796 = scalar_lea.vmem %s16, %s795
      %p797 = pneg %p461
      %p798 = pneg %p458
      %p799 = pneg %p482
      %p800 = pneg %p479
      %p801 = pneg %p503
      %p802 = pneg %p500
      %p803 = pneg %p524
      %p804 = pneg %p521
      %p805 = pneg %p545
      %p806 = pneg %p542
      %p807 = pneg %p571
      %p808 = pneg %p568
      %s809 = smul.u32 2, %s36
      %p810 = scmp.lt.s32.totalorder %s809, 3
      %s811 = scalar_select %p810, %s809, 3
      %s812 = smul.addr %s811, 8
      %s813 = scalar_lea.vmem %s21, %s812
      %s814 = smul.u32 2, %s36
      %p815 = scmp.lt.s32.totalorder %s814, 3
      %s816 = scalar_select %p815, %s814, 3
      %s817 = smul.addr %s816, 6
      %s818 = smul.addr %s817, 4
      %s819 = scalar_lea.vmem %s0, %s818
      %s820 = smul.u32 2, %s36
      %p821 = scmp.lt.s32.totalorder %s37, 1
      %s822 = scalar_select %p821, %s37, 1
      %s823 = scalar_lea.vmem %s5, %s822
      %p824 = scmp.lt.s32.totalorder %s37, 1
      %s825 = scalar_select %p824, %s37, 1
      %s826 = scalar_lea.vmem %s6, %s825
      %p827 = scmp.lt.s32.totalorder %s37, 1
      %s828 = scalar_select %p827, %s37, 1
      %s829 = smul.addr %s828, 48
      %s830 = smul.addr %s829, 4
      %s831 = scalar_lea.vmem %s7, %s830
      %p832 = scmp.lt.s32.totalorder %s37, 1
      %s833 = scalar_select %p832, %s37, 1
      %s834 = smul.addr %s833, 3
      %s835 = scalar_lea.vmem %s8, %s834
      %p836 = scmp.lt.s32.totalorder %s37, 1
      %s837 = scalar_select %p836, %s37, 1
      %s838 = smul.addr %s837, 16
      %s839 = smul.addr %s838, 4
      %s840 = scalar_lea.vmem %s9, %s839
      %p841 = scmp.lt.s32.totalorder %s37, 1
      %s842 = scalar_select %p841, %s37, 1
      %s843 = scalar_lea.vmem %s10, %s842
      %p844 = scmp.lt.s32.totalorder %s37, 1
      %s845 = scalar_select %p844, %s37, 1
      %s846 = scalar_lea.vmem %s11, %s845
      %p847 = scmp.lt.s32.totalorder %s37, 1
      %s848 = scalar_select %p847, %s37, 1
      %s849 = scalar_lea.vmem %s12, %s848
      %p850 = scmp.lt.s32.totalorder %s37, 1
      %s851 = scalar_select %p850, %s37, 1
      %s852 = smul.addr %s851, 64
      %s853 = smul.addr %s852, 4
      %s854 = scalar_lea.vmem %s13, %s853
      %p855 = scmp.lt.s32.totalorder %s37, 1
      %s856 = scalar_select %p855, %s37, 1
      %s857 = smul.addr %s856, 4
      %s858 = scalar_lea.vmem %s14, %s857
      %p859 = scmp.lt.s32.totalorder %s37, 1
      %s860 = scalar_select %p859, %s37, 1
      %s861 = smul.addr %s860, 64
      %s862 = smul.addr %s861, 4
      %s863 = scalar_lea.vmem %s15, %s862
      %p864 = scmp.lt.s32.totalorder %s37, 1
      %s865 = scalar_select %p864, %s37, 1
      %s866 = scalar_lea.vmem %s16, %s865
      %s867 = smul.u32 2, %s36
      %p868 = scmp.lt.s32.totalorder %s867, 3
      %s869 = scalar_select %p868, %s867, 3
      %s870 = smul.addr %s869, 8
      %s871 = scalar_lea.vmem %s21, %s870
      %s872 = smul.u32 2, %s36
      %p874 = scmp.eq.s32.totalorder %s37, 0
      // Predicated region
      $region105: #{vit_forward.1} parent=103 // pred_check
        %p875 = pneg %p874
      $region106: #{vit_forward.1} parent=103 // pred_check_branch
        %877 = sbr.rel (%p875) target = $region108
      $region107: #{vit_forward.1} parent=103 // pred_region
        %v878 = vld [vmem:[%s819] sm:$0xff]
        %v879 = vld [vmem:[%s819 + $0x8] sm:$0xff]
        %v880 = vld [vmem:[%s819 + $0x10] sm:$0xff]
        %v881 = vld [vmem:[%s819 + $0x18] sm:$0xff]
        %v882 = vld [vmem:[%s819 + $0x20] sm:$0xff]
        %v883 = vld [vmem:[%s819 + $0x28] sm:$0xff]
        %v884 = vld [vmem:[%s1] sm:$0xf]
        %v885 = vld [vmem:[%s1 + $0x4] sm:$0xf]
        %v886 = vld [vmem:[%s1 + $0x8] sm:$0xf]
        %v887 = vld [vmem:[%s1 + $0xc] sm:$0xf]
        %v888 = vld [vmem:[%s1 + $0x10] sm:$0xf]
        %v889 = vld [vmem:[%s1 + $0x14] sm:$0xf]
        %v890 = vld [vmem:[%s1 + $0x18] sm:$0xf]
        %v891 = vld [vmem:[%s1 + $0x1c] sm:$0xf]
        %v892 = vld [vmem:[%s1 + $0x20] sm:$0xf]
        %v893 = vld [vmem:[%s1 + $0x24] sm:$0xf]
        %v894 = vld [vmem:[%s1 + $0x28] sm:$0xf]
        %v895 = vld [vmem:[%s1 + $0x2c] sm:$0xf]
        %v896 = vld [vmem:[%s1 + $0x30] sm:$0xf]
        %v897 = vld [vmem:[%s1 + $0x34] sm:$0xf]
        %v898 = vld [vmem:[%s1 + $0x38] sm:$0xf]
        %v899 = vld [vmem:[%s1 + $0x3c] sm:$0xf]
        %v900 = vld [vmem:[%s1 + $0x40] sm:$0xf]
        %v901 = vld [vmem:[%s1 + $0x44] sm:$0xf]
        %v902 = vld [vmem:[%s1 + $0x48] sm:$0xf]
        %v903 = vld [vmem:[%s1 + $0x4c] sm:$0xf]
        %v904 = vld [vmem:[%s1 + $0x50] sm:$0xf]
        %v905 = vld [vmem:[%s1 + $0x54] sm:$0xf]
        %v906 = vld [vmem:[%s1 + $0x58] sm:$0xf]
        %v907 = vld [vmem:[%s1 + $0x5c] sm:$0xf]
        %v908 = vld [vmem:[%s1 + $0x60] sm:$0xf]
        %v909 = vld [vmem:[%s1 + $0x64] sm:$0xf]
        %v910 = vld [vmem:[%s1 + $0x68] sm:$0xf]
        %v911 = vld [vmem:[%s1 + $0x6c] sm:$0xf]
        %v912 = vld [vmem:[%s1 + $0x70] sm:$0xf]
        %v913 = vld [vmem:[%s1 + $0x74] sm:$0xf]
        %v914 = vld [vmem:[%s1 + $0x78] sm:$0xf]
        %v915 = vld [vmem:[%s1 + $0x7c] sm:$0xf]
        %v916 = vld [vmem:[%s1 + $0x80] sm:$0xf]
        %v917 = vld [vmem:[%s1 + $0x84] sm:$0xf]
        %v918 = vld [vmem:[%s1 + $0x88] sm:$0xf]
        %v919 = vld [vmem:[%s1 + $0x8c] sm:$0xf]
        %v920 = vld [vmem:[%s1 + $0x90] sm:$0xf]
        %v921 = vld [vmem:[%s1 + $0x94] sm:$0xf]
        %v922 = vld [vmem:[%s1 + $0x98] sm:$0xf]
        %v923 = vld [vmem:[%s1 + $0x9c] sm:$0xf]
        %v924 = vld [vmem:[%s1 + $0xa0] sm:$0xf]
        %v925 = vld [vmem:[%s1 + $0xa4] sm:$0xf]
        %v926 = vld [vmem:[%s1 + $0xa8] sm:$0xf]
        %v927 = vld [vmem:[%s1 + $0xac] sm:$0xf]
        %v928 = vld [vmem:[%s1 + $0xb0] sm:$0xf]
        %v929 = vld [vmem:[%s1 + $0xb4] sm:$0xf]
        %v930 = vld [vmem:[%s1 + $0xb8] sm:$0xf]
        %v931 = vld [vmem:[%s1 + $0xbc] sm:$0xf]
        %v932 = vld [vmem:[%s1 + $0xc0] sm:$0xf]
        %v933 = vld [vmem:[%s1 + $0xc4] sm:$0xf]
        %v934 = vld [vmem:[%s1 + $0xc8] sm:$0xf]
        %v935 = vld [vmem:[%s1 + $0xcc] sm:$0xf]
        %v936 = vld [vmem:[%s1 + $0xd0] sm:$0xf]
        %v937 = vld [vmem:[%s1 + $0xd4] sm:$0xf]
        %v938 = vld [vmem:[%s1 + $0xd8] sm:$0xf]
        %v939 = vld [vmem:[%s1 + $0xdc] sm:$0xf]
        %v940 = vld [vmem:[%s1 + $0xe0] sm:$0xf]
        %v941 = vld [vmem:[%s1 + $0xe4] sm:$0xf]
        %v942 = vld [vmem:[%s1 + $0xe8] sm:$0xf]
        %v943 = vld [vmem:[%s1 + $0xec] sm:$0xf]
        %v944 = vld [vmem:[%s1 + $0xf0] sm:$0xf]
        %v945 = vld [vmem:[%s1 + $0xf4] sm:$0xf]
        %v946 = vld [vmem:[%s1 + $0xf8] sm:$0xf]
        %v947 = vld [vmem:[%s1 + $0xfc] sm:$0xf]
        %v948 = vld [vmem:[%s1 + $0x100] sm:$0xf]
        %v949 = vld [vmem:[%s1 + $0x104] sm:$0xf]
        %v950 = vld [vmem:[%s1 + $0x108] sm:$0xf]
        %v951 = vld [vmem:[%s1 + $0x10c] sm:$0xf]
        %v952 = vld [vmem:[%s1 + $0x110] sm:$0xf]
        %v953 = vld [vmem:[%s1 + $0x114] sm:$0xf]
        %v954 = vld [vmem:[%s1 + $0x118] sm:$0xf]
        %v955 = vld [vmem:[%s1 + $0x11c] sm:$0xf]
        %v956 = vld [vmem:[%s1 + $0x120] sm:$0xf]
        %v957 = vld [vmem:[%s1 + $0x124] sm:$0xf]
        %v958 = vld [vmem:[%s1 + $0x128] sm:$0xf]
        %v959 = vld [vmem:[%s1 + $0x12c] sm:$0xf]
        %v960 = vld [vmem:[%s1 + $0x130] sm:$0xf]
        %v961 = vld [vmem:[%s1 + $0x134] sm:$0xf]
        %v962 = vld [vmem:[%s1 + $0x138] sm:$0xf]
        %v963 = vld [vmem:[%s1 + $0x13c] sm:$0xf]
        %v964 = vld [vmem:[%s1 + $0x140] sm:$0xf]
        %v965 = vld [vmem:[%s1 + $0x144] sm:$0xf]
        %v966 = vld [vmem:[%s1 + $0x148] sm:$0xf]
        %v967 = vld [vmem:[%s1 + $0x14c] sm:$0xf]
        %v968 = vld [vmem:[%s1 + $0x150] sm:$0xf]
        %v969 = vld [vmem:[%s1 + $0x154] sm:$0xf]
        %v970 = vld [vmem:[%s1 + $0x158] sm:$0xf]
        %v971 = vld [vmem:[%s1 + $0x15c] sm:$0xf]
        %v972 = vld [vmem:[%s1 + $0x160] sm:$0xf]
        %v973 = vld [vmem:[%s1 + $0x164] sm:$0xf]
        %v974 = vld [vmem:[%s1 + $0x168] sm:$0xf]
        %v975 = vld [vmem:[%s1 + $0x16c] sm:$0xf]
        %v976 = vld [vmem:[%s1 + $0x170] sm:$0xf]
        %v977 = vld [vmem:[%s1 + $0x174] sm:$0xf]
        %v978 = vld [vmem:[%s1 + $0x178] sm:$0xf]
        %v979 = vld [vmem:[%s1 + $0x17c] sm:$0xf]
        %v980 = vld [vmem:[%s2] sm:$0x1]
        %v982 = vlaneseq
        %v983 = vshrl.u32 %v982, 7
        %v984 = vsub.s32 0, %v983
        %v985 = vrot.slane %v980, %v984
        %v993 = vunpack.c.l.b16 %v878
        %v994 = vunpack.c.h.b16 %v878
        %v995 = vunpack.c.l.b16 %v879
        %v996 = vunpack.c.h.b16 %v879
        %v997 = vunpack.c.l.b16 %v880
        %v998 = vunpack.c.h.b16 %v880
        %v999 = vunpack.c.l.b16 %v881
        %v1000 = vunpack.c.h.b16 %v881
        %v1001 = vunpack.c.l.b16 %v882
        %v1002 = vunpack.c.h.b16 %v882
        %v1003 = vunpack.c.l.b16 %v883
        %v1004 = vunpack.c.h.b16 %v883
        %v1005 = vpack.c.b16 %v999, %v993
        %v1006 = vpack.c.b16 %v1000, %v994
        %v1007 = vpack.c.b16 %v1001, %v995
        %v1008 = vpack.c.b16 %v1002, %v996
        %v1009 = vpack.c.b16 %v1003, %v997
        %v1010 = vpack.c.b16 %v1004, %v998
        %v1113 = vunpack.c.l.b16 %v884
        %v1114 = vunpack.c.l.b16 %v885
        %v1115 = vunpack.c.l.b16 %v886
        %v1116 = vunpack.c.l.b16 %v887
        %v1117 = vunpack.c.l.b16 %v888
        %v1118 = vunpack.c.l.b16 %v889
        %v1119 = vunpack.c.l.b16 %v890
        %v1120 = vunpack.c.l.b16 %v891
        %v1121 = vunpack.c.l.b16 %v892
        %v1122 = vunpack.c.l.b16 %v893
        %v1123 = vunpack.c.l.b16 %v894
        %v1124 = vunpack.c.l.b16 %v895
        %v1125 = vunpack.c.l.b16 %v896
        %v1126 = vunpack.c.l.b16 %v897
        %v1127 = vunpack.c.l.b16 %v898
        %v1128 = vunpack.c.l.b16 %v899
        %v1129 = vunpack.c.l.b16 %v900
        %v1130 = vunpack.c.l.b16 %v901
        %v1131 = vunpack.c.l.b16 %v902
        %v1132 = vunpack.c.l.b16 %v903
        %v1133 = vunpack.c.l.b16 %v904
        %v1134 = vunpack.c.l.b16 %v905
        %v1135 = vunpack.c.l.b16 %v906
        %v1136 = vunpack.c.l.b16 %v907
        %v1137 = vunpack.c.l.b16 %v908
        %v1138 = vunpack.c.l.b16 %v909
        %v1139 = vunpack.c.l.b16 %v910
        %v1140 = vunpack.c.l.b16 %v911
        %v1141 = vunpack.c.l.b16 %v912
        %v1142 = vunpack.c.l.b16 %v913
        %v1143 = vunpack.c.l.b16 %v914
        %v1144 = vunpack.c.l.b16 %v915
        %v1145 = vunpack.c.l.b16 %v916
        %v1146 = vunpack.c.l.b16 %v917
        %v1147 = vunpack.c.l.b16 %v918
        %v1148 = vunpack.c.l.b16 %v919
        %v1149 = vunpack.c.l.b16 %v920
        %v1150 = vunpack.c.l.b16 %v921
        %v1151 = vunpack.c.l.b16 %v922
        %v1152 = vunpack.c.l.b16 %v923
        %v1153 = vunpack.c.l.b16 %v924
        %v1154 = vunpack.c.l.b16 %v925
        %v1155 = vunpack.c.l.b16 %v926
        %v1156 = vunpack.c.l.b16 %v927
        %v1157 = vunpack.c.l.b16 %v928
        %v1158 = vunpack.c.l.b16 %v929
        %v1159 = vunpack.c.l.b16 %v930
        %v1160 = vunpack.c.l.b16 %v931
        %v1161 = vunpack.c.l.b16 %v932
        %v1162 = vunpack.c.l.b16 %v933
        %v1163 = vunpack.c.l.b16 %v934
        %v1164 = vunpack.c.l.b16 %v935
        %v1165 = vunpack.c.l.b16 %v936
        %v1166 = vunpack.c.l.b16 %v937
        %v1167 = vunpack.c.l.b16 %v938
        %v1168 = vunpack.c.l.b16 %v939
        %v1169 = vunpack.c.l.b16 %v940
        %v1170 = vunpack.c.l.b16 %v941
        %v1171 = vunpack.c.l.b16 %v942
        %v1172 = vunpack.c.l.b16 %v943
        %v1173 = vunpack.c.l.b16 %v944
        %v1174 = vunpack.c.l.b16 %v945
        %v1175 = vunpack.c.l.b16 %v946
        %v1176 = vunpack.c.l.b16 %v947
        %v1177 = vunpack.c.l.b16 %v948
        %v1178 = vunpack.c.l.b16 %v949
        %v1179 = vunpack.c.l.b16 %v950
        %v1180 = vunpack.c.l.b16 %v951
        %v1181 = vunpack.c.l.b16 %v952
        %v1182 = vunpack.c.l.b16 %v953
        %v1183 = vunpack.c.l.b16 %v954
        %v1184 = vunpack.c.l.b16 %v955
        %v1185 = vunpack.c.l.b16 %v956
        %v1186 = vunpack.c.l.b16 %v957
        %v1187 = vunpack.c.l.b16 %v958
        %v1188 = vunpack.c.l.b16 %v959
        %v1189 = vunpack.c.l.b16 %v960
        %v1190 = vunpack.c.l.b16 %v961
        %v1191 = vunpack.c.l.b16 %v962
        %v1192 = vunpack.c.l.b16 %v963
        %v1193 = vunpack.c.l.b16 %v964
        %v1194 = vunpack.c.l.b16 %v965
        %v1195 = vunpack.c.l.b16 %v966
        %v1196 = vunpack.c.l.b16 %v967
        %v1197 = vunpack.c.l.b16 %v968
        %v1198 = vunpack.c.l.b16 %v969
        %v1199 = vunpack.c.l.b16 %v970
        %v1200 = vunpack.c.l.b16 %v971
        %v1201 = vunpack.c.l.b16 %v972
        %v1202 = vunpack.c.l.b16 %v973
        %v1203 = vunpack.c.l.b16 %v974
        %v1204 = vunpack.c.l.b16 %v975
        %v1205 = vunpack.c.l.b16 %v976
        %v1206 = vunpack.c.l.b16 %v977
        %v1207 = vunpack.c.l.b16 %v978
        %v1208 = vunpack.c.l.b16 %v979
        %v1209 = vpack.c.b16 %v1114, %v1113
        %v1210 = vpack.c.b16 %v1116, %v1115
        %v1211 = vpack.c.b16 %v1118, %v1117
        %v1212 = vpack.c.b16 %v1120, %v1119
        %v1213 = vpack.c.b16 %v1122, %v1121
        %v1214 = vpack.c.b16 %v1124, %v1123
        %v1215 = vpack.c.b16 %v1126, %v1125
        %v1216 = vpack.c.b16 %v1128, %v1127
        %v1217 = vpack.c.b16 %v1130, %v1129
        %v1218 = vpack.c.b16 %v1132, %v1131
        %v1219 = vpack.c.b16 %v1134, %v1133
        %v1220 = vpack.c.b16 %v1136, %v1135
        %v1221 = vpack.c.b16 %v1138, %v1137
        %v1222 = vpack.c.b16 %v1140, %v1139
        %v1223 = vpack.c.b16 %v1142, %v1141
        %v1224 = vpack.c.b16 %v1144, %v1143
        %v1225 = vpack.c.b16 %v1146, %v1145
        %v1226 = vpack.c.b16 %v1148, %v1147
        %v1227 = vpack.c.b16 %v1150, %v1149
        %v1228 = vpack.c.b16 %v1152, %v1151
        %v1229 = vpack.c.b16 %v1154, %v1153
        %v1230 = vpack.c.b16 %v1156, %v1155
        %v1231 = vpack.c.b16 %v1158, %v1157
        %v1232 = vpack.c.b16 %v1160, %v1159
        %v1233 = vpack.c.b16 %v1162, %v1161
        %v1234 = vpack.c.b16 %v1164, %v1163
        %v1235 = vpack.c.b16 %v1166, %v1165
        %v1236 = vpack.c.b16 %v1168, %v1167
        %v1237 = vpack.c.b16 %v1170, %v1169
        %v1238 = vpack.c.b16 %v1172, %v1171
        %v1239 = vpack.c.b16 %v1174, %v1173
        %v1240 = vpack.c.b16 %v1176, %v1175
        %v1241 = vpack.c.b16 %v1178, %v1177
        %v1242 = vpack.c.b16 %v1180, %v1179
        %v1243 = vpack.c.b16 %v1182, %v1181
        %v1244 = vpack.c.b16 %v1184, %v1183
        %v1245 = vpack.c.b16 %v1186, %v1185
        %v1246 = vpack.c.b16 %v1188, %v1187
        %v1247 = vpack.c.b16 %v1190, %v1189
        %v1248 = vpack.c.b16 %v1192, %v1191
        %v1249 = vpack.c.b16 %v1194, %v1193
        %v1250 = vpack.c.b16 %v1196, %v1195
        %v1251 = vpack.c.b16 %v1198, %v1197
        %v1252 = vpack.c.b16 %v1200, %v1199
        %v1253 = vpack.c.b16 %v1202, %v1201
        %v1254 = vpack.c.b16 %v1204, %v1203
        %v1255 = vpack.c.b16 %v1206, %v1205
        %v1256 = vpack.c.b16 %v1208, %v1207
        %1305 = vmatprep.subr.bf16.mxu0 0
        %1306 = vmatpush1.bf16.msra.mxu0 %v1209
        %1307 = vmatprep.subr.bf16.mxu0 0
        %1308 = vmatpush1.bf16.msra.mxu0 %v1210
        %1309 = vmatprep.subr.bf16.mxu0 0
        %1310 = vmatpush1.bf16.msra.mxu0 %v1211
        %1311 = vmatprep.subr.bf16.mxu0 0
        %1312 = vmatpush1.bf16.msra.mxu0 %v1212
        %1313 = vmatprep.subr.bf16.mxu0 0
        %1314 = vmatpush1.bf16.msra.mxu0 %v1213
        %1315 = vmatprep.subr.bf16.mxu0 0
        %1316 = vmatpush1.bf16.msra.mxu0 %v1214
        %1317 = vmatprep.subr.bf16.mxu0 0
        %1318 = vmatpush1.bf16.msra.mxu0 %v1215
        %1319 = vmatprep.subr.bf16.mxu0 0
        %1320 = vmatpush1.bf16.msra.mxu0 %v1216
        %1321 = vmatprep.subr.bf16.mxu0 0
        %1322 = vmatpush1.bf16.msra.mxu0 %v1217
        %1323 = vmatprep.subr.bf16.mxu0 0
        %1324 = vmatpush1.bf16.msra.mxu0 %v1218
        %1325 = vmatprep.subr.bf16.mxu0 0
        %1326 = vmatpush1.bf16.msra.mxu0 %v1219
        %1327 = vmatprep.subr.bf16.mxu0 0
        %1328 = vmatpush1.bf16.msra.mxu0 %v1220
        %1329 = vmatprep.subr.bf16.mxu0 0
        %1330 = vmatpush1.bf16.msra.mxu0 %v1221
        %1331 = vmatprep.subr.bf16.mxu0 0
        %1332 = vmatpush1.bf16.msra.mxu0 %v1222
        %1333 = vmatprep.subr.bf16.mxu0 0
        %1334 = vmatpush1.bf16.msra.mxu0 %v1223
        %1335 = vmatprep.subr.bf16.mxu0 0
        %1336 = vmatpush1.bf16.msra.mxu0 %v1224
        %1337 = vmatprep.mubr.bf16.mxu0 %v1006
        %1338 = vmatmul.mubr.bf16.gmra.mrb[0].mxu0 %v1005
        %v1339 = vpop.f32.mrb[0].mxu0
        %v1340 = vadd.f32 %v985, %v1339
        %v1341 = vpop.f32.mrb[0].mxu0
        %v1342 = vpop.f32.mrb[0].mxu0
        %v1343 = vadd.f32 %v985, %v1342
        %v1344 = vpop.f32.mrb[0].mxu0
        %1345 = vdwg.mxu0
        %1346 = vmatprep.subr.bf16.mxu0 0
        %1347 = vmatpush1.bf16.msra.mxu0 %v1225
        %1348 = vmatprep.subr.bf16.mxu0 0
        %1349 = vmatpush1.bf16.msra.mxu0 %v1226
        %1350 = vmatprep.subr.bf16.mxu0 0
        %1351 = vmatpush1.bf16.msra.mxu0 %v1227
        %1352 = vmatprep.subr.bf16.mxu0 0
        %1353 = vmatpush1.bf16.msra.mxu0 %v1228
        %1354 = vmatprep.subr.bf16.mxu0 0
        %1355 = vmatpush1.bf16.msra.mxu0 %v1229
        %1356 = vmatprep.subr.bf16.mxu0 0
        %1357 = vmatpush1.bf16.msra.mxu0 %v1230
        %1358 = vmatprep.subr.bf16.mxu0 0
        %1359 = vmatpush1.bf16.msra.mxu0 %v1231
        %1360 = vmatprep.subr.bf16.mxu0 0
        %1361 = vmatpush1.bf16.msra.mxu0 %v1232
        %1362 = vmatprep.subr.bf16.mxu0 0
        %1363 = vmatpush1.bf16.msra.mxu0 %v1233
        %1364 = vmatprep.subr.bf16.mxu0 0
        %1365 = vmatpush1.bf16.msra.mxu0 %v1234
        %1366 = vmatprep.subr.bf16.mxu0 0
        %1367 = vmatpush1.bf16.msra.mxu0 %v1235
        %1368 = vmatprep.subr.bf16.mxu0 0
        %1369 = vmatpush1.bf16.msra.mxu0 %v1236
        %1370 = vmatprep.subr.bf16.mxu0 0
        %1371 = vmatpush1.bf16.msra.mxu0 %v1237
        %1372 = vmatprep.subr.bf16.mxu0 0
        %1373 = vmatpush1.bf16.msra.mxu0 %v1238
        %1374 = vmatprep.subr.bf16.mxu0 0
        %1375 = vmatpush1.bf16.msra.mxu0 %v1239
        %1376 = vmatprep.subr.bf16.mxu0 0
        %1377 = vmatpush1.bf16.msra.mxu0 %v1240
        %1378 = vmatprep.mubr.bf16.mxu0 %v1008
        %1379 = vmatmul.mubr.bf16.gmra.mrb[0].mxu0 %v1007
        %v1380 = vpop.f32.mrb[0].mxu0
        %v1381 = vadd.f32 %v1340, %v1380
        %v1382 = vpop.f32.mrb[0].mxu0
        %v1383 = vpop.f32.mrb[0].mxu0
        %v1384 = vadd.f32 %v1343, %v1383
        %v1385 = vpop.f32.mrb[0].mxu0
        %1386 = vdwg.mxu0
        %1387 = vmatprep.subr.bf16.mxu0 0
        %1388 = vmatpush1.bf16.msra.mxu0 %v1241
        %1389 = vmatprep.subr.bf16.mxu0 0
        %1390 = vmatpush1.bf16.msra.mxu0 %v1242
        %1391 = vmatprep.subr.bf16.mxu0 0
        %1392 = vmatpush1.bf16.msra.mxu0 %v1243
        %1393 = vmatprep.subr.bf16.mxu0 0
        %1394 = vmatpush1.bf16.msra.mxu0 %v1244
        %1395 = vmatprep.subr.bf16.mxu0 0
        %1396 = vmatpush1.bf16.msra.mxu0 %v1245
        %1397 = vmatprep.subr.bf16.mxu0 0
        %1398 = vmatpush1.bf16.msra.mxu0 %v1246
        %1399 = vmatprep.subr.bf16.mxu0 0
        %1400 = vmatpush1.bf16.msra.mxu0 %v1247
        %1401 = vmatprep.subr.bf16.mxu0 0
        %1402 = vmatpush1.bf16.msra.mxu0 %v1248
        %1403 = vmatprep.subr.bf16.mxu0 0
        %1404 = vmatpush1.bf16.msra.mxu0 %v1249
        %1405 = vmatprep.subr.bf16.mxu0 0
        %1406 = vmatpush1.bf16.msra.mxu0 %v1250
        %1407 = vmatprep.subr.bf16.mxu0 0
        %1408 = vmatpush1.bf16.msra.mxu0 %v1251
        %1409 = vmatprep.subr.bf16.mxu0 0
        %1410 = vmatpush1.bf16.msra.mxu0 %v1252
        %1411 = vmatprep.subr.bf16.mxu0 0
        %1412 = vmatpush1.bf16.msra.mxu0 %v1253
        %1413 = vmatprep.subr.bf16.mxu0 0
        %1414 = vmatpush1.bf16.msra.mxu0 %v1254
        %1415 = vmatprep.subr.bf16.mxu0 0
        %1416 = vmatpush1.bf16.msra.mxu0 %v1255
        %1417 = vmatprep.subr.bf16.mxu0 0
        %1418 = vmatpush1.bf16.msra.mxu0 %v1256
        %1419 = vmatprep.mubr.bf16.mxu0 %v1010
        %1420 = vmatmul.mubr.bf16.gmra.mrb[0].mxu0 %v1009
        %v1421 = vpop.f32.mrb[0].mxu0
        %v1422 = vadd.f32 %v1381, %v1421
        %v1423 = vpop.f32.mrb[0].mxu0
        %v1424 = vpop.f32.mrb[0].mxu0
        %v1425 = vadd.f32 %v1384, %v1424
        %v1426 = vpop.f32.mrb[0].mxu0
        %1427 = vdwg.mxu0
        %v1428 = vlaneseq
        %v1429 = vshrl.u32 %v1428, 7
        %v1430 = vadd.s32 %v1429, 8
        %v1431 = vand.u32 %v1429, 7
        %v1432 = vand.u32 %v1430, 7
        %vm1433 = vcmp.eq.s32.totalorder %v1431, 0
        %vm1434 = vcmp.eq.s32.totalorder %v1432, 0
        %v1435 = vld [vmem:[%s3] sm:$0x1]
        %v1437 = vlaneseq
        %v1438 = vshrl.u32 %v1437, 7
        %v1439 = vsub.s32 0, %v1438
        %v1440 = vrot.slane %v1435, %v1439
        %v1442 = vsel %vm1433, %v1440, %v1422
        %v1443 = vsel %vm1434, %v1440, %v1425
        %v1444 = vld [vmem:[%s4] sm:$0xff]
        %v1445 = vld [vmem:[%s4 + $0x8] sm:$0xff]
        %v1446 = vadd.f32 %v1442, %v1444
        %v1447 = vadd.f32 %v1443, %v1445
        %1448 = vst [vmem:[#allocation2] sm:$0xff] %v1446
        %1449 = vst [vmem:[#allocation2 + $0x8] sm:$0xff] %v1447
      $region108: #{vit_forward.1} parent=103 // pred_fallthru
        _
      %v1450 = vld [vmem:[#allocation2] sm:$0xff]
      %v1451 = vld [vmem:[#allocation2 + $0x8] sm:$0xff]
      %v1452 = vld [vmem:[%s823] sm:$0x1]
      %v1453 = vld [vmem:[%s826] sm:$0x1]
      %1454 = vadd.xlane.f32.xlu0 %v1450
      %v1455 = vpop.xlane.xlu0 %1454
      %1456 = vadd.xlane.f32.xlu0 %v1451
      %v1457 = vpop.xlane.xlu0 %1456
      %v1458 = vrcp.pop 128.0
      %v1459 = vmul.f32 %v1455, %v1458
      %v1460 = vmul.f32 %v1457, %v1458
      %v1461 = vsub.f32 %v1450, %v1459
      %v1462 = vsub.f32 %v1451, %v1460
      %v1463 = vmul.f32 %v1461, %v1461
      %v1464 = vmul.f32 %v1462, %v1462
      %1465 = vadd.xlane.f32.xlu0 %v1463
      %v1466 = vpop.xlane.xlu0 %1465
      %1467 = vadd.xlane.f32.xlu0 %v1464
      %v1468 = vpop.xlane.xlu0 %1467
      %v1469 = vmul.f32 %v1466, %v1458
      %v1470 = vmul.f32 %v1468, %v1458
      %v1471 = vadd.f32 %v1469, 1e-06
      %v1472 = vadd.f32 %v1470, 1e-06
      %v1473 = vrsqrt.pop %v1471
      %v1474 = vrsqrt.pop %v1472
      %v1475 = vmul.f32 %v1461, %v1473
      %v1476 = vmul.f32 %v1462, %v1474
      %v1478 = vlaneseq
      %v1479 = vshrl.u32 %v1478, 7
      %v1480 = vsub.s32 0, %v1479
      %v1481 = vrot.slane %v1452, %v1480
      %v1483 = vmul.f32 %v1475, %v1481
      %v1484 = vmul.f32 %v1476, %v1481
      %v1486 = vlaneseq
      %v1487 = vshrl.u32 %v1486, 7
      %v1488 = vsub.s32 0, %v1487
      %v1489 = vrot.slane %v1453, %v1488
      %v1491 = vadd.f32 %v1483, %v1489
      %v1492 = vadd.f32 %v1484, %v1489
      %v1493 = vpack.c.bf16 %v1492, %v1491
      %v1494 = vld [vmem:[%s831] sm:$0xff]
      %v1495 = vld [vmem:[%s831 + $0x8] sm:$0xf]
      %v1496 = vld [vmem:[%s831 + $0xc] sm:$0xff]
      %v1497 = vld [vmem:[%s831 + $0x14] sm:$0xf]
      %v1498 = vld [vmem:[%s831 + $0x18] sm:$0xff]
      %v1499 = vld [vmem:[%s831 + $0x20] sm:$0xf]
      %v1500 = vld [vmem:[%s831 + $0x24] sm:$0xff]
      %v1501 = vld [vmem:[%s831 + $0x2c] sm:$0xf]
      %v1502 = vld [vmem:[%s831 + $0x30] sm:$0xff]
      %v1503 = vld [vmem:[%s831 + $0x38] sm:$0xf]
      %v1504 = vld [vmem:[%s831 + $0x3c] sm:$0xff]
      %v1505 = vld [vmem:[%s831 + $0x44] sm:$0xf]
      %v1506 = vld [vmem:[%s831 + $0x48] sm:$0xff]
      %v1507 = vld [vmem:[%s831 + $0x50] sm:$0xf]
      %v1508 = vld [vmem:[%s831 + $0x54] sm:$0xff]
      %v1509 = vld [vmem:[%s831 + $0x5c] sm:$0xf]
      %v1510 = vld [vmem:[%s831 + $0x60] sm:$0xff]
      %v1511 = vld [vmem:[%s831 + $0x68] sm:$0xf]
      %v1512 = vld [vmem:[%s831 + $0x6c] sm:$0xff]
      %v1513 = vld [vmem:[%s831 + $0x74] sm:$0xf]
      %v1514 = vld [vmem:[%s831 + $0x78] sm:$0xff]
      %v1515 = vld [vmem:[%s831 + $0x80] sm:$0xf]
      %v1516 = vld [vmem:[%s831 + $0x84] sm:$0xff]
      %v1517 = vld [vmem:[%s831 + $0x8c] sm:$0xf]
      %v1518 = vld [vmem:[%s831 + $0x90] sm:$0xff]
      %v1519 = vld [vmem:[%s831 + $0x98] sm:$0xf]
      %v1520 = vld [vmem:[%s831 + $0x9c] sm:$0xff]
      %v1521 = vld [vmem:[%s831 + $0xa4] sm:$0xf]
      %v1522 = vld [vmem:[%s831 + $0xa8] sm:$0xff]
      %v1523 = vld [vmem:[%s831 + $0xb0] sm:$0xf]
      %v1524 = vld [vmem:[%s831 + $0xb4] sm:$0xff]
      %v1525 = vld [vmem:[%s831 + $0xbc] sm:$0xf]
      %v1526 = vld [vmem:[%s835] sm:$0x7]
      %v1528 = vlaneseq
      %v1529 = vshrl.u32 %v1528, 7
      %v1530 = vsub.s32 0, %v1529
      %v1531 = vrot.slane %v1526, %v1530
      %v1532 = vlaneseq
      %v1533 = vshrl.u32 %v1532, 7
      %v1534 = vsub.s32 1, %v1533
      %v1535 = vrot.slane %v1526, %v1534
      %v1536 = vlaneseq
      %v1537 = vshrl.u32 %v1536, 7
      %v1538 = vsub.s32 2, %v1537
      %v1539 = vrot.slane %v1526, %v1538
      %v1575 = vunpack.c.l.b16 %v1494
      %v1576 = vunpack.c.h.b16 %v1494
      %v1577 = vunpack.c.l.b16 %v1495
      %v1578 = vunpack.c.l.b16 %v1496
      %v1579 = vunpack.c.h.b16 %v1496
      %v1580 = vunpack.c.l.b16 %v1497
      %v1581 = vunpack.c.l.b16 %v1498
      %v1582 = vunpack.c.h.b16 %v1498
      %v1583 = vunpack.c.l.b16 %v1499
      %v1584 = vunpack.c.l.b16 %v1500
      %v1585 = vunpack.c.h.b16 %v1500
      %v1586 = vunpack.c.l.b16 %v1501
      %v1587 = vunpack.c.l.b16 %v1502
      %v1588 = vunpack.c.h.b16 %v1502
      %v1589 = vunpack.c.l.b16 %v1503
      %v1590 = vunpack.c.l.b16 %v1504
      %v1591 = vunpack.c.h.b16 %v1504
      %v1592 = vunpack.c.l.b16 %v1505
      %v1593 = vunpack.c.l.b16 %v1506
      %v1594 = vunpack.c.h.b16 %v1506
      %v1595 = vunpack.c.l.b16 %v1507
      %v1596 = vunpack.c.l.b16 %v1508
      %v1597 = vunpack.c.h.b16 %v1508
      %v1598 = vunpack.c.l.b16 %v1509
      %v1599 = vunpack.c.l.b16 %v1510
      %v1600 = vunpack.c.h.b16 %v1510
      %v1601 = vunpack.c.l.b16 %v1511
      %v1602 = vunpack.c.l.b16 %v1512
      %v1603 = vunpack.c.h.b16 %v1512
      %v1604 = vunpack.c.l.b16 %v1513
      %v1605 = vunpack.c.l.b16 %v1514
      %v1606 = vunpack.c.h.b16 %v1514
      %v1607 = vunpack.c.l.b16 %v1515
      %v1608 = vunpack.c.l.b16 %v1516
      %v1609 = vunpack.c.h.b16 %v1516
      %v1610 = vunpack.c.l.b16 %v1517
      %v1611 = vunpack.c.l.b16 %v1518
      %v1612 = vunpack.c.h.b16 %v1518
      %v1613 = vunpack.c.l.b16 %v1519
      %v1614 = vunpack.c.l.b16 %v1520
      %v1615 = vunpack.c.h.b16 %v1520
      %v1616 = vunpack.c.l.b16 %v1521
      %v1617 = vunpack.c.l.b16 %v1522
      %v1618 = vunpack.c.h.b16 %v1522
      %v1619 = vunpack.c.l.b16 %v1523
      %v1620 = vunpack.c.l.b16 %v1524
      %v1621 = vunpack.c.h.b16 %v1524
      %v1622 = vunpack.c.l.b16 %v1525
      %v1623 = vpack.c.b16 %v1578, %v1575
      %v1624 = vpack.c.b16 %v1579, %v1576
      %v1625 = vpack.c.b16 %v1580, %v1577
      %v1626 = vpack.c.b16 %v1584, %v1581
      %v1627 = vpack.c.b16 %v1585, %v1582
      %v1628 = vpack.c.b16 %v1586, %v1583
      %v1629 = vpack.c.b16 %v1590, %v1587
      %v1630 = vpack.c.b16 %v1591, %v1588
      %v1631 = vpack.c.b16 %v1592, %v1589
      %v1632 = vpack.c.b16 %v1596, %v1593
      %v1633 = vpack.c.b16 %v1597, %v1594
      %v1634 = vpack.c.b16 %v1598, %v1595
      %v1635 = vpack.c.b16 %v1602, %v1599
      %v1636 = vpack.c.b16 %v1603, %v1600
      %v1637 = vpack.c.b16 %v1604, %v1601
      %v1638 = vpack.c.b16 %v1608, %v1605
      %v1639 = vpack.c.b16 %v1609, %v1606
      %v1640 = vpack.c.b16 %v1610, %v1607
      %v1641 = vpack.c.b16 %v1614, %v1611
      %v1642 = vpack.c.b16 %v1615, %v1612
      %v1643 = vpack.c.b16 %v1616, %v1613
      %v1644 = vpack.c.b16 %v1620, %v1617
      %v1645 = vpack.c.b16 %v1621, %v1618
      %v1646 = vpack.c.b16 %v1622, %v1619
      %1671 = vmatprep.subr.bf16.mxu0 %v1624
      %1672 = vmatpush1.bf16.msra.mxu0 %v1623
      %1673 = vmatprep.subr.bf16.mxu0 %v1627
      %1674 = vmatpush1.bf16.msra.mxu0 %v1626
      %1675 = vmatprep.subr.bf16.mxu0 %v1630
      %1676 = vmatpush1.bf16.msra.mxu0 %v1629
      %1677 = vmatprep.subr.bf16.mxu0 %v1633
      %1678 = vmatpush1.bf16.msra.mxu0 %v1632
      %1679 = vmatprep.subr.bf16.mxu0 %v1636
      %1680 = vmatpush1.bf16.msra.mxu0 %v1635
      %1681 = vmatprep.subr.bf16.mxu0 %v1639
      %1682 = vmatpush1.bf16.msra.mxu0 %v1638
      %1683 = vmatprep.subr.bf16.mxu0 %v1642
      %1684 = vmatpush1.bf16.msra.mxu0 %v1641
      %1685 = vmatprep.subr.bf16.mxu0 %v1645
      %1686 = vmatpush1.bf16.msra.mxu0 %v1644
      %1687 = vmatprep.subr.bf16.mxu0 0
      %1688 = vmatpush1.bf16.msra.mxu0 0
      %1689 = vmatprep.subr.bf16.mxu0 0
      %1690 = vmatpush1.bf16.msra.mxu0 0
      %1691 = vmatprep.subr.bf16.mxu0 0
      %1692 = vmatpush1.bf16.msra.mxu0 0
      %1693 = vmatprep.subr.bf16.mxu0 0
      %1694 = vmatpush1.bf16.msra.mxu0 0
      %1695 = vmatprep.subr.bf16.mxu0 0
      %1696 = vmatpush1.bf16.msra.mxu0 0
      %1697 = vmatprep.subr.bf16.mxu0 0
      %1698 = vmatpush1.bf16.msra.mxu0 0
      %1699 = vmatprep.subr.bf16.mxu0 0
      %1700 = vmatpush1.bf16.msra.mxu0 0
      %1701 = vmatprep.subr.bf16.mxu0 0
      %1702 = vmatpush1.bf16.msra.mxu0 0
      %1703 = vmatprep.mubr.bf16.mxu0 0
      %1704 = vmatmul.mubr.bf16.gmra.mrb[0].mxu0 %v1493
      %v1705 = vpop.f32.mrb[0].mxu0
      %v1706 = vadd.f32 %v1531, %v1705
      %v1707 = vpop.f32.mrb[0].mxu0
      %v1708 = vadd.f32 %v1535, %v1707
      %v1709 = vpop.f32.mrb[0].mxu0
      %v1710 = vadd.f32 %v1531, %v1709
      %v1711 = vpop.f32.mrb[0].mxu0
      %v1712 = vadd.f32 %v1535, %v1711
      %1713 = vdwg.mxu0
      %1714 = vmatprep.subr.bf16.mxu0 0
      %1715 = vmatpush1.bf16.msra.mxu0 %v1625
      %1716 = vmatprep.subr.bf16.mxu0 0
      %1717 = vmatpush1.bf16.msra.mxu0 %v1628
      %1718 = vmatprep.subr.bf16.mxu0 0
      %1719 = vmatpush1.bf16.msra.mxu0 %v1631
      %1720 = vmatprep.subr.bf16.mxu0 0
      %1721 = vmatpush1.bf16.msra.mxu0 %v1634
      %1722 = vmatprep.subr.bf16.mxu0 0
      %1723 = vmatpush1.bf16.msra.mxu0 %v1637
      %1724 = vmatprep.subr.bf16.mxu0 0
      %1725 = vmatpush1.bf16.msra.mxu0 %v1640
      %1726 = vmatprep.subr.bf16.mxu0 0
      %1727 = vmatpush1.bf16.msra.mxu0 %v1643
      %1728 = vmatprep.subr.bf16.mxu0 0
      %1729 = vmatpush1.bf16.msra.mxu0 %v1646
      %1730 = vmatprep.subr.bf16.mxu0 0
      %1731 = vmatpush1.bf16.msra.mxu0 0
      %1732 = vmatprep.subr.bf16.mxu0 0
      %1733 = vmatpush1.bf16.msra.mxu0 0
      %1734 = vmatprep.subr.bf16.mxu0 0
      %1735 = vmatpush1.bf16.msra.mxu0 0
      %1736 = vmatprep.subr.bf16.mxu0 0
      %1737 = vmatpush1.bf16.msra.mxu0 0
      %1738 = vmatprep.subr.bf16.mxu0 0
      %1739 = vmatpush1.bf16.msra.mxu0 0
      %1740 = vmatprep.subr.bf16.mxu0 0
      %1741 = vmatpush1.bf16.msra.mxu0 0
      %1742 = vmatprep.subr.bf16.mxu0 0
      %1743 = vmatpush1.bf16.msra.mxu0 0
      %1744 = vmatprep.subr.bf16.mxu0 0
      %1745 = vmatpush1.bf16.msra.mxu0 0
      %1746 = vmatprep.mubr.bf16.mxu0 0
      %1747 = vmatmul.mubr.bf16.gmra.mrb[0].mxu0 %v1493
      %v1748 = vpop.f32.mrb[0].mxu0
      %v1749 = vadd.f32 %v1539, %v1748
      %v1750 = vpop.f32.mrb[0].mxu0
      %v1751 = vpop.f32.mrb[0].mxu0
      %v1752 = vadd.f32 %v1539, %v1751
      %v1753 = vpop.f32.mrb[0].mxu0
      %1754 = vdwg.mxu0
      %v1755 = vlaneseq
      %v1756 = vand.u32 %v1755, 127
      %vm1757 = vcmp.lt.s32.totalorder %v1756, 5
      %v1758 = vpack.c.bf16 %v1706, %v1706
      %v1759 = vpack.c.bf16 %v1710, %v1710
      %v1760 = vpack.c.bf16 %v1708, %v1708
      %v1761 = vpack.c.bf16 %v1712, %v1712
      %v1762 = vpack.c.bf16 %v1749, %v1749
      %v1763 = vpack.c.bf16 %v1752, %v1752
      %vm1764 = vcmask 523264
      %v1766 = vsel %vm1764, %v1758, 0
      %v1769 = vsel %vm1764, %v1760, 0
      %1771 = vmatprep.subr.bf16.mxu0 0
      %1772 = vmatpush1.bf16.xpose.msra.mxu0 %v1769
      %1773 = vmatprep.subr.bf16.mxu0 0
      %1774 = vmatpush1.bf16.xpose.msra.mxu0 0
      %1775 = vmatprep.subr.bf16.mxu0 0
      %1776 = vmatpush1.bf16.xpose.msra.mxu0 0
      %1777 = vmatprep.subr.bf16.mxu0 0
      %1778 = vmatpush1.bf16.xpose.msra.mxu0 0
      %1779 = vmatprep.subr.bf16.mxu0 0
      %1780 = vmatpush1.bf16.xpose.msra.mxu0 0
      %1781 = vmatprep.subr.bf16.mxu0 0
      %1782 = vmatpush1.bf16.xpose.msra.mxu0 0
      %1783 = vmatprep.subr.bf16.mxu0 0
      %1784 = vmatpush1.bf16.xpose.msra.mxu0 0
      %1785 = vmatprep.subr.bf16.mxu0 0
      %1786 = vmatpush1.bf16.xpose.msra.mxu0 0
      %1787 = vmatprep.subr.bf16.mxu0 0
      %1788 = vmatpush1.bf16.xpose.msra.mxu0 0
      %1789 = vmatprep.subr.bf16.mxu0 0
      %1790 = vmatpush1.bf16.xpose.msra.mxu0 0
      %1791 = vmatprep.subr.bf16.mxu0 0
      %1792 = vmatpush1.bf16.xpose.msra.mxu0 0
      %1793 = vmatprep.subr.bf16.mxu0 0
      %1794 = vmatpush1.bf16.xpose.msra.mxu0 0
      %1795 = vmatprep.subr.bf16.mxu0 0
      %1796 = vmatpush1.bf16.xpose.msra.mxu0 0
      %1797 = vmatprep.subr.bf16.mxu0 0
      %1798 = vmatpush1.bf16.xpose.msra.mxu0 0
      %1799 = vmatprep.subr.bf16.mxu0 0
      %1800 = vmatpush1.bf16.xpose.msra.mxu0 0
      %1801 = vmatprep.subr.bf16.mxu0 0
      %1802 = vmatpush1.bf16.xpose.msra.mxu0 0
      %1803 = vmatprep.mubr.bf16.mxu0 0
      %1804 = vmatmul.mubr.bf16.gmra.mrb[0].mxu0 %v1766
      %v1805 = vpop.f32.mrb[0].mxu0
      %v1806 = vadd.f32 0.0, %v1805
      %v1807 = vpop.f32.mrb[0].mxu0
      %v1808 = vpop.f32.mrb[0].mxu0
      %v1809 = vpop.f32.mrb[0].mxu0
      %1810 = vdwg.mxu0
      %v1812 = vsel %vm1764, %v1759, 0
      %v1815 = vsel %vm1764, %v1761, 0
      %1817 = vmatprep.subr.bf16.mxu0 0
      %1818 = vmatpush1.bf16.xpose.msra.mxu0 %v1815
      %1819 = vmatprep.subr.bf16.mxu0 0
      %1820 = vmatpush1.bf16.xpose.msra.mxu0 0
      %1821 = vmatprep.subr.bf16.mxu0 0
      %1822 = vmatpush1.bf16.xpose.msra.mxu0 0
      %1823 = vmatprep.subr.bf16.mxu0 0
      %1824 = vmatpush1.bf16.xpose.msra.mxu0 0
      %1825 = vmatprep.subr.bf16.mxu0 0
      %1826 = vmatpush1.bf16.xpose.msra.mxu0 0
      %1827 = vmatprep.subr.bf16.mxu0 0
      %1828 = vmatpush1.bf16.xpose.msra.mxu0 0
      %1829 = vmatprep.subr.bf16.mxu0 0
      %1830 = vmatpush1.bf16.xpose.msra.mxu0 0
      %1831 = vmatprep.subr.bf16.mxu0 0
      %1832 = vmatpush1.bf16.xpose.msra.mxu0 0
      %1833 = vmatprep.subr.bf16.mxu0 0
      %1834 = vmatpush1.bf16.xpose.msra.mxu0 0
      %1835 = vmatprep.subr.bf16.mxu0 0
      %1836 = vmatpush1.bf16.xpose.msra.mxu0 0
      %1837 = vmatprep.subr.bf16.mxu0 0
      %1838 = vmatpush1.bf16.xpose.msra.mxu0 0
      %1839 = vmatprep.subr.bf16.mxu0 0
      %1840 = vmatpush1.bf16.xpose.msra.mxu0 0
      %1841 = vmatprep.subr.bf16.mxu0 0
      %1842 = vmatpush1.bf16.xpose.msra.mxu0 0
      %1843 = vmatprep.subr.bf16.mxu0 0
      %1844 = vmatpush1.bf16.xpose.msra.mxu0 0
      %1845 = vmatprep.subr.bf16.mxu0 0
      %1846 = vmatpush1.bf16.xpose.msra.mxu0 0
      %1847 = vmatprep.subr.bf16.mxu0 0
      %1848 = vmatpush1.bf16.xpose.msra.mxu0 0
      %1849 = vmatprep.mubr.bf16.mxu0 0
      %1850 = vmatmul.mubr.bf16.gmra.mrb[0].mxu0 %v1812
      %v1851 = vpop.f32.mrb[0].mxu0
      %v1852 = vadd.f32 0.0, %v1851
      %v1853 = vpop.f32.mrb[0].mxu0
      %v1854 = vpop.f32.mrb[0].mxu0
      %v1855 = vpop.f32.mrb[0].mxu0
      %1856 = vdwg.mxu0
      %v1857 = vmul.f32 %v1806, 0.125
      %v1858 = vmul.f32 %v1852, 0.125
      %v1859 = vsel %vm1757, %v1857, -1e+30
      %v1860 = vsel %vm1757, %v1858, -1e+30
      %vm1861 = vcmask 64512
      %v1862 = vsel %vm1861, %v1859, -inf
      %1863 = vmax.xlane.f32.xlu0 %v1862
      %v1864 = vpop.xlane.xlu0 %1863
      %v1865 = vsel %vm1861, %v1860, -inf
      %1866 = vmax.xlane.f32.xlu0 %v1865
      %v1867 = vpop.xlane.xlu0 %1866
      %v1868 = vsub.f32 %v1859, %v1864
      %v1869 = vsub.f32 %v1860, %v1867
      %v1870 = vmul.f32 %v1868, 1.442695
      %v1871 = vpow.pop %v1870
      %v1872 = vmul.f32 %v1869, 1.442695
      %v1873 = vpow.pop %v1872
      %v1874 = vsel %vm1861, %v1871, 0.0
      %1875 = vadd.xlane.f32.xlu0 %v1874
      %v1876 = vpop.xlane.xlu0 %1875
      %v1877 = vsel %vm1861, %v1873, 0.0
      %1878 = vadd.xlane.f32.xlu0 %v1877
      %v1879 = vpop.xlane.xlu0 %1878
      %v1880 = vrcp.pop %v1876
      %v1881 = vrcp.pop %v1879
      %v1882 = vmul.f32 %v1871, %v1880
      %v1883 = vmul.f32 %v1873, %v1881
      %v1884 = vpack.c.bf16 %v1882, %v1882
      %v1885 = vpack.c.bf16 %v1883, %v1883
      %v1887 = vsel %vm1861, %v1884, 0
      %vm1889 = vcmask 1043456
      %v1891 = vsel %vm1889, %v1762, 0
      %1893 = vmatprep.subr.bf16.mxu0 0
      %1894 = vmatpush1.bf16.msra.mxu0 %v1891
      %1895 = vmatprep.subr.bf16.mxu0 0
      %1896 = vmatpush1.bf16.msra.mxu0 0
      %1897 = vmatprep.subr.bf16.mxu0 0
      %1898 = vmatpush1.bf16.msra.mxu0 0
      %1899 = vmatprep.subr.bf16.mxu0 0
      %1900 = vmatpush1.bf16.msra.mxu0 0
      %1901 = vmatprep.subr.bf16.mxu0 0
      %1902 = vmatpush1.bf16.msra.mxu0 0
      %1903 = vmatprep.subr.bf16.mxu0 0
      %1904 = vmatpush1.bf16.msra.mxu0 0
      %1905 = vmatprep.subr.bf16.mxu0 0
      %1906 = vmatpush1.bf16.msra.mxu0 0
      %1907 = vmatprep.subr.bf16.mxu0 0
      %1908 = vmatpush1.bf16.msra.mxu0 0
      %1909 = vmatprep.subr.bf16.mxu0 0
      %1910 = vmatpush1.bf16.msra.mxu0 0
      %1911 = vmatprep.subr.bf16.mxu0 0
      %1912 = vmatpush1.bf16.msra.mxu0 0
      %1913 = vmatprep.subr.bf16.mxu0 0
      %1914 = vmatpush1.bf16.msra.mxu0 0
      %1915 = vmatprep.subr.bf16.mxu0 0
      %1916 = vmatpush1.bf16.msra.mxu0 0
      %1917 = vmatprep.subr.bf16.mxu0 0
      %1918 = vmatpush1.bf16.msra.mxu0 0
      %1919 = vmatprep.subr.bf16.mxu0 0
      %1920 = vmatpush1.bf16.msra.mxu0 0
      %1921 = vmatprep.subr.bf16.mxu0 0
      %1922 = vmatpush1.bf16.msra.mxu0 0
      %1923 = vmatprep.subr.bf16.mxu0 0
      %1924 = vmatpush1.bf16.msra.mxu0 0
      %1925 = vmatprep.mubr.bf16.mxu0 0
      %1926 = vmatmul.mubr.bf16.gmra.mrb[0].mxu0 %v1887
      %v1927 = vpop.f32.mrb[0].mxu0
      %v1928 = vadd.f32 0.0, %v1927
      %v1929 = vpop.f32.mrb[0].mxu0
      %v1930 = vpop.f32.mrb[0].mxu0
      %v1931 = vpop.f32.mrb[0].mxu0
      %1932 = vdwg.mxu0
      %v1934 = vsel %vm1861, %v1885, 0
      %v1937 = vsel %vm1889, %v1763, 0
      %1939 = vmatprep.subr.bf16.mxu0 0
      %1940 = vmatpush1.bf16.msra.mxu0 %v1937
      %1941 = vmatprep.subr.bf16.mxu0 0
      %1942 = vmatpush1.bf16.msra.mxu0 0
      %1943 = vmatprep.subr.bf16.mxu0 0
      %1944 = vmatpush1.bf16.msra.mxu0 0
      %1945 = vmatprep.subr.bf16.mxu0 0
      %1946 = vmatpush1.bf16.msra.mxu0 0
      %1947 = vmatprep.subr.bf16.mxu0 0
      %1948 = vmatpush1.bf16.msra.mxu0 0
      %1949 = vmatprep.subr.bf16.mxu0 0
      %1950 = vmatpush1.bf16.msra.mxu0 0
      %1951 = vmatprep.subr.bf16.mxu0 0
      %1952 = vmatpush1.bf16.msra.mxu0 0
      %1953 = vmatprep.subr.bf16.mxu0 0
      %1954 = vmatpush1.bf16.msra.mxu0 0
      %1955 = vmatprep.subr.bf16.mxu0 0
      %1956 = vmatpush1.bf16.msra.mxu0 0
      %1957 = vmatprep.subr.bf16.mxu0 0
      %1958 = vmatpush1.bf16.msra.mxu0 0
      %1959 = vmatprep.subr.bf16.mxu0 0
      %1960 = vmatpush1.bf16.msra.mxu0 0
      %1961 = vmatprep.subr.bf16.mxu0 0
      %1962 = vmatpush1.bf16.msra.mxu0 0
      %1963 = vmatprep.subr.bf16.mxu0 0
      %1964 = vmatpush1.bf16.msra.mxu0 0
      %1965 = vmatprep.subr.bf16.mxu0 0
      %1966 = vmatpush1.bf16.msra.mxu0 0
      %1967 = vmatprep.subr.bf16.mxu0 0
      %1968 = vmatpush1.bf16.msra.mxu0 0
      %1969 = vmatprep.subr.bf16.mxu0 0
      %1970 = vmatpush1.bf16.msra.mxu0 0
      %1971 = vmatprep.mubr.bf16.mxu0 0
      %1972 = vmatmul.mubr.bf16.gmra.mrb[0].mxu0 %v1934
      %v1973 = vpop.f32.mrb[0].mxu0
      %v1974 = vadd.f32 0.0, %v1973
      %v1975 = vpop.f32.mrb[0].mxu0
      %v1976 = vpop.f32.mrb[0].mxu0
      %v1977 = vpop.f32.mrb[0].mxu0
      %1978 = vdwg.mxu0
      %1980 = vrot.lane.b32.xlu0 %v1758, 64
      %v1981 = vpop.permute.xlu0 %1980
      %1983 = vrot.lane.b32.xlu0 %v1760, 64
      %v1984 = vpop.permute.xlu0 %1983
      %v1986 = vsel %vm1764, %v1981, 0
      %v1989 = vsel %vm1764, %v1984, 0
      %1991 = vmatprep.subr.bf16.mxu0 0
      %1992 = vmatpush1.bf16.xpose.msra.mxu0 %v1989
      %1993 = vmatprep.subr.bf16.mxu0 0
      %1994 = vmatpush1.bf16.xpose.msra.mxu0 0
      %1995 = vmatprep.subr.bf16.mxu0 0
      %1996 = vmatpush1.bf16.xpose.msra.mxu0 0
      %1997 = vmatprep.subr.bf16.mxu0 0
      %1998 = vmatpush1.bf16.xpose.msra.mxu0 0
      %1999 = vmatprep.subr.bf16.mxu0 0
      %2000 = vmatpush1.bf16.xpose.msra.mxu0 0
      %2001 = vmatprep.subr.bf16.mxu0 0
      %2002 = vmatpush1.bf16.xpose.msra.mxu0 0
      %2003 = vmatprep.subr.bf16.mxu0 0
      %2004 = vmatpush1.bf16.xpose.msra.mxu0 0
      %2005 = vmatprep.subr.bf16.mxu0 0
      %2006 = vmatpush1.bf16.xpose.msra.mxu0 0
      %2007 = vmatprep.subr.bf16.mxu0 0
      %2008 = vmatpush1.bf16.xpose.msra.mxu0 0
      %2009 = vmatprep.subr.bf16.mxu0 0
      %2010 = vmatpush1.bf16.xpose.msra.mxu0 0
      %2011 = vmatprep.subr.bf16.mxu0 0
      %2012 = vmatpush1.bf16.xpose.msra.mxu0 0
      %2013 = vmatprep.subr.bf16.mxu0 0
      %2014 = vmatpush1.bf16.xpose.msra.mxu0 0
      %2015 = vmatprep.subr.bf16.mxu0 0
      %2016 = vmatpush1.bf16.xpose.msra.mxu0 0
      %2017 = vmatprep.subr.bf16.mxu0 0
      %2018 = vmatpush1.bf16.xpose.msra.mxu0 0
      %2019 = vmatprep.subr.bf16.mxu0 0
      %2020 = vmatpush1.bf16.xpose.msra.mxu0 0
      %2021 = vmatprep.subr.bf16.mxu0 0
      %2022 = vmatpush1.bf16.xpose.msra.mxu0 0
      %2023 = vmatprep.mubr.bf16.mxu0 0
      %2024 = vmatmul.mubr.bf16.gmra.mrb[0].mxu0 %v1986
      %v2025 = vpop.f32.mrb[0].mxu0
      %v2026 = vadd.f32 0.0, %v2025
      %v2027 = vpop.f32.mrb[0].mxu0
      %v2028 = vpop.f32.mrb[0].mxu0
      %v2029 = vpop.f32.mrb[0].mxu0
      %2030 = vdwg.mxu0
      %2032 = vrot.lane.b32.xlu0 %v1759, 64
      %v2033 = vpop.permute.xlu0 %2032
      %2035 = vrot.lane.b32.xlu0 %v1761, 64
      %v2036 = vpop.permute.xlu0 %2035
      %v2038 = vsel %vm1764, %v2033, 0
      %v2041 = vsel %vm1764, %v2036, 0
      %2043 = vmatprep.subr.bf16.mxu0 0
      %2044 = vmatpush1.bf16.xpose.msra.mxu0 %v2041
      %2045 = vmatprep.subr.bf16.mxu0 0
      %2046 = vmatpush1.bf16.xpose.msra.mxu0 0
      %2047 = vmatprep.subr.bf16.mxu0 0
      %2048 = vmatpush1.bf16.xpose.msra.mxu0 0
      %2049 = vmatprep.subr.bf16.mxu0 0
      %2050 = vmatpush1.bf16.xpose.msra.mxu0 0
      %2051 = vmatprep.subr.bf16.mxu0 0
      %2052 = vmatpush1.bf16.xpose.msra.mxu0 0
      %2053 = vmatprep.subr.bf16.mxu0 0
      %2054 = vmatpush1.bf16.xpose.msra.mxu0 0
      %2055 = vmatprep.subr.bf16.mxu0 0
      %2056 = vmatpush1.bf16.xpose.msra.mxu0 0
      %2057 = vmatprep.subr.bf16.mxu0 0
      %2058 = vmatpush1.bf16.xpose.msra.mxu0 0
      %2059 = vmatprep.subr.bf16.mxu0 0
      %2060 = vmatpush1.bf16.xpose.msra.mxu0 0
      %2061 = vmatprep.subr.bf16.mxu0 0
      %2062 = vmatpush1.bf16.xpose.msra.mxu0 0
      %2063 = vmatprep.subr.bf16.mxu0 0
      %2064 = vmatpush1.bf16.xpose.msra.mxu0 0
      %2065 = vmatprep.subr.bf16.mxu0 0
      %2066 = vmatpush1.bf16.xpose.msra.mxu0 0
      %2067 = vmatprep.subr.bf16.mxu0 0
      %2068 = vmatpush1.bf16.xpose.msra.mxu0 0
      %2069 = vmatprep.subr.bf16.mxu0 0
      %2070 = vmatpush1.bf16.xpose.msra.mxu0 0
      %2071 = vmatprep.subr.bf16.mxu0 0
      %2072 = vmatpush1.bf16.xpose.msra.mxu0 0
      %2073 = vmatprep.subr.bf16.mxu0 0
      %2074 = vmatpush1.bf16.xpose.msra.mxu0 0
      %2075 = vmatprep.mubr.bf16.mxu0 0
      %2076 = vmatmul.mubr.bf16.gmra.mrb[0].mxu0 %v2038
      %v2077 = vpop.f32.mrb[0].mxu0
      %v2078 = vadd.f32 0.0, %v2077
      %v2079 = vpop.f32.mrb[0].mxu0
      %v2080 = vpop.f32.mrb[0].mxu0
      %v2081 = vpop.f32.mrb[0].mxu0
      %2082 = vdwg.mxu0
      %v2083 = vmul.f32 %v2026, 0.125
      %v2084 = vmul.f32 %v2078, 0.125
      %v2085 = vsel %vm1757, %v2083, -1e+30
      %v2086 = vsel %vm1757, %v2084, -1e+30
      %v2087 = vsel %vm1861, %v2085, -inf
      %2088 = vmax.xlane.f32.xlu0 %v2087
      %v2089 = vpop.xlane.xlu0 %2088
      %v2090 = vsel %vm1861, %v2086, -inf
      %2091 = vmax.xlane.f32.xlu0 %v2090
      %v2092 = vpop.xlane.xlu0 %2091
      %v2093 = vsub.f32 %v2085, %v2089
      %v2094 = vsub.f32 %v2086, %v2092
      %v2095 = vmul.f32 %v2093, 1.442695
      %v2096 = vpow.pop %v2095
      %v2097 = vmul.f32 %v2094, 1.442695
      %v2098 = vpow.pop %v2097
      %v2099 = vsel %vm1861, %v2096, 0.0
      %2100 = vadd.xlane.f32.xlu0 %v2099
      %v2101 = vpop.xlane.xlu0 %2100
      %v2102 = vsel %vm1861, %v2098, 0.0
      %2103 = vadd.xlane.f32.xlu0 %v2102
      %v2104 = vpop.xlane.xlu0 %2103
      %v2105 = vrcp.pop %v2101
      %v2106 = vrcp.pop %v2104
      %v2107 = vmul.f32 %v2096, %v2105
      %v2108 = vmul.f32 %v2098, %v2106
      %v2109 = vpack.c.bf16 %v2107, %v2107
      %v2110 = vpack.c.bf16 %v2108, %v2108
      %2112 = vrot.lane.b32.xlu0 %v1762, 64
      %v2113 = vpop.permute.xlu0 %2112
      %v2115 = vsel %vm1861, %v2109, 0
      %v2118 = vsel %vm1889, %v2113, 0
      %2120 = vmatprep.subr.bf16.mxu0 0
      %2121 = vmatpush1.bf16.msra.mxu0 %v2118
      %2122 = vmatprep.subr.bf16.mxu0 0
      %2123 = vmatpush1.bf16.msra.mxu0 0
      %2124 = vmatprep.subr.bf16.mxu0 0
      %2125 = vmatpush1.bf16.msra.mxu0 0
      %2126 = vmatprep.subr.bf16.mxu0 0
      %2127 = vmatpush1.bf16.msra.mxu0 0
      %2128 = vmatprep.subr.bf16.mxu0 0
      %2129 = vmatpush1.bf16.msra.mxu0 0
      %2130 = vmatprep.subr.bf16.mxu0 0
      %2131 = vmatpush1.bf16.msra.mxu0 0
      %2132 = vmatprep.subr.bf16.mxu0 0
      %2133 = vmatpush1.bf16.msra.mxu0 0
      %2134 = vmatprep.subr.bf16.mxu0 0
      %2135 = vmatpush1.bf16.msra.mxu0 0
      %2136 = vmatprep.subr.bf16.mxu0 0
      %2137 = vmatpush1.bf16.msra.mxu0 0
      %2138 = vmatprep.subr.bf16.mxu0 0
      %2139 = vmatpush1.bf16.msra.mxu0 0
      %2140 = vmatprep.subr.bf16.mxu0 0
      %2141 = vmatpush1.bf16.msra.mxu0 0
      %2142 = vmatprep.subr.bf16.mxu0 0
      %2143 = vmatpush1.bf16.msra.mxu0 0
      %2144 = vmatprep.subr.bf16.mxu0 0
      %2145 = vmatpush1.bf16.msra.mxu0 0
      %2146 = vmatprep.subr.bf16.mxu0 0
      %2147 = vmatpush1.bf16.msra.mxu0 0
      %2148 = vmatprep.subr.bf16.mxu0 0
      %2149 = vmatpush1.bf16.msra.mxu0 0
      %2150 = vmatprep.subr.bf16.mxu0 0
      %2151 = vmatpush1.bf16.msra.mxu0 0
      %2152 = vmatprep.mubr.bf16.mxu0 0
      %2153 = vmatmul.mubr.bf16.gmra.mrb[0].mxu0 %v2115
      %v2154 = vpop.f32.mrb[0].mxu0
      %v2155 = vadd.f32 0.0, %v2154
      %v2156 = vpop.f32.mrb[0].mxu0
      %v2157 = vpop.f32.mrb[0].mxu0
      %v2158 = vpop.f32.mrb[0].mxu0
      %2159 = vdwg.mxu0
      %2161 = vrot.lane.b32.xlu0 %v1763, 64
      %v2162 = vpop.permute.xlu0 %2161
      %v2164 = vsel %vm1861, %v2110, 0
      %v2167 = vsel %vm1889, %v2162, 0
      %2169 = vmatprep.subr.bf16.mxu0 0
      %2170 = vmatpush1.bf16.msra.mxu0 %v2167
      %2171 = vmatprep.subr.bf16.mxu0 0
      %2172 = vmatpush1.bf16.msra.mxu0 0
      %2173 = vmatprep.subr.bf16.mxu0 0
      %2174 = vmatpush1.bf16.msra.mxu0 0
      %2175 = vmatprep.subr.bf16.mxu0 0
      %2176 = vmatpush1.bf16.msra.mxu0 0
      %2177 = vmatprep.subr.bf16.mxu0 0
      %2178 = vmatpush1.bf16.msra.mxu0 0
      %2179 = vmatprep.subr.bf16.mxu0 0
      %2180 = vmatpush1.bf16.msra.mxu0 0
      %2181 = vmatprep.subr.bf16.mxu0 0
      %2182 = vmatpush1.bf16.msra.mxu0 0
      %2183 = vmatprep.subr.bf16.mxu0 0
      %2184 = vmatpush1.bf16.msra.mxu0 0
      %2185 = vmatprep.subr.bf16.mxu0 0
      %2186 = vmatpush1.bf16.msra.mxu0 0
      %2187 = vmatprep.subr.bf16.mxu0 0
      %2188 = vmatpush1.bf16.msra.mxu0 0
      %2189 = vmatprep.subr.bf16.mxu0 0
      %2190 = vmatpush1.bf16.msra.mxu0 0
      %2191 = vmatprep.subr.bf16.mxu0 0
      %2192 = vmatpush1.bf16.msra.mxu0 0
      %2193 = vmatprep.subr.bf16.mxu0 0
      %2194 = vmatpush1.bf16.msra.mxu0 0
      %2195 = vmatprep.subr.bf16.mxu0 0
      %2196 = vmatpush1.bf16.msra.mxu0 0
      %2197 = vmatprep.subr.bf16.mxu0 0
      %2198 = vmatpush1.bf16.msra.mxu0 0
      %2199 = vmatprep.subr.bf16.mxu0 0
      %2200 = vmatpush1.bf16.msra.mxu0 0
      %2201 = vmatprep.mubr.bf16.mxu0 0
      %2202 = vmatmul.mubr.bf16.gmra.mrb[0].mxu0 %v2164
      %v2203 = vpop.f32.mrb[0].mxu0
      %v2204 = vadd.f32 0.0, %v2203
      %v2205 = vpop.f32.mrb[0].mxu0
      %v2206 = vpop.f32.mrb[0].mxu0
      %v2207 = vpop.f32.mrb[0].mxu0
      %2208 = vdwg.mxu0
      %2211 = vrot.lane.b32.xlu0 %v2155, 64
      %v2212 = vpop.permute.xlu0 %2211
      %2213 = vrot.lane.b32.xlu0 %v2204, 64
      %v2214 = vpop.permute.xlu0 %2213
      %v2217 = vsel %vm1764, %v1928, %v2212
      %v2218 = vsel %vm1764, %v1974, %v2214
      %v2219 = vpack.c.bf16 %v2218, %v2217
      %v2220 = vld [vmem:[%s840] sm:$0xf]
      %v2221 = vld [vmem:[%s840 + $0x4] sm:$0xf]
      %v2222 = vld [vmem:[%s840 + $0x8] sm:$0xf]
      %v2223 = vld [vmem:[%s840 + $0xc] sm:$0xf]
      %v2224 = vld [vmem:[%s840 + $0x10] sm:$0xf]
      %v2225 = vld [vmem:[%s840 + $0x14] sm:$0xf]
      %v2226 = vld [vmem:[%s840 + $0x18] sm:$0xf]
      %v2227 = vld [vmem:[%s840 + $0x1c] sm:$0xf]
      %v2228 = vld [vmem:[%s840 + $0x20] sm:$0xf]
      %v2229 = vld [vmem:[%s840 + $0x24] sm:$0xf]
      %v2230 = vld [vmem:[%s840 + $0x28] sm:$0xf]
      %v2231 = vld [vmem:[%s840 + $0x2c] sm:$0xf]
      %v2232 = vld [vmem:[%s840 + $0x30] sm:$0xf]
      %v2233 = vld [vmem:[%s840 + $0x34] sm:$0xf]
      %v2234 = vld [vmem:[%s840 + $0x38] sm:$0xf]
      %v2235 = vld [vmem:[%s840 + $0x3c] sm:$0xf]
      %v2236 = vld [vmem:[%s843] sm:$0x1]
      %v2238 = vlaneseq
      %v2239 = vshrl.u32 %v2238, 7
      %v2240 = vsub.s32 0, %v2239
      %v2241 = vrot.slane %v2236, %v2240
      %v2259 = vunpack.c.l.b16 %v2220
      %v2260 = vunpack.c.l.b16 %v2221
      %v2261 = vunpack.c.l.b16 %v2222
      %v2262 = vunpack.c.l.b16 %v2223
      %v2263 = vunpack.c.l.b16 %v2224
      %v2264 = vunpack.c.l.b16 %v2225
      %v2265 = vunpack.c.l.b16 %v2226
      %v2266 = vunpack.c.l.b16 %v2227
      %v2267 = vunpack.c.l.b16 %v2228
      %v2268 = vunpack.c.l.b16 %v2229
      %v2269 = vunpack.c.l.b16 %v2230
      %v2270 = vunpack.c.l.b16 %v2231
      %v2271 = vunpack.c.l.b16 %v2232
      %v2272 = vunpack.c.l.b16 %v2233
      %v2273 = vunpack.c.l.b16 %v2234
      %v2274 = vunpack.c.l.b16 %v2235
      %v2275 = vpack.c.b16 %v2260, %v2259
      %v2276 = vpack.c.b16 %v2262, %v2261
      %v2277 = vpack.c.b16 %v2264, %v2263
      %v2278 = vpack.c.b16 %v2266, %v2265
      %v2279 = vpack.c.b16 %v2268, %v2267
      %v2280 = vpack.c.b16 %v2270, %v2269
      %v2281 = vpack.c.b16 %v2272, %v2271
      %v2282 = vpack.c.b16 %v2274, %v2273
      %2291 = vmatprep.subr.bf16.mxu0 0
      %2292 = vmatpush1.bf16.msra.mxu0 %v2275
      %2293 = vmatprep.subr.bf16.mxu0 0
      %2294 = vmatpush1.bf16.msra.mxu0 %v2276
      %2295 = vmatprep.subr.bf16.mxu0 0
      %2296 = vmatpush1.bf16.msra.mxu0 %v2277
      %2297 = vmatprep.subr.bf16.mxu0 0
      %2298 = vmatpush1.bf16.msra.mxu0 %v2278
      %2299 = vmatprep.subr.bf16.mxu0 0
      %2300 = vmatpush1.bf16.msra.mxu0 %v2279
      %2301 = vmatprep.subr.bf16.mxu0 0
      %2302 = vmatpush1.bf16.msra.mxu0 %v2280
      %2303 = vmatprep.subr.bf16.mxu0 0
      %2304 = vmatpush1.bf16.msra.mxu0 %v2281
      %2305 = vmatprep.subr.bf16.mxu0 0
      %2306 = vmatpush1.bf16.msra.mxu0 %v2282
      %2307 = vmatprep.subr.bf16.mxu0 0
      %2308 = vmatpush1.bf16.msra.mxu0 0
      %2309 = vmatprep.subr.bf16.mxu0 0
      %2310 = vmatpush1.bf16.msra.mxu0 0
      %2311 = vmatprep.subr.bf16.mxu0 0
      %2312 = vmatpush1.bf16.msra.mxu0 0
      %2313 = vmatprep.subr.bf16.mxu0 0
      %2314 = vmatpush1.bf16.msra.mxu0 0
      %2315 = vmatprep.subr.bf16.mxu0 0
      %2316 = vmatpush1.bf16.msra.mxu0 0
      %2317 = vmatprep.subr.bf16.mxu0 0
      %2318 = vmatpush1.bf16.msra.mxu0 0
      %2319 = vmatprep.subr.bf16.mxu0 0
      %2320 = vmatpush1.bf16.msra.mxu0 0
      %2321 = vmatprep.subr.bf16.mxu0 0
      %2322 = vmatpush1.bf16.msra.mxu0 0
      %2323 = vmatprep.mubr.bf16.mxu0 0
      %2324 = vmatmul.mubr.bf16.gmra.mrb[0].mxu0 %v2219
      %v2325 = vpop.f32.mrb[0].mxu0
      %v2326 = vadd.f32 %v2241, %v2325
      %v2327 = vpop.f32.mrb[0].mxu0
      %v2328 = vpop.f32.mrb[0].mxu0
      %v2329 = vadd.f32 %v2241, %v2328
      %v2330 = vpop.f32.mrb[0].mxu0
      %2331 = vdwg.mxu0
      %v2332 = vadd.f32 %v1450, %v2326
      %v2333 = vadd.f32 %v1451, %v2329
      %v2334 = vld [vmem:[%s846] sm:$0x1]
      %v2335 = vld [vmem:[%s849] sm:$0x1]
      %2336 = vadd.xlane.f32.xlu0 %v2332
      %v2337 = vpop.xlane.xlu0 %2336
      %2338 = vadd.xlane.f32.xlu0 %v2333
      %v2339 = vpop.xlane.xlu0 %2338
      %v2340 = vmul.f32 %v2337, %v1458
      %v2341 = vmul.f32 %v2339, %v1458
      %v2342 = vsub.f32 %v2332, %v2340
      %v2343 = vsub.f32 %v2333, %v2341
      %v2344 = vmul.f32 %v2342, %v2342
      %v2345 = vmul.f32 %v2343, %v2343
      %2346 = vadd.xlane.f32.xlu0 %v2344
      %v2347 = vpop.xlane.xlu0 %2346
      %2348 = vadd.xlane.f32.xlu0 %v2345
      %v2349 = vpop.xlane.xlu0 %2348
      %v2350 = vmul.f32 %v2347, %v1458
      %v2351 = vmul.f32 %v2349, %v1458
      %v2352 = vadd.f32 %v2350, 1e-06
      %v2353 = vadd.f32 %v2351, 1e-06
      %v2354 = vrsqrt.pop %v2352
      %v2355 = vrsqrt.pop %v2353
      %v2356 = vmul.f32 %v2342, %v2354
      %v2357 = vmul.f32 %v2343, %v2355
      %v2359 = vlaneseq
      %v2360 = vshrl.u32 %v2359, 7
      %v2361 = vsub.s32 0, %v2360
      %v2362 = vrot.slane %v2334, %v2361
      %v2364 = vmul.f32 %v2356, %v2362
      %v2365 = vmul.f32 %v2357, %v2362
      %v2367 = vlaneseq
      %v2368 = vshrl.u32 %v2367, 7
      %v2369 = vsub.s32 0, %v2368
      %v2370 = vrot.slane %v2335, %v2369
      %v2372 = vadd.f32 %v2364, %v2370
      %v2373 = vadd.f32 %v2365, %v2370
      %v2374 = vpack.c.bf16 %v2373, %v2372
      %v2375 = vld [vmem:[%s854] sm:$0xff]
      %v2376 = vld [vmem:[%s854 + $0x8] sm:$0xff]
      %v2377 = vld [vmem:[%s854 + $0x10] sm:$0xff]
      %v2378 = vld [vmem:[%s854 + $0x18] sm:$0xff]
      %v2379 = vld [vmem:[%s854 + $0x20] sm:$0xff]
      %v2380 = vld [vmem:[%s854 + $0x28] sm:$0xff]
      %v2381 = vld [vmem:[%s854 + $0x30] sm:$0xff]
      %v2382 = vld [vmem:[%s854 + $0x38] sm:$0xff]
      %v2383 = vld [vmem:[%s854 + $0x40] sm:$0xff]
      %v2384 = vld [vmem:[%s854 + $0x48] sm:$0xff]
      %v2385 = vld [vmem:[%s854 + $0x50] sm:$0xff]
      %v2386 = vld [vmem:[%s854 + $0x58] sm:$0xff]
      %v2387 = vld [vmem:[%s854 + $0x60] sm:$0xff]
      %v2388 = vld [vmem:[%s854 + $0x68] sm:$0xff]
      %v2389 = vld [vmem:[%s854 + $0x70] sm:$0xff]
      %v2390 = vld [vmem:[%s854 + $0x78] sm:$0xff]
      %v2391 = vld [vmem:[%s854 + $0x80] sm:$0xff]
      %v2392 = vld [vmem:[%s854 + $0x88] sm:$0xff]
      %v2393 = vld [vmem:[%s854 + $0x90] sm:$0xff]
      %v2394 = vld [vmem:[%s854 + $0x98] sm:$0xff]
      %v2395 = vld [vmem:[%s854 + $0xa0] sm:$0xff]
      %v2396 = vld [vmem:[%s854 + $0xa8] sm:$0xff]
      %v2397 = vld [vmem:[%s854 + $0xb0] sm:$0xff]
      %v2398 = vld [vmem:[%s854 + $0xb8] sm:$0xff]
      %v2399 = vld [vmem:[%s854 + $0xc0] sm:$0xff]
      %v2400 = vld [vmem:[%s854 + $0xc8] sm:$0xff]
      %v2401 = vld [vmem:[%s854 + $0xd0] sm:$0xff]
      %v2402 = vld [vmem:[%s854 + $0xd8] sm:$0xff]
      %v2403 = vld [vmem:[%s854 + $0xe0] sm:$0xff]
      %v2404 = vld [vmem:[%s854 + $0xe8] sm:$0xff]
      %v2405 = vld [vmem:[%s854 + $0xf0] sm:$0xff]
      %v2406 = vld [vmem:[%s854 + $0xf8] sm:$0xff]
      %v2407 = vld [vmem:[%s858] sm:$0xf]
      %v2409 = vlaneseq
      %v2410 = vshrl.u32 %v2409, 7
      %v2411 = vsub.s32 0, %v2410
      %v2412 = vrot.slane %v2407, %v2411
      %v2413 = vlaneseq
      %v2414 = vshrl.u32 %v2413, 7
      %v2415 = vsub.s32 1, %v2414
      %v2416 = vrot.slane %v2407, %v2415
      %v2417 = vlaneseq
      %v2418 = vshrl.u32 %v2417, 7
      %v2419 = vsub.s32 2, %v2418
      %v2420 = vrot.slane %v2407, %v2419
      %v2421 = vlaneseq
      %v2422 = vshrl.u32 %v2421, 7
      %v2423 = vsub.s32 3, %v2422
      %v2424 = vrot.slane %v2407, %v2423
      %v2461 = vunpack.c.l.b16 %v2375
      %v2462 = vunpack.c.h.b16 %v2375
      %v2463 = vunpack.c.l.b16 %v2376
      %v2464 = vunpack.c.h.b16 %v2376
      %v2465 = vunpack.c.l.b16 %v2377
      %v2466 = vunpack.c.h.b16 %v2377
      %v2467 = vunpack.c.l.b16 %v2378
      %v2468 = vunpack.c.h.b16 %v2378
      %v2469 = vunpack.c.l.b16 %v2379
      %v2470 = vunpack.c.h.b16 %v2379
      %v2471 = vunpack.c.l.b16 %v2380
      %v2472 = vunpack.c.h.b16 %v2380
      %v2473 = vunpack.c.l.b16 %v2381
      %v2474 = vunpack.c.h.b16 %v2381
      %v2475 = vunpack.c.l.b16 %v2382
      %v2476 = vunpack.c.h.b16 %v2382
      %v2477 = vunpack.c.l.b16 %v2383
      %v2478 = vunpack.c.h.b16 %v2383
      %v2479 = vunpack.c.l.b16 %v2384
      %v2480 = vunpack.c.h.b16 %v2384
      %v2481 = vunpack.c.l.b16 %v2385
      %v2482 = vunpack.c.h.b16 %v2385
      %v2483 = vunpack.c.l.b16 %v2386
      %v2484 = vunpack.c.h.b16 %v2386
      %v2485 = vunpack.c.l.b16 %v2387
      %v2486 = vunpack.c.h.b16 %v2387
      %v2487 = vunpack.c.l.b16 %v2388
      %v2488 = vunpack.c.h.b16 %v2388
      %v2489 = vunpack.c.l.b16 %v2389
      %v2490 = vunpack.c.h.b16 %v2389
      %v2491 = vunpack.c.l.b16 %v2390
      %v2492 = vunpack.c.h.b16 %v2390
      %v2493 = vunpack.c.l.b16 %v2391
      %v2494 = vunpack.c.h.b16 %v2391
      %v2495 = vunpack.c.l.b16 %v2392
      %v2496 = vunpack.c.h.b16 %v2392
      %v2497 = vunpack.c.l.b16 %v2393
      %v2498 = vunpack.c.h.b16 %v2393
      %v2499 = vunpack.c.l.b16 %v2394
      %v2500 = vunpack.c.h.b16 %v2394
      %v2501 = vunpack.c.l.b16 %v2395
      %v2502 = vunpack.c.h.b16 %v2395
      %v2503 = vunpack.c.l.b16 %v2396
      %v2504 = vunpack.c.h.b16 %v2396
      %v2505 = vunpack.c.l.b16 %v2397
      %v2506 = vunpack.c.h.b16 %v2397
      %v2507 = vunpack.c.l.b16 %v2398
      %v2508 = vunpack.c.h.b16 %v2398
      %v2509 = vunpack.c.l.b16 %v2399
      %v2510 = vunpack.c.h.b16 %v2399
      %v2511 = vunpack.c.l.b16 %v2400
      %v2512 = vunpack.c.h.b16 %v2400
      %v2513 = vunpack.c.l.b16 %v2401
      %v2514 = vunpack.c.h.b16 %v2401
      %v2515 = vunpack.c.l.b16 %v2402
      %v2516 = vunpack.c.h.b16 %v2402
      %v2517 = vunpack.c.l.b16 %v2403
      %v2518 = vunpack.c.h.b16 %v2403
      %v2519 = vunpack.c.l.b16 %v2404
      %v2520 = vunpack.c.h.b16 %v2404
      %v2521 = vunpack.c.l.b16 %v2405
      %v2522 = vunpack.c.h.b16 %v2405
      %v2523 = vunpack.c.l.b16 %v2406
      %v2524 = vunpack.c.h.b16 %v2406
      %v2525 = vpack.c.b16 %v2465, %v2461
      %v2526 = vpack.c.b16 %v2466, %v2462
      %v2527 = vpack.c.b16 %v2467, %v2463
      %v2528 = vpack.c.b16 %v2468, %v2464
      %v2529 = vpack.c.b16 %v2473, %v2469
      %v2530 = vpack.c.b16 %v2474, %v2470
      %v2531 = vpack.c.b16 %v2475, %v2471
      %v2532 = vpack.c.b16 %v2476, %v2472
      %v2533 = vpack.c.b16 %v2481, %v2477
      %v2534 = vpack.c.b16 %v2482, %v2478
      %v2535 = vpack.c.b16 %v2483, %v2479
      %v2536 = vpack.c.b16 %v2484, %v2480
      %v2537 = vpack.c.b16 %v2489, %v2485
      %v2538 = vpack.c.b16 %v2490, %v2486
      %v2539 = vpack.c.b16 %v2491, %v2487
      %v2540 = vpack.c.b16 %v2492, %v2488
      %v2541 = vpack.c.b16 %v2497, %v2493
      %v2542 = vpack.c.b16 %v2498, %v2494
      %v2543 = vpack.c.b16 %v2499, %v2495
      %v2544 = vpack.c.b16 %v2500, %v2496
      %v2545 = vpack.c.b16 %v2505, %v2501
      %v2546 = vpack.c.b16 %v2506, %v2502
      %v2547 = vpack.c.b16 %v2507, %v2503
      %v2548 = vpack.c.b16 %v2508, %v2504
      %v2549 = vpack.c.b16 %v2513, %v2509
      %v2550 = vpack.c.b16 %v2514, %v2510
      %v2551 = vpack.c.b16 %v2515, %v2511
      %v2552 = vpack.c.b16 %v2516, %v2512
      %v2553 = vpack.c.b16 %v2521, %v2517
      %v2554 = vpack.c.b16 %v2522, %v2518
      %v2555 = vpack.c.b16 %v2523, %v2519
      %v2556 = vpack.c.b16 %v2524, %v2520
      %2589 = vmatprep.subr.bf16.mxu0 %v2526
      %2590 = vmatpush1.bf16.msra.mxu0 %v2525
      %2591 = vmatprep.subr.bf16.mxu0 %v2530
      %2592 = vmatpush1.bf16.msra.mxu0 %v2529
      %2593 = vmatprep.subr.bf16.mxu0 %v2534
      %2594 = vmatpush1.bf16.msra.mxu0 %v2533
      %2595 = vmatprep.subr.bf16.mxu0 %v2538
      %2596 = vmatpush1.bf16.msra.mxu0 %v2537
      %2597 = vmatprep.subr.bf16.mxu0 %v2542
      %2598 = vmatpush1.bf16.msra.mxu0 %v2541
      %2599 = vmatprep.subr.bf16.mxu0 %v2546
      %2600 = vmatpush1.bf16.msra.mxu0 %v2545
      %2601 = vmatprep.subr.bf16.mxu0 %v2550
      %2602 = vmatpush1.bf16.msra.mxu0 %v2549
      %2603 = vmatprep.subr.bf16.mxu0 %v2554
      %2604 = vmatpush1.bf16.msra.mxu0 %v2553
      %2605 = vmatprep.subr.bf16.mxu0 0
      %2606 = vmatpush1.bf16.msra.mxu0 0
      %2607 = vmatprep.subr.bf16.mxu0 0
      %2608 = vmatpush1.bf16.msra.mxu0 0
      %2609 = vmatprep.subr.bf16.mxu0 0
      %2610 = vmatpush1.bf16.msra.mxu0 0
      %2611 = vmatprep.subr.bf16.mxu0 0
      %2612 = vmatpush1.bf16.msra.mxu0 0
      %2613 = vmatprep.subr.bf16.mxu0 0
      %2614 = vmatpush1.bf16.msra.mxu0 0
      %2615 = vmatprep.subr.bf16.mxu0 0
      %2616 = vmatpush1.bf16.msra.mxu0 0
      %2617 = vmatprep.subr.bf16.mxu0 0
      %2618 = vmatpush1.bf16.msra.mxu0 0
      %2619 = vmatprep.subr.bf16.mxu0 0
      %2620 = vmatpush1.bf16.msra.mxu0 0
      %2621 = vmatprep.mubr.bf16.mxu0 0
      %2622 = vmatmul.mubr.bf16.gmra.mrb[0].mxu0 %v2374
      %v2623 = vpop.f32.mrb[0].mxu0
      %v2624 = vadd.f32 %v2412, %v2623
      %v2625 = vpop.f32.mrb[0].mxu0
      %v2626 = vadd.f32 %v2416, %v2625
      %v2627 = vpop.f32.mrb[0].mxu0
      %v2628 = vadd.f32 %v2412, %v2627
      %v2629 = vpop.f32.mrb[0].mxu0
      %v2630 = vadd.f32 %v2416, %v2629
      %2631 = vdwg.mxu0
      %2632 = vmatprep.subr.bf16.mxu0 %v2528
      %2633 = vmatpush1.bf16.msra.mxu0 %v2527
      %2634 = vmatprep.subr.bf16.mxu0 %v2532
      %2635 = vmatpush1.bf16.msra.mxu0 %v2531
      %2636 = vmatprep.subr.bf16.mxu0 %v2536
      %2637 = vmatpush1.bf16.msra.mxu0 %v2535
      %2638 = vmatprep.subr.bf16.mxu0 %v2540
      %2639 = vmatpush1.bf16.msra.mxu0 %v2539
      %2640 = vmatprep.subr.bf16.mxu0 %v2544
      %2641 = vmatpush1.bf16.msra.mxu0 %v2543
      %2642 = vmatprep.subr.bf16.mxu0 %v2548
      %2643 = vmatpush1.bf16.msra.mxu0 %v2547
      %2644 = vmatprep.subr.bf16.mxu0 %v2552
      %2645 = vmatpush1.bf16.msra.mxu0 %v2551
      %2646 = vmatprep.subr.bf16.mxu0 %v2556
      %2647 = vmatpush1.bf16.msra.mxu0 %v2555
      %2648 = vmatprep.subr.bf16.mxu0 0
      %2649 = vmatpush1.bf16.msra.mxu0 0
      %2650 = vmatprep.subr.bf16.mxu0 0
      %2651 = vmatpush1.bf16.msra.mxu0 0
      %2652 = vmatprep.subr.bf16.mxu0 0
      %2653 = vmatpush1.bf16.msra.mxu0 0
      %2654 = vmatprep.subr.bf16.mxu0 0
      %2655 = vmatpush1.bf16.msra.mxu0 0
      %2656 = vmatprep.subr.bf16.mxu0 0
      %2657 = vmatpush1.bf16.msra.mxu0 0
      %2658 = vmatprep.subr.bf16.mxu0 0
      %2659 = vmatpush1.bf16.msra.mxu0 0
      %2660 = vmatprep.subr.bf16.mxu0 0
      %2661 = vmatpush1.bf16.msra.mxu0 0
      %2662 = vmatprep.subr.bf16.mxu0 0
      %2663 = vmatpush1.bf16.msra.mxu0 0
      %2664 = vmatprep.mubr.bf16.mxu0 0
      %2665 = vmatmul.mubr.bf16.gmra.mrb[0].mxu0 %v2374
      %v2666 = vpop.f32.mrb[0].mxu0
      %v2667 = vadd.f32 %v2420, %v2666
      %v2668 = vpop.f32.mrb[0].mxu0
      %v2669 = vadd.f32 %v2424, %v2668
      %v2670 = vpop.f32.mrb[0].mxu0
      %v2671 = vadd.f32 %v2420, %v2670
      %v2672 = vpop.f32.mrb[0].mxu0
      %v2673 = vadd.f32 %v2424, %v2672
      %2674 = vdwg.mxu0
      %v2675 = vmul.f32 %v2624, 0.5
      %v2676 = vmul.f32 %v2626, 0.5
      %v2677 = vmul.f32 %v2667, 0.5
      %v2678 = vmul.f32 %v2669, 0.5
      %v2679 = vmul.f32 %v2628, 0.5
      %v2680 = vmul.f32 %v2630, 0.5
      %v2681 = vmul.f32 %v2671, 0.5
      %v2682 = vmul.f32 %v2673, 0.5
      %v2683 = vmul.f32 %v2624, 0.044715
      %v2684 = vmul.f32 %v2626, 0.044715
      %v2685 = vmul.f32 %v2667, 0.044715
      %v2686 = vmul.f32 %v2669, 0.044715
      %v2687 = vmul.f32 %v2628, 0.044715
      %v2688 = vmul.f32 %v2630, 0.044715
      %v2689 = vmul.f32 %v2671, 0.044715
      %v2690 = vmul.f32 %v2673, 0.044715
      %v2691 = vmul.f32 %v2683, %v2624
      %v2692 = vmul.f32 %v2684, %v2626
      %v2693 = vmul.f32 %v2685, %v2667
      %v2694 = vmul.f32 %v2686, %v2669
      %v2695 = vmul.f32 %v2687, %v2628
      %v2696 = vmul.f32 %v2688, %v2630
      %v2697 = vmul.f32 %v2689, %v2671
      %v2698 = vmul.f32 %v2690, %v2673
      %v2699 = vmul.f32 %v2691, %v2624
      %v2700 = vmul.f32 %v2692, %v2626
      %v2701 = vmul.f32 %v2693, %v2667
      %v2702 = vmul.f32 %v2694, %v2669
      %v2703 = vmul.f32 %v2695, %v2628
      %v2704 = vmul.f32 %v2696, %v2630
      %v2705 = vmul.f32 %v2697, %v2671
      %v2706 = vmul.f32 %v2698, %v2673
      %v2707 = vadd.f32 %v2624, %v2699
      %v2708 = vadd.f32 %v2626, %v2700
      %v2709 = vadd.f32 %v2667, %v2701
      %v2710 = vadd.f32 %v2669, %v2702
      %v2711 = vadd.f32 %v2628, %v2703
      %v2712 = vadd.f32 %v2630, %v2704
      %v2713 = vadd.f32 %v2671, %v2705
      %v2714 = vadd.f32 %v2673, %v2706
      %v2715 = vmul.f32 %v2707, 0.7978846
      %v2716 = vmul.f32 %v2708, 0.7978846
      %v2717 = vmul.f32 %v2709, 0.7978846
      %v2718 = vmul.f32 %v2710, 0.7978846
      %v2719 = vmul.f32 %v2711, 0.7978846
      %v2720 = vmul.f32 %v2712, 0.7978846
      %v2721 = vmul.f32 %v2713, 0.7978846
      %v2722 = vmul.f32 %v2714, 0.7978846
      %v2723 = vtanh.pop %v2715
      %v2724 = vtanh.pop %v2716
      %v2725 = vtanh.pop %v2717
      %v2726 = vtanh.pop %v2718
      %v2727 = vtanh.pop %v2719
      %v2728 = vtanh.pop %v2720
      %v2729 = vtanh.pop %v2721
      %v2730 = vtanh.pop %v2722
      %v2731 = vadd.f32 %v2723, 1.0
      %v2732 = vadd.f32 %v2724, 1.0
      %v2733 = vadd.f32 %v2725, 1.0
      %v2734 = vadd.f32 %v2726, 1.0
      %v2735 = vadd.f32 %v2727, 1.0
      %v2736 = vadd.f32 %v2728, 1.0
      %v2737 = vadd.f32 %v2729, 1.0
      %v2738 = vadd.f32 %v2730, 1.0
      %v2739 = vmul.f32 %v2675, %v2731
      %v2740 = vmul.f32 %v2676, %v2732
      %v2741 = vmul.f32 %v2677, %v2733
      %v2742 = vmul.f32 %v2678, %v2734
      %v2743 = vmul.f32 %v2679, %v2735
      %v2744 = vmul.f32 %v2680, %v2736
      %v2745 = vmul.f32 %v2681, %v2737
      %v2746 = vmul.f32 %v2682, %v2738
      %v2747 = vpack.c.bf16 %v2743, %v2739
      %v2748 = vpack.c.bf16 %v2744, %v2740
      %v2749 = vpack.c.bf16 %v2745, %v2741
      %v2750 = vpack.c.bf16 %v2746, %v2742
      %v2751 = vld [vmem:[%s863] sm:$0xf]
      %v2752 = vld [vmem:[%s863 + $0x4] sm:$0xf]
      %v2753 = vld [vmem:[%s863 + $0x8] sm:$0xf]
      %v2754 = vld [vmem:[%s863 + $0xc] sm:$0xf]
      %v2755 = vld [vmem:[%s863 + $0x10] sm:$0xf]
      %v2756 = vld [vmem:[%s863 + $0x14] sm:$0xf]
      %v2757 = vld [vmem:[%s863 + $0x18] sm:$0xf]
      %v2758 = vld [vmem:[%s863 + $0x1c] sm:$0xf]
      %v2759 = vld [vmem:[%s863 + $0x20] sm:$0xf]
      %v2760 = vld [vmem:[%s863 + $0x24] sm:$0xf]
      %v2761 = vld [vmem:[%s863 + $0x28] sm:$0xf]
      %v2762 = vld [vmem:[%s863 + $0x2c] sm:$0xf]
      %v2763 = vld [vmem:[%s863 + $0x30] sm:$0xf]
      %v2764 = vld [vmem:[%s863 + $0x34] sm:$0xf]
      %v2765 = vld [vmem:[%s863 + $0x38] sm:$0xf]
      %v2766 = vld [vmem:[%s863 + $0x3c] sm:$0xf]
      %v2767 = vld [vmem:[%s863 + $0x40] sm:$0xf]
      %v2768 = vld [vmem:[%s863 + $0x44] sm:$0xf]
      %v2769 = vld [vmem:[%s863 + $0x48] sm:$0xf]
      %v2770 = vld [vmem:[%s863 + $0x4c] sm:$0xf]
      %v2771 = vld [vmem:[%s863 + $0x50] sm:$0xf]
      %v2772 = vld [vmem:[%s863 + $0x54] sm:$0xf]
      %v2773 = vld [vmem:[%s863 + $0x58] sm:$0xf]
      %v2774 = vld [vmem:[%s863 + $0x5c] sm:$0xf]
      %v2775 = vld [vmem:[%s863 + $0x60] sm:$0xf]
      %v2776 = vld [vmem:[%s863 + $0x64] sm:$0xf]
      %v2777 = vld [vmem:[%s863 + $0x68] sm:$0xf]
      %v2778 = vld [vmem:[%s863 + $0x6c] sm:$0xf]
      %v2779 = vld [vmem:[%s863 + $0x70] sm:$0xf]
      %v2780 = vld [vmem:[%s863 + $0x74] sm:$0xf]
      %v2781 = vld [vmem:[%s863 + $0x78] sm:$0xf]
      %v2782 = vld [vmem:[%s863 + $0x7c] sm:$0xf]
      %v2783 = vld [vmem:[%s863 + $0x80] sm:$0xf]
      %v2784 = vld [vmem:[%s863 + $0x84] sm:$0xf]
      %v2785 = vld [vmem:[%s863 + $0x88] sm:$0xf]
      %v2786 = vld [vmem:[%s863 + $0x8c] sm:$0xf]
      %v2787 = vld [vmem:[%s863 + $0x90] sm:$0xf]
      %v2788 = vld [vmem:[%s863 + $0x94] sm:$0xf]
      %v2789 = vld [vmem:[%s863 + $0x98] sm:$0xf]
      %v2790 = vld [vmem:[%s863 + $0x9c] sm:$0xf]
      %v2791 = vld [vmem:[%s863 + $0xa0] sm:$0xf]
      %v2792 = vld [vmem:[%s863 + $0xa4] sm:$0xf]
      %v2793 = vld [vmem:[%s863 + $0xa8] sm:$0xf]
      %v2794 = vld [vmem:[%s863 + $0xac] sm:$0xf]
      %v2795 = vld [vmem:[%s863 + $0xb0] sm:$0xf]
      %v2796 = vld [vmem:[%s863 + $0xb4] sm:$0xf]
      %v2797 = vld [vmem:[%s863 + $0xb8] sm:$0xf]
      %v2798 = vld [vmem:[%s863 + $0xbc] sm:$0xf]
      %v2799 = vld [vmem:[%s863 + $0xc0] sm:$0xf]
      %v2800 = vld [vmem:[%s863 + $0xc4] sm:$0xf]
      %v2801 = vld [vmem:[%s863 + $0xc8] sm:$0xf]
      %v2802 = vld [vmem:[%s863 + $0xcc] sm:$0xf]
      %v2803 = vld [vmem:[%s863 + $0xd0] sm:$0xf]
      %v2804 = vld [vmem:[%s863 + $0xd4] sm:$0xf]
      %v2805 = vld [vmem:[%s863 + $0xd8] sm:$0xf]
      %v2806 = vld [vmem:[%s863 + $0xdc] sm:$0xf]
      %v2807 = vld [vmem:[%s863 + $0xe0] sm:$0xf]
      %v2808 = vld [vmem:[%s863 + $0xe4] sm:$0xf]
      %v2809 = vld [vmem:[%s863 + $0xe8] sm:$0xf]
      %v2810 = vld [vmem:[%s863 + $0xec] sm:$0xf]
      %v2811 = vld [vmem:[%s863 + $0xf0] sm:$0xf]
      %v2812 = vld [vmem:[%s863 + $0xf4] sm:$0xf]
      %v2813 = vld [vmem:[%s863 + $0xf8] sm:$0xf]
      %v2814 = vld [vmem:[%s863 + $0xfc] sm:$0xf]
      %v2879 = vunpack.c.l.b16 %v2751
      %v2880 = vunpack.c.l.b16 %v2752
      %v2881 = vunpack.c.l.b16 %v2753
      %v2882 = vunpack.c.l.b16 %v2754
      %v2883 = vunpack.c.l.b16 %v2755
      %v2884 = vunpack.c.l.b16 %v2756
      %v2885 = vunpack.c.l.b16 %v2757
      %v2886 = vunpack.c.l.b16 %v2758
      %v2887 = vunpack.c.l.b16 %v2759
      %v2888 = vunpack.c.l.b16 %v2760
      %v2889 = vunpack.c.l.b16 %v2761
      %v2890 = vunpack.c.l.b16 %v2762
      %v2891 = vunpack.c.l.b16 %v2763
      %v2892 = vunpack.c.l.b16 %v2764
      %v2893 = vunpack.c.l.b16 %v2765
      %v2894 = vunpack.c.l.b16 %v2766
      %v2895 = vunpack.c.l.b16 %v2767
      %v2896 = vunpack.c.l.b16 %v2768
      %v2897 = vunpack.c.l.b16 %v2769
      %v2898 = vunpack.c.l.b16 %v2770
      %v2899 = vunpack.c.l.b16 %v2771
      %v2900 = vunpack.c.l.b16 %v2772
      %v2901 = vunpack.c.l.b16 %v2773
      %v2902 = vunpack.c.l.b16 %v2774
      %v2903 = vunpack.c.l.b16 %v2775
      %v2904 = vunpack.c.l.b16 %v2776
      %v2905 = vunpack.c.l.b16 %v2777
      %v2906 = vunpack.c.l.b16 %v2778
      %v2907 = vunpack.c.l.b16 %v2779
      %v2908 = vunpack.c.l.b16 %v2780
      %v2909 = vunpack.c.l.b16 %v2781
      %v2910 = vunpack.c.l.b16 %v2782
      %v2911 = vunpack.c.l.b16 %v2783
      %v2912 = vunpack.c.l.b16 %v2784
      %v2913 = vunpack.c.l.b16 %v2785
      %v2914 = vunpack.c.l.b16 %v2786
      %v2915 = vunpack.c.l.b16 %v2787
      %v2916 = vunpack.c.l.b16 %v2788
      %v2917 = vunpack.c.l.b16 %v2789
      %v2918 = vunpack.c.l.b16 %v2790
      %v2919 = vunpack.c.l.b16 %v2791
      %v2920 = vunpack.c.l.b16 %v2792
      %v2921 = vunpack.c.l.b16 %v2793
      %v2922 = vunpack.c.l.b16 %v2794
      %v2923 = vunpack.c.l.b16 %v2795
      %v2924 = vunpack.c.l.b16 %v2796
      %v2925 = vunpack.c.l.b16 %v2797
      %v2926 = vunpack.c.l.b16 %v2798
      %v2927 = vunpack.c.l.b16 %v2799
      %v2928 = vunpack.c.l.b16 %v2800
      %v2929 = vunpack.c.l.b16 %v2801
      %v2930 = vunpack.c.l.b16 %v2802
      %v2931 = vunpack.c.l.b16 %v2803
      %v2932 = vunpack.c.l.b16 %v2804
      %v2933 = vunpack.c.l.b16 %v2805
      %v2934 = vunpack.c.l.b16 %v2806
      %v2935 = vunpack.c.l.b16 %v2807
      %v2936 = vunpack.c.l.b16 %v2808
      %v2937 = vunpack.c.l.b16 %v2809
      %v2938 = vunpack.c.l.b16 %v2810
      %v2939 = vunpack.c.l.b16 %v2811
      %v2940 = vunpack.c.l.b16 %v2812
      %v2941 = vunpack.c.l.b16 %v2813
      %v2942 = vunpack.c.l.b16 %v2814
      %v2943 = vpack.c.b16 %v2880, %v2879
      %v2944 = vpack.c.b16 %v2882, %v2881
      %v2945 = vpack.c.b16 %v2884, %v2883
      %v2946 = vpack.c.b16 %v2886, %v2885
      %v2947 = vpack.c.b16 %v2888, %v2887
      %v2948 = vpack.c.b16 %v2890, %v2889
      %v2949 = vpack.c.b16 %v2892, %v2891
      %v2950 = vpack.c.b16 %v2894, %v2893
      %v2951 = vpack.c.b16 %v2896, %v2895
      %v2952 = vpack.c.b16 %v2898, %v2897
      %v2953 = vpack.c.b16 %v2900, %v2899
      %v2954 = vpack.c.b16 %v2902, %v2901
      %v2955 = vpack.c.b16 %v2904, %v2903
      %v2956 = vpack.c.b16 %v2906, %v2905
      %v2957 = vpack.c.b16 %v2908, %v2907
      %v2958 = vpack.c.b16 %v2910, %v2909
      %v2959 = vpack.c.b16 %v2912, %v2911
      %v2960 = vpack.c.b16 %v2914, %v2913
      %v2961 = vpack.c.b16 %v2916, %v2915
      %v2962 = vpack.c.b16 %v2918, %v2917
      %v2963 = vpack.c.b16 %v2920, %v2919
      %v2964 = vpack.c.b16 %v2922, %v2921
      %v2965 = vpack.c.b16 %v2924, %v2923
      %v2966 = vpack.c.b16 %v2926, %v2925
      %v2967 = vpack.c.b16 %v2928, %v2927
      %v2968 = vpack.c.b16 %v2930, %v2929
      %v2969 = vpack.c.b16 %v2932, %v2931
      %v2970 = vpack.c.b16 %v2934, %v2933
      %v2971 = vpack.c.b16 %v2936, %v2935
      %v2972 = vpack.c.b16 %v2938, %v2937
      %v2973 = vpack.c.b16 %v2940, %v2939
      %v2974 = vpack.c.b16 %v2942, %v2941
      %3007 = vmatprep.subr.bf16.mxu0 0
      %3008 = vmatpush1.bf16.msra.mxu0 %v2943
      %3009 = vmatprep.subr.bf16.mxu0 0
      %3010 = vmatpush1.bf16.msra.mxu0 %v2944
      %3011 = vmatprep.subr.bf16.mxu0 0
      %3012 = vmatpush1.bf16.msra.mxu0 %v2945
      %3013 = vmatprep.subr.bf16.mxu0 0
      %3014 = vmatpush1.bf16.msra.mxu0 %v2946
      %3015 = vmatprep.subr.bf16.mxu0 0
      %3016 = vmatpush1.bf16.msra.mxu0 %v2947
      %3017 = vmatprep.subr.bf16.mxu0 0
      %3018 = vmatpush1.bf16.msra.mxu0 %v2948
      %3019 = vmatprep.subr.bf16.mxu0 0
      %3020 = vmatpush1.bf16.msra.mxu0 %v2949
      %3021 = vmatprep.subr.bf16.mxu0 0
      %3022 = vmatpush1.bf16.msra.mxu0 %v2950
      %3023 = vmatprep.subr.bf16.mxu0 0
      %3024 = vmatpush1.bf16.msra.mxu0 %v2951
      %3025 = vmatprep.subr.bf16.mxu0 0
      %3026 = vmatpush1.bf16.msra.mxu0 %v2952
      %3027 = vmatprep.subr.bf16.mxu0 0
      %3028 = vmatpush1.bf16.msra.mxu0 %v2953
      %3029 = vmatprep.subr.bf16.mxu0 0
      %3030 = vmatpush1.bf16.msra.mxu0 %v2954
      %3031 = vmatprep.subr.bf16.mxu0 0
      %3032 = vmatpush1.bf16.msra.mxu0 %v2955
      %3033 = vmatprep.subr.bf16.mxu0 0
      %3034 = vmatpush1.bf16.msra.mxu0 %v2956
      %3035 = vmatprep.subr.bf16.mxu0 0
      %3036 = vmatpush1.bf16.msra.mxu0 %v2957
      %3037 = vmatprep.subr.bf16.mxu0 0
      %3038 = vmatpush1.bf16.msra.mxu0 %v2958
      %3039 = vmatprep.mubr.bf16.mxu0 %v2748
      %3040 = vmatmul.mubr.bf16.gmra.mrb[0].mxu0 %v2747
      %v3041 = vpop.f32.mrb[0].mxu0
      %v3042 = vadd.f32 0.0, %v3041
      %v3043 = vpop.f32.mrb[0].mxu0
      %v3044 = vpop.f32.mrb[0].mxu0
      %v3045 = vadd.f32 0.0, %v3044
      %v3046 = vpop.f32.mrb[0].mxu0
      %3047 = vdwg.mxu0
      %3048 = vmatprep.subr.bf16.mxu0 0
      %3049 = vmatpush1.bf16.msra.mxu0 %v2959
      %3050 = vmatprep.subr.bf16.mxu0 0
      %3051 = vmatpush1.bf16.msra.mxu0 %v2960
      %3052 = vmatprep.subr.bf16.mxu0 0
      %3053 = vmatpush1.bf16.msra.mxu0 %v2961
      %3054 = vmatprep.subr.bf16.mxu0 0
      %3055 = vmatpush1.bf16.msra.mxu0 %v2962
      %3056 = vmatprep.subr.bf16.mxu0 0
      %3057 = vmatpush1.bf16.msra.mxu0 %v2963
      %3058 = vmatprep.subr.bf16.mxu0 0
      %3059 = vmatpush1.bf16.msra.mxu0 %v2964
      %3060 = vmatprep.subr.bf16.mxu0 0
      %3061 = vmatpush1.bf16.msra.mxu0 %v2965
      %3062 = vmatprep.subr.bf16.mxu0 0
      %3063 = vmatpush1.bf16.msra.mxu0 %v2966
      %3064 = vmatprep.subr.bf16.mxu0 0
      %3065 = vmatpush1.bf16.msra.mxu0 %v2967
      %3066 = vmatprep.subr.bf16.mxu0 0
      %3067 = vmatpush1.bf16.msra.mxu0 %v2968
      %3068 = vmatprep.subr.bf16.mxu0 0
      %3069 = vmatpush1.bf16.msra.mxu0 %v2969
      %3070 = vmatprep.subr.bf16.mxu0 0
      %3071 = vmatpush1.bf16.msra.mxu0 %v2970
      %3072 = vmatprep.subr.bf16.mxu0 0
      %3073 = vmatpush1.bf16.msra.mxu0 %v2971
      %3074 = vmatprep.subr.bf16.mxu0 0
      %3075 = vmatpush1.bf16.msra.mxu0 %v2972
      %3076 = vmatprep.subr.bf16.mxu0 0
      %3077 = vmatpush1.bf16.msra.mxu0 %v2973
      %3078 = vmatprep.subr.bf16.mxu0 0
      %3079 = vmatpush1.bf16.msra.mxu0 %v2974
      %3080 = vmatprep.mubr.bf16.mxu0 %v2750
      %3081 = vmatmul.mubr.bf16.gmra.mrb[0].mxu0 %v2749
      %v3082 = vpop.f32.mrb[0].mxu0
      %v3083 = vadd.f32 %v3042, %v3082
      %v3084 = vpop.f32.mrb[0].mxu0
      %v3085 = vpop.f32.mrb[0].mxu0
      %v3086 = vadd.f32 %v3045, %v3085
      %v3087 = vpop.f32.mrb[0].mxu0
      %3088 = vdwg.mxu0
      %v3089 = vadd.f32 %v2332, %v3083
      %v3090 = vadd.f32 %v2333, %v3086
      %v3091 = vld [vmem:[%s866] sm:$0x1]
      %v3093 = vlaneseq
      %v3094 = vshrl.u32 %v3093, 7
      %v3095 = vsub.s32 0, %v3094
      %v3096 = vrot.slane %v3091, %v3095
      %v3098 = vadd.f32 %v3089, %v3096
      %v3099 = vadd.f32 %v3090, %v3096
      %3100 = vst [vmem:[#allocation2] sm:$0xff] %v3098
      %3101 = vst [vmem:[#allocation2 + $0x8] sm:$0xff] %v3099
      %p3102 = scmp.eq.s32.totalorder %s37, 1
      // Predicated region
      $region109: #{vit_forward.1} parent=103 // pred_check
        %p3103 = pneg %p3102
      $region110: #{vit_forward.1} parent=103 // pred_check_branch
        %3105 = sbr.rel (%p3103) target = $region112
      $region111: #{vit_forward.1} parent=103 // pred_region
        %v3106 = vld [vmem:[%s17] sm:$0x1]
        %v3107 = vld [vmem:[%s18] sm:$0x1]
        %3108 = vadd.xlane.f32.xlu0 %v3098
        %v3109 = vpop.xlane.xlu0 %3108
        %3110 = vadd.xlane.f32.xlu0 %v3099
        %v3111 = vpop.xlane.xlu0 %3110
        %v3112 = vmul.f32 %v3109, %v1458
        %v3113 = vmul.f32 %v3111, %v1458
        %v3114 = vsub.f32 %v3098, %v3112
        %v3115 = vsub.f32 %v3099, %v3113
        %v3116 = vmul.f32 %v3114, %v3114
        %v3117 = vmul.f32 %v3115, %v3115
        %3118 = vadd.xlane.f32.xlu0 %v3116
        %v3119 = vpop.xlane.xlu0 %3118
        %3120 = vadd.xlane.f32.xlu0 %v3117
        %v3121 = vpop.xlane.xlu0 %3120
        %v3122 = vmul.f32 %v3119, %v1458
        %v3123 = vmul.f32 %v3121, %v1458
        %v3124 = vadd.f32 %v3122, 1e-06
        %v3125 = vadd.f32 %v3123, 1e-06
        %v3126 = vrsqrt.pop %v3124
        %v3127 = vrsqrt.pop %v3125
        %v3128 = vmul.f32 %v3114, %v3126
        %v3129 = vmul.f32 %v3115, %v3127
        %v3131 = vlaneseq
        %v3132 = vshrl.u32 %v3131, 7
        %v3133 = vsub.s32 0, %v3132
        %v3134 = vrot.slane %v3106, %v3133
        %v3136 = vmul.f32 %v3128, %v3134
        %v3137 = vmul.f32 %v3129, %v3134
        %v3139 = vlaneseq
        %v3140 = vshrl.u32 %v3139, 7
        %v3141 = vsub.s32 0, %v3140
        %v3142 = vrot.slane %v3107, %v3141
        %v3144 = vadd.f32 %v3136, %v3142
        %v3145 = vadd.f32 %v3137, %v3142
        %v3146 = vpack.c.bf16 %v3145, %v3144
        %v3147 = vld [vmem:[%s19] sm:$0xf]
        %v3148 = vld [vmem:[%s19 + $0x4] sm:$0xf]
        %v3149 = vld [vmem:[%s19 + $0x8] sm:$0xf]
        %v3150 = vld [vmem:[%s19 + $0xc] sm:$0xf]
        %v3151 = vld [vmem:[%s19 + $0x10] sm:$0xf]
        %v3152 = vld [vmem:[%s19 + $0x14] sm:$0xf]
        %v3153 = vld [vmem:[%s19 + $0x18] sm:$0xf]
        %v3154 = vld [vmem:[%s19 + $0x1c] sm:$0xf]
        %v3155 = vld [vmem:[%s19 + $0x20] sm:$0xf]
        %v3156 = vld [vmem:[%s19 + $0x24] sm:$0xf]
        %v3157 = vld [vmem:[%s19 + $0x28] sm:$0xf]
        %v3158 = vld [vmem:[%s19 + $0x2c] sm:$0xf]
        %v3159 = vld [vmem:[%s19 + $0x30] sm:$0xf]
        %v3160 = vld [vmem:[%s19 + $0x34] sm:$0xf]
        %v3161 = vld [vmem:[%s19 + $0x38] sm:$0xf]
        %v3162 = vld [vmem:[%s19 + $0x3c] sm:$0xf]
        %v3163 = vld [vmem:[%s20] sm:$0x1]
        %v3165 = vlaneseq
        %v3166 = vshrl.u32 %v3165, 7
        %v3167 = vsub.s32 0, %v3166
        %v3168 = vrot.slane %v3163, %v3167
        %v3186 = vunpack.c.l.b16 %v3147
        %v3187 = vunpack.c.l.b16 %v3148
        %v3188 = vunpack.c.l.b16 %v3149
        %v3189 = vunpack.c.l.b16 %v3150
        %v3190 = vunpack.c.l.b16 %v3151
        %v3191 = vunpack.c.l.b16 %v3152
        %v3192 = vunpack.c.l.b16 %v3153
        %v3193 = vunpack.c.l.b16 %v3154
        %v3194 = vunpack.c.l.b16 %v3155
        %v3195 = vunpack.c.l.b16 %v3156
        %v3196 = vunpack.c.l.b16 %v3157
        %v3197 = vunpack.c.l.b16 %v3158
        %v3198 = vunpack.c.l.b16 %v3159
        %v3199 = vunpack.c.l.b16 %v3160
        %v3200 = vunpack.c.l.b16 %v3161
        %v3201 = vunpack.c.l.b16 %v3162
        %v3202 = vpack.c.b16 %v3187, %v3186
        %v3203 = vpack.c.b16 %v3189, %v3188
        %v3204 = vpack.c.b16 %v3191, %v3190
        %v3205 = vpack.c.b16 %v3193, %v3192
        %v3206 = vpack.c.b16 %v3195, %v3194
        %v3207 = vpack.c.b16 %v3197, %v3196
        %v3208 = vpack.c.b16 %v3199, %v3198
        %v3209 = vpack.c.b16 %v3201, %v3200
        %3218 = vmatprep.subr.bf16.mxu0 0
        %3219 = vmatpush1.bf16.msra.mxu0 %v3202
        %3220 = vmatprep.subr.bf16.mxu0 0
        %3221 = vmatpush1.bf16.msra.mxu0 %v3203
        %3222 = vmatprep.subr.bf16.mxu0 0
        %3223 = vmatpush1.bf16.msra.mxu0 %v3204
        %3224 = vmatprep.subr.bf16.mxu0 0
        %3225 = vmatpush1.bf16.msra.mxu0 %v3205
        %3226 = vmatprep.subr.bf16.mxu0 0
        %3227 = vmatpush1.bf16.msra.mxu0 %v3206
        %3228 = vmatprep.subr.bf16.mxu0 0
        %3229 = vmatpush1.bf16.msra.mxu0 %v3207
        %3230 = vmatprep.subr.bf16.mxu0 0
        %3231 = vmatpush1.bf16.msra.mxu0 %v3208
        %3232 = vmatprep.subr.bf16.mxu0 0
        %3233 = vmatpush1.bf16.msra.mxu0 %v3209
        %3234 = vmatprep.subr.bf16.mxu0 0
        %3235 = vmatpush1.bf16.msra.mxu0 0
        %3236 = vmatprep.subr.bf16.mxu0 0
        %3237 = vmatpush1.bf16.msra.mxu0 0
        %3238 = vmatprep.subr.bf16.mxu0 0
        %3239 = vmatpush1.bf16.msra.mxu0 0
        %3240 = vmatprep.subr.bf16.mxu0 0
        %3241 = vmatpush1.bf16.msra.mxu0 0
        %3242 = vmatprep.subr.bf16.mxu0 0
        %3243 = vmatpush1.bf16.msra.mxu0 0
        %3244 = vmatprep.subr.bf16.mxu0 0
        %3245 = vmatpush1.bf16.msra.mxu0 0
        %3246 = vmatprep.subr.bf16.mxu0 0
        %3247 = vmatpush1.bf16.msra.mxu0 0
        %3248 = vmatprep.subr.bf16.mxu0 0
        %3249 = vmatpush1.bf16.msra.mxu0 0
        %3250 = vmatprep.mubr.bf16.mxu0 0
        %3251 = vmatmul.mubr.bf16.gmra.mrb[0].mxu0 %v3146
        %v3252 = vpop.f32.mrb[0].mxu0
        %v3253 = vadd.f32 %v3168, %v3252
        %v3254 = vpop.f32.mrb[0].mxu0
        %v3255 = vpop.f32.mrb[0].mxu0
        %v3256 = vadd.f32 %v3168, %v3255
        %v3257 = vpop.f32.mrb[0].mxu0
        %3258 = vdwg.mxu0
        %3259 = vst [vmem:[%s871] sm:$0xff] %v3253
        %3260 = vst [vmem:[%s871 + $0x8] sm:$0xff] %v3256
      $region112: #{vit_forward.1} parent=103 // pred_fallthru
        _
      %s3261 = smul.u32 2, %s36
      %p3262 = scmp.lt.s32.totalorder %s3261, 3
      %s3263 = scalar_select %p3262, %s3261, 3
      %s3264 = smul.addr %s3263, 8
      %s3265 = scalar_lea.vmem %s21, %s3264
      // Predicated region
      $region113: #{vit_forward.1} parent=103 // pred_check
        %p3266 = pneg %p568
      $region114: #{vit_forward.1} parent=103 // pred_check_branch
        %3268 = sbr.rel (%p3266) target = $region116
      $region115: #{vit_forward.1} parent=103 // pred_region
        %s3269 = smul.u32 2, %s36
      $region116: #{vit_forward.1} parent=103 // pred_fallthru
        _
    $region104: #{vit_forward.1} parent=5 // pred_fallthru
      _
    %p3270 = scmp.le.s32.totalorder 2, %s27
    // Predicated region
    $region117: #{vit_forward.1} parent=5 // pred_check
      %p3271 = pneg %p3270
    $region118: #{vit_forward.1} parent=5 // pred_check_branch
      %3273 = sbr.rel (%p3271) target = $region120
    $region119: #{vit_forward.1} parent=5 // pred_region
      %s3274 = ssub.s32 %s27, 2
      // Predicated region
      $region121: #{vit_forward.1} parent=119 // pred_check
        %p3275 = pneg %p574
      $region122: #{vit_forward.1} parent=119 // pred_check_branch
        %3277 = sbr.rel (%p3275) target = $region124
      $region123: #{vit_forward.1} parent=119 // pred_region
        %s3278 = smul.u32 2, %s38
        %p3279 = scmp.lt.s32.totalorder %s3278, 3
        %s3280 = scalar_select %p3279, %s3278, 3
        %s3281 = smul.addr %s3280, 8
        %s3282 = scalar_lea.vmem %s21, %s3281
      $region124: #{vit_forward.1} parent=119 // pred_fallthru
        _
    $region120: #{vit_forward.1} parent=5 // pred_fallthru
      _
  $region6: #{vit_forward.1} parent=0 // loop_footer
    %s31 = sadd.s32 1, %s27
  $region7: #{vit_forward.1} parent=0 // loop_footer_branch
    %26 = sbr.rel target = $region3
  $region8: #{vit_forward.1} parent=0 // loop_exit
    _

</llo_original>
